<compile_context>
chip_gen: v6e
topology: v6e:2x2x1
jax: 0.10.0
libtpu: 0.0.40
codegen_flags: <defaults>
</compile_context>

<pallas_src>
import math

import numpy as np

import jax
import jax.numpy as jnp
from jax import lax
from jax.experimental import pallas as pl
from jax.experimental.pallas import tpu as pltpu


_TILE = 128   # every 2-D operand is one (128, 128) native tile
_WROW = 64    # fixed per-batch row pitch: activation row = n*_WROW + w


# ----------------------------- static network plan ---------------------------

_ARCH = (
    # (kind,   Cin, Cout, KH, KW, sh, sw, ph, pw, act)
    ("conv",     1,  16, 16,  1,  1,  1,  2,  2, "relu"),   # encoder Conv2d
    ("conv",    16,   8,  3,  3,  2,  2,  1,  1, "relu"),   # encoder Conv2d
    ("pool",),                                              # MaxPool2d(2, stride=1)
    ("convt",    8,  16,  3,  3,  2,  2,  0,  0, "relu"),   # decoder ConvTranspose2d
    ("convt",   16,   8,  5,  5,  3,  3,  1,  1, "relu"),   # decoder ConvTranspose2d
    ("convt",    8,   1,  4,  1,  1,  1,  1,  7, "tanh"),   # decoder ConvTranspose2d
)

_PARAM_NAMES = ("e1", "e2", "d1", "d2", "d3")


def make_plan(N, H0, W0):
    """Static per-layer geometry (python ints only) for the fixed architecture."""
    assert N * _WROW == _TILE, "single row tile; add a row-axis grid to scale N"
    assert H0 <= _TILE
    plan = []
    H, W, C = H0, W0, 1
    first = True
    for spec in _ARCH:
        if spec[0] == "pool":
            lyr = dict(kind="pool", Ci=C, Co=C, Hi=H, Wi=W, Ho=H - 1, Wo=W - 1)
        else:
            kind, Ci, Co, KH, KW, sh, sw, ph, pw, act = spec
            assert Ci == C
            if kind == "conv":
                Ho = (H + 2 * ph - KH) // sh + 1
                Wo = (W + 2 * pw - KW) // sw + 1
            else:                                   # ConvTranspose2d
                Ho = (H - 1) * sh - 2 * ph + KH
                Wo = (W - 1) * sw - 2 * pw + KW
            # KW==1 / stride-1 width taps are a pure, batch-uniform row shift;
            # use a sublane roll instead of a 128^3 selector matmul whenever it
            # is provably mask-free (every row it reads is either valid or
            # exactly zero).
            use_roll, shift = False, 0
            if KW == 1 and sw == 1 and Wo <= _WROW:
                if kind == "conv" and first and (W + pw <= _WROW):
                    use_roll, shift = True, pw      # out(wo) reads in(wo - pw)
                if kind == "convt" and (Wo - 1 + pw < W):
                    use_roll, shift = True, -pw     # out(wo) reads in(wo + pw)
            lyr = dict(kind=kind, Ci=Ci, Co=Co, KH=KH, KW=KW, sh=sh, sw=sw,
                       ph=ph, pw=pw, Hi=H, Wi=W, Ho=Ho, Wo=Wo, act=act,
                       use_roll=use_roll, roll=shift)
        assert lyr["Wo"] <= _WROW and lyr["Ho"] * lyr["Co"] <= _TILE
        plan.append(lyr)
        H, W, C = lyr["Ho"], lyr["Wo"], lyr["Co"]
        first = False
    return plan, (H, W, C)


# ------------------ one-time constant selectors / weight folding -------------

def _selector_stack(lyr):
    """0/1 batch+width selection matrices, stacked row-wise over the KW taps
    (one tall (KW*128, 128) operand -> single merged stage-1 matmul)."""
    N = _TILE // _WROW
    KW, sw, pw, Wi, Wo = lyr["KW"], lyr["sw"], lyr["pw"], lyr["Wi"], lyr["Wo"]
    S = np.zeros((KW, _TILE, _TILE), np.float32)
    for kw in range(KW):
        for n in range(N):
            if lyr["kind"] == "conv":
                for wo in range(Wo):
                    wi = sw * wo + kw - pw          # conv reads wi = sw*wo + kw - pw
                    if 0 <= wi < Wi:
                        S[kw, n * _WROW + wo, n * _WROW + wi] = 1.0
            else:
                for wi in range(Wi):
                    wo = sw * wi + kw - pw          # convT writes wo = sw*wi + kw - pw
                    if 0 <= wo < Wo:
                        S[kw, n * _WROW + wo, n * _WROW + wi] = 1.0
    return S.reshape(KW * _TILE, _TILE)


def _pool_height_selectors(lyr):
    """Two 0/1 column (h-space) selectors for the height direction of
    MaxPool2d(2, stride=1); exact in bf16."""
    C, Ho = lyr["Ci"], lyr["Ho"]
    R = np.zeros((2, _TILE, _TILE), np.float32)
    for d in (0, 1):
        for ho in range(Ho):
            for c in range(C):
                R[d, (ho + d) * C + c, ho * C + c] = 1.0
    return R.reshape(2 * _TILE, _TILE)


def _fold_weight(w, lyr):
    """Fold a PyTorch conv / conv-transpose weight into per-width-tap
    (Hin*Cin, Hout*Cout) right-multiply operators, stacked row-wise and
    zero-padded to (KW*128, 128)."""
    w = np.asarray(w, np.float32)
    Hi, Ho, Ci, Co = lyr["Hi"], lyr["Ho"], lyr["Ci"], lyr["Co"]
    KH, KW, sh, ph = lyr["KH"], lyr["KW"], lyr["sh"], lyr["ph"]
    hi = np.arange(Hi)[:, None]
    ho = np.arange(Ho)[None, :]
    if lyr["kind"] == "conv":
        kh = hi - sh * ho + ph                      # w: (Co, Ci, KH, KW)
        w_k = np.transpose(w, (2, 3, 1, 0))         # -> (KH, KW, Ci, Co)
    else:
        kh = ho - sh * hi + ph                      # w: (Ci, Co, KH, KW)
        w_k = np.transpose(w, (2, 3, 0, 1))         # -> (KH, KW, Ci, Co)
    valid = ((kh >= 0) & (kh < KH)).astype(np.float32)[:, :, None, None]
    khc = np.clip(kh, 0, KH - 1)
    out = np.zeros((KW, _TILE, _TILE), np.float32)
    for kw in range(KW):
        m = w_k[:, kw][khc] * valid                 # (Hi, Ho, Ci, Co)
        m = np.transpose(m, (0, 2, 1, 3)).reshape(Hi * Ci, Ho * Co)
        out[kw, :Hi * Ci, :Ho * Co] = m
    return out.reshape(KW * _TILE, _TILE)


def prepare_operands(params, plan):
    """One-time preprocessing (outside the per-call hot path): build the 0/1
    selectors, fold the weights, and pack EVERYTHING into a single contiguous
    bf16 slab (one HBM->VMEM DMA) plus one small f32 bias slab.
    Mutates `plan` in place with the static slab offsets used by the kernel."""
    slabs, n_slabs = [], 0
    biases = np.zeros((8, _TILE), np.float32)
    names = iter(_PARAM_NAMES)
    b_idx = 0
    for lyr in plan:
        if lyr["kind"] == "pool":
            lyr["r_off"] = n_slabs
            slabs.append(_pool_height_selectors(lyr))
            n_slabs += 2
            continue
        name = next(names)
        w = np.asarray(params[name + "_w"], np.float32)
        b = np.asarray(params[name + "_b"], np.float32)
        if lyr["use_roll"]:
            lyr["s_off"] = -1                       # no selector matmul needed
        else:
            lyr["s_off"] = n_slabs
            slabs.append(_selector_stack(lyr))
            n_slabs += lyr["KW"]
        lyr["h_off"] = n_slabs
        slabs.append(_fold_weight(w, lyr))
        n_slabs += lyr["KW"]
        lyr["b_idx"] = b_idx
        biases[b_idx, : lyr["Ho"] * lyr["Co"]] = np.tile(b, lyr["Ho"])
        b_idx += 1
    assert b_idx <= biases.shape[0]
    # selectors are exact 0/1 in bf16; weight rounding is within test tolerance
    w_packed = jnp.asarray(np.concatenate(slabs, axis=0), dtype=jnp.bfloat16)
    return w_packed, jnp.asarray(biases)


# ------------------------------ fused Pallas kernel ---------------------------

def _make_kernel(plan):
    f32, bf16 = jnp.float32, jnp.bfloat16
    T = _TILE

    def kernel(x_ref, w_ref, b_ref, o_ref):
        x = jnp.maximum(x_ref[...], 0.0)              # leading nn.ReLU (f32, VPU)
        b_all = b_ref[...]                            # (8, 128) f32, loaded once
        for lyr in plan:
            if lyr["kind"] == "pool":                 # MaxPool2d(2, stride=1)
                # width: out(w) = max(in(w), in(w+1))  -> sublane shift (no MXU)
                xw = jnp.maximum(x, jnp.roll(x, -1, axis=0))
                # height: exact 0/1 column selectors on the MXU (bf16)
                xb = xw.astype(bf16)
                r0 = lyr["r_off"] * T
                x = jnp.maximum(
                    jnp.dot(xb, w_ref[r0:r0 + T, :], preferred_element_type=f32),
                    jnp.dot(xb, w_ref[r0 + T:r0 + 2 * T, :],
                            preferred_element_type=f32))
                continue
            KW, h0 = lyr["KW"], lyr["h_off"]
            bias = b_all[lyr["b_idx"]:lyr["b_idx"] + 1, :]       # (1,128) f32
            if lyr["use_roll"]:
                # KW==1 / stride-1 width: pure row shift instead of a selector
                # matmul (reads only rows that are valid or exactly zero).
                xs = jnp.roll(x, lyr["roll"], axis=0).astype(bf16)
                acc = bias + jnp.dot(xs, w_ref[h0 * T:(h0 + 1) * T, :],
                                     preferred_element_type=f32)
            else:
                s0 = lyr["s_off"]
                # stage 1, merged over kw: one tall (KW*128,128)@(128,128) matmul
                sel = w_ref[s0 * T:(s0 + KW) * T, :]             # bf16 0/1
                t = jnp.dot(sel, x.astype(bf16), preferred_element_type=f32)
                acc = bias
                for kw in range(KW):                             # static unroll
                    tk = t[kw * T:(kw + 1) * T, :].astype(bf16)  # exact (0/1 sel.)
                    hk = w_ref[(h0 + kw) * T:(h0 + kw + 1) * T, :]
                    acc = acc + jnp.dot(tk, hk, preferred_element_type=f32)
            x = jnp.maximum(acc, 0.0) if lyr["act"] == "relu" else jnp.tanh(acc)
        o_ref[...] = x

    return kernel


def make_fused_forward(plan, out_hwc):
    """Returns forward(x_nchw, w_packed, biases) -> y_nchw running the whole
    network in a single pallas_call (call AFTER prepare_operands)."""
    kernel = _make_kernel(plan)
    Hf, Wf, Cf = out_hwc
    assert Cf == 1
    N = _TILE // _WROW
    H0, W0 = plan[0]["Hi"], plan[0]["Wi"]

    # advisory cost (counts the padded 128^3 matmuls the kernel actually issues)
    mat_cubes, n_slabs = 0, 0
    for lyr in plan:
        if lyr["kind"] == "pool":
            mat_cubes += 2
            n_slabs += 2
        elif lyr["use_roll"]:
            mat_cubes += lyr["KW"]
            n_slabs += lyr["KW"]
        else:
            mat_cubes += 2 * lyr["KW"]
            n_slabs += 2 * lyr["KW"]
    cost = pl.CostEstimate(
        flops=mat_cubes * 2 * _TILE ** 3,
        transcendentals=_TILE * _TILE,
        bytes_accessed=(2 * _TILE * _TILE * 4            # x in + out (f32)
                        + n_slabs * _TILE * _TILE * 2    # packed bf16 operands
                        + 8 * _TILE * 4))                # biases (f32)

    vmem = pl.BlockSpec(memory_space=pltpu.MemorySpace.VMEM)

    def forward(x, w_packed, biases):
        n, c, h, w = x.shape                             # static under jit
        assert (n, c, h, w) == (N, 1, H0, W0)
        # NCHW (C == 1) -> rows = n*_WROW + w, cols = h: one tiny transpose+pad.
        xw = jnp.transpose(x.reshape(n, h, w), (0, 2, 1))          # (N, W, H)
        xw = jnp.pad(xw, ((0, 0), (0, _WROW - w), (0, _TILE - h)))
        x2d = xw.reshape(N * _WROW, _TILE)
        out2d = pl.pallas_call(
            kernel,
            out_shape=jax.ShapeDtypeStruct((_TILE, _TILE), jnp.float32),
            in_specs=[vmem, vmem, vmem],
            out_specs=vmem,
            cost_estimate=cost,
        )(x2d, w_packed, biases)
        # valid block of the padded kernel output -> NCHW
        y = out2d.reshape(N, _WROW, _TILE)[:, :Wf, :Hf]            # (N, Wf, Hf)
        return jnp.transpose(y, (0, 2, 1))[:, None]                # (N,1,Hf,Wf)

    return forward


# ------------------------------ plain-JAX reference ---------------------------

def reference_forward(params, x):
    """Pure XLA reference implementing the PyTorch module semantics exactly."""
    dn = ("NCHW", "OIHW", "NCHW")

    def conv(x, w, b, stride, pad):
        y = lax.conv_general_dilated(x, w, window_strides=stride,
                                     padding=[(pad[0], pad[0]), (pad[1], pad[1])],
                                     dimension_numbers=dn)
        return y + b.reshape(1, -1, 1, 1)

    def convt(x, w, b, stride, pad):
        ci, co, kh, kw = w.shape
        w_conv = jnp.flip(w, (2, 3)).transpose(1, 0, 2, 3)    # (Co, Ci, KH, KW)
        y = lax.conv_general_dilated(x, w_conv, window_strides=(1, 1),
                                     padding=[(kh - 1, kh - 1), (kw - 1, kw - 1)],
                                     lhs_dilation=stride, dimension_numbers=dn)
        ho = (x.shape[2] - 1) * stride[0] - 2 * pad[0] + kh
        wo = (x.shape[3] - 1) * stride[1] - 2 * pad[1] + kw
        y = y[:, :, pad[0]:pad[0] + ho, pad[1]:pad[1] + wo]
        return y + b.reshape(1, -1, 1, 1)

    x = jnp.maximum(x, 0.0)
    x = jnp.maximum(conv(x, params["e1_w"], params["e1_b"], (1, 1), (2, 2)), 0.0)
    x = jnp.maximum(conv(x, params["e2_w"], params["e2_b"], (2, 2), (1, 1)), 0.0)
    x = lax.reduce_window(x, -jnp.inf, lax.max, (1, 1, 2, 2), (1, 1, 1, 1), "VALID")
    x = jnp.maximum(convt(x, params["d1_w"], params["d1_b"], (2, 2), (0, 0)), 0.0)
    x = jnp.maximum(convt(x, params["d2_w"], params["d2_b"], (3, 3), (1, 1)), 0.0)
    return jnp.tanh(convt(x, params["d3_w"], params["d3_b"], (1, 1), (1, 7)))


# ----------------------------------- params -----------------------------------

def _init_param(key, w_shape, cout, fan_in):
    kw_, kb_ = jax.random.split(key)
    bound = 1.0 / math.sqrt(fan_in)
    w = jax.random.uniform(kw_, w_shape, jnp.float32, -bound, bound)
    b = jax.random.uniform(kb_, (cout,), jnp.float32, -bound, bound)
    return w, b


def init_autoencoder_params(key):
    keys = jax.random.split(key, 5)
    p = {}
    # encoder (Conv2d weights: (Cout, Cin, KH, KW))
    p["e1_w"], p["e1_b"] = _init_param(keys[0], (16, 1, 16, 1), 16, 1 * 16 * 1)
    p["e2_w"], p["e2_b"] = _init_param(keys[1], (8, 16, 3, 3), 8, 16 * 3 * 3)
    # decoder (ConvTranspose2d weights: (Cin, Cout, KH, KW))
    p["d1_w"], p["d1_b"] = _init_param(keys[2], (8, 16, 3, 3), 16, 16 * 3 * 3)
    p["d2_w"], p["d2_b"] = _init_param(keys[3], (16, 8, 5, 5), 8, 8 * 5 * 5)
    p["d3_w"], p["d3_b"] = _init_param(keys[4], (8, 1, 4, 1), 1, 1 * 4 * 1)
    return p


# ------------------------------------ main -------------------------------------

if __name__ == "__main__":
    key = jax.random.PRNGKey(0)
    k_param, k_x = jax.random.split(key)
    params = init_autoencoder_params(k_param)
    # input: NCHW, single channel (module expects 1 input channel).
    x = jax.random.normal(k_x, (2, 1, 16, 12), dtype=jnp.float32)

    N, _, H0, W0 = x.shape
    plan, out_hwc = make_plan(N, H0, W0)

    # one-time weight folding / selector packing (outside the per-call hot path)
    w_packed, biases = prepare_operands(params, plan)
    w_packed, biases = jax.block_until_ready((w_packed, biases))

    fwd = jax.jit(make_fused_forward(plan, out_hwc))
    y = jax.block_until_ready(fwd(x, w_packed, biases))

    Hf, Wf, _ = out_hwc
    # shape trace: (2,1,16,12) -> enc (2,8,2,7) -> dec (2,1,16,31)
    assert y.shape == (N, 1, Hf, Wf) == (2, 1, 16, 31), y.shape
    assert y.dtype == jnp.float32
    assert bool(jnp.all(jnp.isfinite(y)))
    assert bool(jnp.all(jnp.abs(y) <= 1.0))            # tanh output range

    # numerical diff against a plain-JAX (f32) reference of the PyTorch module;
    # kernel matmuls are bf16 with f32 accumulation.
    y_ref = jax.block_until_ready(jax.jit(reference_forward)(params, x))
    max_err = float(jnp.max(jnp.abs(y - y_ref)))
    assert max_err < 5e-2, max_err

    print("KERNEL_OK")
</pallas_src>

<mosaic_0001>
module attributes {stable_mosaic.version = 11 : i64} {
  func.func @kernel(%arg0: memref<128x128xf32, #tpu.memory_space<vmem>>, %arg1: memref<3328x128xbf16, #tpu.memory_space<vmem>>, %arg2: memref<8x128xf32, #tpu.memory_space<vmem>>, %arg3: memref<128x128xf32, #tpu.memory_space<vmem>>) attributes {dimension_semantics = [], scalar_prefetch = 0 : i64, scratch_operands = 0 : i64, tpu.core_type = #tpu.core_type<tc>} {
    %c0 = arith.constant 0 : index
    %c0_0 = arith.constant 0 : index
    %0 = vector.load %arg0[%c0, %c0_0] : memref<128x128xf32, #tpu.memory_space<vmem>>, vector<128x128xf32>
    %cst = arith.constant 0.000000e+00 : f32
    %1 = vector.broadcast %cst : f32 to vector<128x128xf32>
    %2 = arith.maximumf %0, %1 : vector<128x128xf32>
    %c0_1 = arith.constant 0 : index
    %c0_2 = arith.constant 0 : index
    %3 = vector.load %arg2[%c0_1, %c0_2] : memref<8x128xf32, #tpu.memory_space<vmem>>, vector<8x128xf32>
    %4 = vector.extract_strided_slice %3 {offsets = [0, 0], sizes = [1, 128], strides = [1, 1]} : vector<8x128xf32> to vector<1x128xf32>
    %5 = vector.extract_strided_slice %2 {offsets = [126, 0], sizes = [2, 128], strides = [1, 1]} : vector<128x128xf32> to vector<2x128xf32>
    %6 = vector.extract_strided_slice %2 {offsets = [0, 0], sizes = [126, 128], strides = [1, 1]} : vector<128x128xf32> to vector<126x128xf32>
    %7 = tpu.concatenate %5, %6 in 0 : vector<2x128xf32>, vector<126x128xf32> -> vector<128x128xf32>
    %8 = arith.truncf %7 : vector<128x128xf32> to vector<128x128xbf16>
    %c0_3 = arith.constant 0 : index
    %c0_4 = arith.constant 0 : index
    %9 = vector.load %arg1[%c0_3, %c0_4] : memref<3328x128xbf16, #tpu.memory_space<vmem>>, vector<128x128xbf16>
    %cst_5 = arith.constant dense<0.000000e+00> : vector<128x128xf32>
    %10 = tpu.matmul %8, %9, %cst_5 {dimension_numbers = #tpu.dot_dimension_numbers<[1], [0], [0], [1], [0, 0, 1, 1], [], []>} : vector<128x128xbf16>, vector<128x128xbf16>, vector<128x128xf32> -> vector<128x128xf32>
    %11 = vector.broadcast %4 : vector<1x128xf32> to vector<128x128xf32>
    %12 = arith.addf %11, %10 : vector<128x128xf32>
    %cst_6 = arith.constant 0.000000e+00 : f32
    %13 = vector.broadcast %cst_6 : f32 to vector<128x128xf32>
    %14 = arith.maximumf %12, %13 : vector<128x128xf32>
    %15 = vector.extract_strided_slice %3 {offsets = [1, 0], sizes = [1, 128], strides = [1, 1]} : vector<8x128xf32> to vector<1x128xf32>
    %c128 = arith.constant 128 : index
    %c0_7 = arith.constant 0 : index
    %16 = vector.load %arg1[%c128, %c0_7] : memref<3328x128xbf16, #tpu.memory_space<vmem>>, vector<384x128xbf16>
    %17 = arith.truncf %14 : vector<128x128xf32> to vector<128x128xbf16>
    %cst_8 = arith.constant dense<0.000000e+00> : vector<384x128xf32>
    %18 = tpu.matmul %16, %17, %cst_8 {dimension_numbers = #tpu.dot_dimension_numbers<[1], [0], [0], [1], [0, 0, 1, 1], [], []>} : vector<384x128xbf16>, vector<128x128xbf16>, vector<384x128xf32> -> vector<384x128xf32>
    %19 = vector.extract_strided_slice %18 {offsets = [0, 0], sizes = [128, 128], strides = [1, 1]} : vector<384x128xf32> to vector<128x128xf32>
    %20 = arith.truncf %19 : vector<128x128xf32> to vector<128x128xbf16>
    %c512 = arith.constant 512 : index
    %c0_9 = arith.constant 0 : index
    %21 = vector.load %arg1[%c512, %c0_9] : memref<3328x128xbf16, #tpu.memory_space<vmem>>, vector<128x128xbf16>
    %cst_10 = arith.constant dense<0.000000e+00> : vector<128x128xf32>
    %22 = tpu.matmul %20, %21, %cst_10 {dimension_numbers = #tpu.dot_dimension_numbers<[1], [0], [0], [1], [0, 0, 1, 1], [], []>} : vector<128x128xbf16>, vector<128x128xbf16>, vector<128x128xf32> -> vector<128x128xf32>
    %23 = vector.broadcast %15 : vector<1x128xf32> to vector<128x128xf32>
    %24 = arith.addf %23, %22 : vector<128x128xf32>
    %25 = vector.extract_strided_slice %18 {offsets = [128, 0], sizes = [128, 128], strides = [1, 1]} : vector<384x128xf32> to vector<128x128xf32>
    %26 = arith.truncf %25 : vector<128x128xf32> to vector<128x128xbf16>
    %c640 = arith.constant 640 : index
    %c0_11 = arith.constant 0 : index
    %27 = vector.load %arg1[%c640, %c0_11] : memref<3328x128xbf16, #tpu.memory_space<vmem>>, vector<128x128xbf16>
    %cst_12 = arith.constant dense<0.000000e+00> : vector<128x128xf32>
    %28 = tpu.matmul %26, %27, %cst_12 {dimension_numbers = #tpu.dot_dimension_numbers<[1], [0], [0], [1], [0, 0, 1, 1], [], []>} : vector<128x128xbf16>, vector<128x128xbf16>, vector<128x128xf32> -> vector<128x128xf32>
    %29 = arith.addf %24, %28 : vector<128x128xf32>
    %30 = vector.extract_strided_slice %18 {offsets = [256, 0], sizes = [128, 128], strides = [1, 1]} : vector<384x128xf32> to vector<128x128xf32>
    %31 = arith.truncf %30 : vector<128x128xf32> to vector<128x128xbf16>
    %c768 = arith.constant 768 : index
    %c0_13 = arith.constant 0 : index
    %32 = vector.load %arg1[%c768, %c0_13] : memref<3328x128xbf16, #tpu.memory_space<vmem>>, vector<128x128xbf16>
    %cst_14 = arith.constant dense<0.000000e+00> : vector<128x128xf32>
    %33 = tpu.matmul %31, %32, %cst_14 {dimension_numbers = #tpu.dot_dimension_numbers<[1], [0], [0], [1], [0, 0, 1, 1], [], []>} : vector<128x128xbf16>, vector<128x128xbf16>, vector<128x128xf32> -> vector<128x128xf32>
    %34 = arith.addf %29, %33 : vector<128x128xf32>
    %cst_15 = arith.constant 0.000000e+00 : f32
    %35 = vector.broadcast %cst_15 : f32 to vector<128x128xf32>
    %36 = arith.maximumf %34, %35 : vector<128x128xf32>
    %37 = vector.extract_strided_slice %36 {offsets = [1, 0], sizes = [127, 128], strides = [1, 1]} : vector<128x128xf32> to vector<127x128xf32>
    %38 = vector.extract_strided_slice %36 {offsets = [0, 0], sizes = [1, 128], strides = [1, 1]} : vector<128x128xf32> to vector<1x128xf32>
    %39 = tpu.concatenate %37, %38 in 0 : vector<127x128xf32>, vector<1x128xf32> -> vector<128x128xf32>
    %40 = arith.maximumf %36, %39 : vector<128x128xf32>
    %41 = arith.truncf %40 : vector<128x128xf32> to vector<128x128xbf16>
    %c896 = arith.constant 896 : index
    %c0_16 = arith.constant 0 : index
    %42 = vector.load %arg1[%c896, %c0_16] : memref<3328x128xbf16, #tpu.memory_space<vmem>>, vector<128x128xbf16>
    %cst_17 = arith.constant dense<0.000000e+00> : vector<128x128xf32>
    %43 = tpu.matmul %41, %42, %cst_17 {dimension_numbers = #tpu.dot_dimension_numbers<[1], [0], [0], [1], [0, 0, 1, 1], [], []>} : vector<128x128xbf16>, vector<128x128xbf16>, vector<128x128xf32> -> vector<128x128xf32>
    %c1024 = arith.constant 1024 : index
    %c0_18 = arith.constant 0 : index
    %44 = vector.load %arg1[%c1024, %c0_18] : memref<3328x128xbf16, #tpu.memory_space<vmem>>, vector<128x128xbf16>
    %cst_19 = arith.constant dense<0.000000e+00> : vector<128x128xf32>
    %45 = tpu.matmul %41, %44, %cst_19 {dimension_numbers = #tpu.dot_dimension_numbers<[1], [0], [0], [1], [0, 0, 1, 1], [], []>} : vector<128x128xbf16>, vector<128x128xbf16>, vector<128x128xf32> -> vector<128x128xf32>
    %46 = arith.maximumf %43, %45 : vector<128x128xf32>
    %47 = vector.extract_strided_slice %3 {offsets = [2, 0], sizes = [1, 128], strides = [1, 1]} : vector<8x128xf32> to vector<1x128xf32>
    %c1152 = arith.constant 1152 : index
    %c0_20 = arith.constant 0 : index
    %48 = vector.load %arg1[%c1152, %c0_20] : memref<3328x128xbf16, #tpu.memory_space<vmem>>, vector<384x128xbf16>
    %49 = arith.truncf %46 : vector<128x128xf32> to vector<128x128xbf16>
    %cst_21 = arith.constant dense<0.000000e+00> : vector<384x128xf32>
    %50 = tpu.matmul %48, %49, %cst_21 {dimension_numbers = #tpu.dot_dimension_numbers<[1], [0], [0], [1], [0, 0, 1, 1], [], []>} : vector<384x128xbf16>, vector<128x128xbf16>, vector<384x128xf32> -> vector<384x128xf32>
    %51 = vector.extract_strided_slice %50 {offsets = [0, 0], sizes = [128, 128], strides = [1, 1]} : vector<384x128xf32> to vector<128x128xf32>
    %52 = arith.truncf %51 : vector<128x128xf32> to vector<128x128xbf16>
    %c1536 = arith.constant 1536 : index
    %c0_22 = arith.constant 0 : index
    %53 = vector.load %arg1[%c1536, %c0_22] : memref<3328x128xbf16, #tpu.memory_space<vmem>>, vector<128x128xbf16>
    %cst_23 = arith.constant dense<0.000000e+00> : vector<128x128xf32>
    %54 = tpu.matmul %52, %53, %cst_23 {dimension_numbers = #tpu.dot_dimension_numbers<[1], [0], [0], [1], [0, 0, 1, 1], [], []>} : vector<128x128xbf16>, vector<128x128xbf16>, vector<128x128xf32> -> vector<128x128xf32>
    %55 = vector.broadcast %47 : vector<1x128xf32> to vector<128x128xf32>
    %56 = arith.addf %55, %54 : vector<128x128xf32>
    %57 = vector.extract_strided_slice %50 {offsets = [128, 0], sizes = [128, 128], strides = [1, 1]} : vector<384x128xf32> to vector<128x128xf32>
    %58 = arith.truncf %57 : vector<128x128xf32> to vector<128x128xbf16>
    %c1664 = arith.constant 1664 : index
    %c0_24 = arith.constant 0 : index
    %59 = vector.load %arg1[%c1664, %c0_24] : memref<3328x128xbf16, #tpu.memory_space<vmem>>, vector<128x128xbf16>
    %cst_25 = arith.constant dense<0.000000e+00> : vector<128x128xf32>
    %60 = tpu.matmul %58, %59, %cst_25 {dimension_numbers = #tpu.dot_dimension_numbers<[1], [0], [0], [1], [0, 0, 1, 1], [], []>} : vector<128x128xbf16>, vector<128x128xbf16>, vector<128x128xf32> -> vector<128x128xf32>
    %61 = arith.addf %56, %60 : vector<128x128xf32>
    %62 = vector.extract_strided_slice %50 {offsets = [256, 0], sizes = [128, 128], strides = [1, 1]} : vector<384x128xf32> to vector<128x128xf32>
    %63 = arith.truncf %62 : vector<128x128xf32> to vector<128x128xbf16>
    %c1792 = arith.constant 1792 : index
    %c0_26 = arith.constant 0 : index
    %64 = vector.load %arg1[%c1792, %c0_26] : memref<3328x128xbf16, #tpu.memory_space<vmem>>, vector<128x128xbf16>
    %cst_27 = arith.constant dense<0.000000e+00> : vector<128x128xf32>
    %65 = tpu.matmul %63, %64, %cst_27 {dimension_numbers = #tpu.dot_dimension_numbers<[1], [0], [0], [1], [0, 0, 1, 1], [], []>} : vector<128x128xbf16>, vector<128x128xbf16>, vector<128x128xf32> -> vector<128x128xf32>
    %66 = arith.addf %61, %65 : vector<128x128xf32>
    %cst_28 = arith.constant 0.000000e+00 : f32
    %67 = vector.broadcast %cst_28 : f32 to vector<128x128xf32>
    %68 = arith.maximumf %66, %67 : vector<128x128xf32>
    %69 = vector.extract_strided_slice %3 {offsets = [3, 0], sizes = [1, 128], strides = [1, 1]} : vector<8x128xf32> to vector<1x128xf32>
    %c1920 = arith.constant 1920 : index
    %c0_29 = arith.constant 0 : index
    %70 = vector.load %arg1[%c1920, %c0_29] : memref<3328x128xbf16, #tpu.memory_space<vmem>>, vector<640x128xbf16>
    %71 = arith.truncf %68 : vector<128x128xf32> to vector<128x128xbf16>
    %cst_30 = arith.constant dense<0.000000e+00> : vector<640x128xf32>
    %72 = tpu.matmul %70, %71, %cst_30 {dimension_numbers = #tpu.dot_dimension_numbers<[1], [0], [0], [1], [0, 0, 1, 1], [], []>} : vector<640x128xbf16>, vector<128x128xbf16>, vector<640x128xf32> -> vector<640x128xf32>
    %73 = vector.extract_strided_slice %72 {offsets = [0, 0], sizes = [128, 128], strides = [1, 1]} : vector<640x128xf32> to vector<128x128xf32>
    %74 = arith.truncf %73 : vector<128x128xf32> to vector<128x128xbf16>
    %c2560 = arith.constant 2560 : index
    %c0_31 = arith.constant 0 : index
    %75 = vector.load %arg1[%c2560, %c0_31] : memref<3328x128xbf16, #tpu.memory_space<vmem>>, vector<128x128xbf16>
    %cst_32 = arith.constant dense<0.000000e+00> : vector<128x128xf32>
    %76 = tpu.matmul %74, %75, %cst_32 {dimension_numbers = #tpu.dot_dimension_numbers<[1], [0], [0], [1], [0, 0, 1, 1], [], []>} : vector<128x128xbf16>, vector<128x128xbf16>, vector<128x128xf32> -> vector<128x128xf32>
    %77 = vector.broadcast %69 : vector<1x128xf32> to vector<128x128xf32>
    %78 = arith.addf %77, %76 : vector<128x128xf32>
    %79 = vector.extract_strided_slice %72 {offsets = [128, 0], sizes = [128, 128], strides = [1, 1]} : vector<640x128xf32> to vector<128x128xf32>
    %80 = arith.truncf %79 : vector<128x128xf32> to vector<128x128xbf16>
    %c2688 = arith.constant 2688 : index
    %c0_33 = arith.constant 0 : index
    %81 = vector.load %arg1[%c2688, %c0_33] : memref<3328x128xbf16, #tpu.memory_space<vmem>>, vector<128x128xbf16>
    %cst_34 = arith.constant dense<0.000000e+00> : vector<128x128xf32>
    %82 = tpu.matmul %80, %81, %cst_34 {dimension_numbers = #tpu.dot_dimension_numbers<[1], [0], [0], [1], [0, 0, 1, 1], [], []>} : vector<128x128xbf16>, vector<128x128xbf16>, vector<128x128xf32> -> vector<128x128xf32>
    %83 = arith.addf %78, %82 : vector<128x128xf32>
    %84 = vector.extract_strided_slice %72 {offsets = [256, 0], sizes = [128, 128], strides = [1, 1]} : vector<640x128xf32> to vector<128x128xf32>
    %85 = arith.truncf %84 : vector<128x128xf32> to vector<128x128xbf16>
    %c2816 = arith.constant 2816 : index
    %c0_35 = arith.constant 0 : index
    %86 = vector.load %arg1[%c2816, %c0_35] : memref<3328x128xbf16, #tpu.memory_space<vmem>>, vector<128x128xbf16>
    %cst_36 = arith.constant dense<0.000000e+00> : vector<128x128xf32>
    %87 = tpu.matmul %85, %86, %cst_36 {dimension_numbers = #tpu.dot_dimension_numbers<[1], [0], [0], [1], [0, 0, 1, 1], [], []>} : vector<128x128xbf16>, vector<128x128xbf16>, vector<128x128xf32> -> vector<128x128xf32>
    %88 = arith.addf %83, %87 : vector<128x128xf32>
    %89 = vector.extract_strided_slice %72 {offsets = [384, 0], sizes = [128, 128], strides = [1, 1]} : vector<640x128xf32> to vector<128x128xf32>
    %90 = arith.truncf %89 : vector<128x128xf32> to vector<128x128xbf16>
    %c2944 = arith.constant 2944 : index
    %c0_37 = arith.constant 0 : index
    %91 = vector.load %arg1[%c2944, %c0_37] : memref<3328x128xbf16, #tpu.memory_space<vmem>>, vector<128x128xbf16>
    %cst_38 = arith.constant dense<0.000000e+00> : vector<128x128xf32>
    %92 = tpu.matmul %90, %91, %cst_38 {dimension_numbers = #tpu.dot_dimension_numbers<[1], [0], [0], [1], [0, 0, 1, 1], [], []>} : vector<128x128xbf16>, vector<128x128xbf16>, vector<128x128xf32> -> vector<128x128xf32>
    %93 = arith.addf %88, %92 : vector<128x128xf32>
    %94 = vector.extract_strided_slice %72 {offsets = [512, 0], sizes = [128, 128], strides = [1, 1]} : vector<640x128xf32> to vector<128x128xf32>
    %95 = arith.truncf %94 : vector<128x128xf32> to vector<128x128xbf16>
    %c3072 = arith.constant 3072 : index
    %c0_39 = arith.constant 0 : index
    %96 = vector.load %arg1[%c3072, %c0_39] : memref<3328x128xbf16, #tpu.memory_space<vmem>>, vector<128x128xbf16>
    %cst_40 = arith.constant dense<0.000000e+00> : vector<128x128xf32>
    %97 = tpu.matmul %95, %96, %cst_40 {dimension_numbers = #tpu.dot_dimension_numbers<[1], [0], [0], [1], [0, 0, 1, 1], [], []>} : vector<128x128xbf16>, vector<128x128xbf16>, vector<128x128xf32> -> vector<128x128xf32>
    %98 = arith.addf %93, %97 : vector<128x128xf32>
    %cst_41 = arith.constant 0.000000e+00 : f32
    %99 = vector.broadcast %cst_41 : f32 to vector<128x128xf32>
    %100 = arith.maximumf %98, %99 : vector<128x128xf32>
    %101 = vector.extract_strided_slice %3 {offsets = [4, 0], sizes = [1, 128], strides = [1, 1]} : vector<8x128xf32> to vector<1x128xf32>
    %102 = vector.extract_strided_slice %100 {offsets = [7, 0], sizes = [121, 128], strides = [1, 1]} : vector<128x128xf32> to vector<121x128xf32>
    %103 = vector.extract_strided_slice %100 {offsets = [0, 0], sizes = [7, 128], strides = [1, 1]} : vector<128x128xf32> to vector<7x128xf32>
    %104 = tpu.concatenate %102, %103 in 0 : vector<121x128xf32>, vector<7x128xf32> -> vector<128x128xf32>
    %105 = arith.truncf %104 : vector<128x128xf32> to vector<128x128xbf16>
    %c3200 = arith.constant 3200 : index
    %c0_42 = arith.constant 0 : index
    %106 = vector.load %arg1[%c3200, %c0_42] : memref<3328x128xbf16, #tpu.memory_space<vmem>>, vector<128x128xbf16>
    %cst_43 = arith.constant dense<0.000000e+00> : vector<128x128xf32>
    %107 = tpu.matmul %105, %106, %cst_43 {dimension_numbers = #tpu.dot_dimension_numbers<[1], [0], [0], [1], [0, 0, 1, 1], [], []>} : vector<128x128xbf16>, vector<128x128xbf16>, vector<128x128xf32> -> vector<128x128xf32>
    %108 = vector.broadcast %101 : vector<1x128xf32> to vector<128x128xf32>
    %109 = arith.addf %108, %107 : vector<128x128xf32>
    %110 = math.tanh %109 : vector<128x128xf32>
    %c0_44 = arith.constant 0 : index
    %c0_45 = arith.constant 0 : index
    %111 = vector.load %arg3[%c0_44, %c0_45] : memref<128x128xf32, #tpu.memory_space<vmem>>, vector<128x128xf32>
    tpu.vector_store %arg3[%c0_44, %c0_45], %110 {strides = array<i32>} : memref<128x128xf32, #tpu.memory_space<vmem>>, vector<128x128xf32>,
    return
  }
}

</mosaic_0001>

<llo_original>
// kernel: forward.1
$region0: #{forward.1}
  #allocation0 [shape = 'u32[]', space=smem, size = 0x4, offset = 0x4, fixed_abs, tag = 'smem constant byte address 0x4 - core index']
  #allocation1 [shape = 'u32[144,128]{1,0:T(1,128)}', space=vmem, size = 0x12000, scoped, tag = 'internal scratch']
  %s0 = inlined_call_operand.vmem [shape: f32[128,128], index: 0, kind: input, shape index: {}]
  %s1 = inlined_call_operand.hbm [shape: bf16[3328,128], index: 1, kind: input, shape index: {}]
  %s2 = inlined_call_operand.vmem [shape: f32[8,128], index: 2, kind: input, shape index: {}]
  %s3 = inlined_call_operand.vmem [shape: f32[128,128], index: 3, kind: output, shape index: {}]
  %s4 = sld [smem:[#allocation0]]
  $region26: #{forward.1} parent=0
    _
  %s6 = ssub.s32 1, %s4
  %s7 = scalar_select 0, %s6, %s4
  $region1: #{forward.1} parent=0
    #allocation2 [shape = 'u8[851968]{0}', space=vmem, size = 0xd0000, scoped, tag = 'input window, operand 1, single buffered']
    #allocation3 [shape = 's32[1]{0}', space=sflag, size = 0x4, scoped, tag = 'scoped memory for forward.1']
    %8 = vsyncpa [#allocation3], 0
    // Predicated region
    $region2: #{forward.1} parent=1 // pred_check
      _
    $region3: #{forward.1} parent=1 // pred_check_branch
      %10 = sbr.rel (0) target = $region5
    $region4: #{forward.1} parent=1 // pred_region
      _
    $region5: #{forward.1} parent=1 // pred_fallthru
      _
    // Predicated region
    $region6: #{forward.1} parent=1 // pred_check
      _
    $region7: #{forward.1} parent=1 // pred_check_branch
      %12 = sbr.rel (0) target = $region9
    $region8: #{forward.1} parent=1 // pred_region
      %s14 = ssub.s32 26624, 26624
      %15 = vsyncadd [#allocation3], %s14
      %s16 = sshll.u32 [#allocation2], 4
      %s17 = int_to_ptr.vmem [resolvable:$true] %s16
      %22 = dma.hbm_to_vmem [thread:$0]  %s1, 26624, %s17, [#allocation3], 64, 64, 4
    $region9: #{forward.1} parent=1 // pred_fallthru
      _
    // Predicated region
    $region10: #{forward.1} parent=1 // pred_check
      _
    $region11: #{forward.1} parent=1 // pred_check_branch
      %24 = sbr.rel (0) target = $region13
    $region12: #{forward.1} parent=1 // pred_region
      _
    $region13: #{forward.1} parent=1 // pred_fallthru
      _
    // Predicated region
    $region14: #{forward.1} parent=1 // pred_check
      _
    $region15: #{forward.1} parent=1 // pred_check_branch
      %26 = sbr.rel (0) target = $region17
    $region16: #{forward.1} parent=1 // pred_region
      %27 = dma.done [#allocation3], 26624
    $region17: #{forward.1} parent=1 // pred_fallthru
      _
    %v29 = vld [vmem:[%s0] sm:$0xff]
    %v30 = vld [vmem:[%s0 + $0x8] sm:$0xff]
    %v31 = vld [vmem:[%s0 + $0x10] sm:$0xff]
    %v32 = vld [vmem:[%s0 + $0x18] sm:$0xff]
    %v33 = vld [vmem:[%s0 + $0x20] sm:$0xff]
    %v34 = vld [vmem:[%s0 + $0x28] sm:$0xff]
    %v35 = vld [vmem:[%s0 + $0x30] sm:$0xff]
    %v36 = vld [vmem:[%s0 + $0x38] sm:$0xff]
    %v37 = vld [vmem:[%s0 + $0x40] sm:$0xff]
    %v38 = vld [vmem:[%s0 + $0x48] sm:$0xff]
    %v39 = vld [vmem:[%s0 + $0x50] sm:$0xff]
    %v40 = vld [vmem:[%s0 + $0x58] sm:$0xff]
    %v41 = vld [vmem:[%s0 + $0x60] sm:$0xff]
    %v42 = vld [vmem:[%s0 + $0x68] sm:$0xff]
    %v43 = vld [vmem:[%s0 + $0x70] sm:$0xff]
    %v44 = vld [vmem:[%s0 + $0x78] sm:$0xff]
    %v45 = vmax.f32 %v29, 0.0
    %v46 = vmax.f32 %v30, 0.0
    %v47 = vmax.f32 %v31, 0.0
    %v48 = vmax.f32 %v32, 0.0
    %v49 = vmax.f32 %v33, 0.0
    %v50 = vmax.f32 %v34, 0.0
    %v51 = vmax.f32 %v35, 0.0
    %v52 = vmax.f32 %v36, 0.0
    %v53 = vmax.f32 %v37, 0.0
    %v54 = vmax.f32 %v38, 0.0
    %v55 = vmax.f32 %v39, 0.0
    %v56 = vmax.f32 %v40, 0.0
    %v57 = vmax.f32 %v41, 0.0
    %v58 = vmax.f32 %v42, 0.0
    %v59 = vmax.f32 %v43, 0.0
    %v60 = vmax.f32 %v44, 0.0
    %v61 = vld [vmem:[%s2] sm:$0xff]
    %v63 = vrot.slane %v60, 6
    %vm80 = vcmask 1041408
    %v81 = vrot.slane %v45, 6
    %v82 = vrot.slane %v46, 6
    %v83 = vsel %vm80, %v81, %v82
    %v84 = vrot.slane %v47, 6
    %v85 = vsel %vm80, %v82, %v84
    %v86 = vrot.slane %v48, 6
    %v87 = vsel %vm80, %v84, %v86
    %v88 = vrot.slane %v49, 6
    %v89 = vsel %vm80, %v86, %v88
    %v90 = vrot.slane %v50, 6
    %v91 = vsel %vm80, %v88, %v90
    %v92 = vrot.slane %v51, 6
    %v93 = vsel %vm80, %v90, %v92
    %v94 = vrot.slane %v52, 6
    %v95 = vsel %vm80, %v92, %v94
    %v96 = vrot.slane %v53, 6
    %v97 = vsel %vm80, %v94, %v96
    %v98 = vrot.slane %v54, 6
    %v99 = vsel %vm80, %v96, %v98
    %v100 = vrot.slane %v55, 6
    %v101 = vsel %vm80, %v98, %v100
    %v102 = vrot.slane %v56, 6
    %v103 = vsel %vm80, %v100, %v102
    %v104 = vrot.slane %v57, 6
    %v105 = vsel %vm80, %v102, %v104
    %v106 = vrot.slane %v58, 6
    %v107 = vsel %vm80, %v104, %v106
    %v108 = vrot.slane %v59, 6
    %v109 = vsel %vm80, %v106, %v108
    %v110 = vsel %vm80, %v108, %v63
    %v127 = vsel %vm80, %v63, %v81
    %v128 = vpack.c.bf16 %v83, %v127
    %v129 = vpack.c.bf16 %v87, %v85
    %v130 = vpack.c.bf16 %v91, %v89
    %v131 = vpack.c.bf16 %v95, %v93
    %v132 = vpack.c.bf16 %v99, %v97
    %v133 = vpack.c.bf16 %v103, %v101
    %v134 = vpack.c.bf16 %v107, %v105
    %v135 = vpack.c.bf16 %v110, %v109
    %v136 = vld [vmem:[#allocation2] sm:$0xf]
    %v137 = vld [vmem:[#allocation2 + $0x4] sm:$0xf]
    %v138 = vld [vmem:[#allocation2 + $0x8] sm:$0xf]
    %v139 = vld [vmem:[#allocation2 + $0xc] sm:$0xf]
    %v140 = vld [vmem:[#allocation2 + $0x10] sm:$0xf]
    %v141 = vld [vmem:[#allocation2 + $0x14] sm:$0xf]
    %v142 = vld [vmem:[#allocation2 + $0x18] sm:$0xf]
    %v143 = vld [vmem:[#allocation2 + $0x1c] sm:$0xf]
    %v144 = vld [vmem:[#allocation2 + $0x20] sm:$0xf]
    %v145 = vld [vmem:[#allocation2 + $0x24] sm:$0xf]
    %v146 = vld [vmem:[#allocation2 + $0x28] sm:$0xf]
    %v147 = vld [vmem:[#allocation2 + $0x2c] sm:$0xf]
    %v148 = vld [vmem:[#allocation2 + $0x30] sm:$0xf]
    %v149 = vld [vmem:[#allocation2 + $0x34] sm:$0xf]
    %v150 = vld [vmem:[#allocation2 + $0x38] sm:$0xf]
    %v151 = vld [vmem:[#allocation2 + $0x3c] sm:$0xf]
    %v168 = vunpack.c.l.b16 %v136
    %v169 = vunpack.c.l.b16 %v137
    %v170 = vunpack.c.l.b16 %v138
    %v171 = vunpack.c.l.b16 %v139
    %v172 = vunpack.c.l.b16 %v140
    %v173 = vunpack.c.l.b16 %v141
    %v174 = vunpack.c.l.b16 %v142
    %v175 = vunpack.c.l.b16 %v143
    %v176 = vunpack.c.l.b16 %v144
    %v177 = vunpack.c.l.b16 %v145
    %v178 = vunpack.c.l.b16 %v146
    %v179 = vunpack.c.l.b16 %v147
    %v180 = vunpack.c.l.b16 %v148
    %v181 = vunpack.c.l.b16 %v149
    %v182 = vunpack.c.l.b16 %v150
    %v183 = vunpack.c.l.b16 %v151
    %v184 = vpack.c.b16 %v169, %v168
    %v185 = vpack.c.b16 %v171, %v170
    %v186 = vpack.c.b16 %v173, %v172
    %v187 = vpack.c.b16 %v175, %v174
    %v188 = vpack.c.b16 %v177, %v176
    %v189 = vpack.c.b16 %v179, %v178
    %v190 = vpack.c.b16 %v181, %v180
    %v191 = vpack.c.b16 %v183, %v182
    %200 = vmatprep.subr.bf16.mxu0 0
    %201 = vmatpush1.bf16.msra.mxu0 %v191
    %202 = vmatprep.subr.bf16.mxu0 0
    %203 = vmatpush1.bf16.msra.mxu0 %v190
    %204 = vmatprep.subr.bf16.mxu0 0
    %205 = vmatpush1.bf16.msra.mxu0 %v189
    %206 = vmatprep.subr.bf16.mxu0 0
    %207 = vmatpush1.bf16.msra.mxu0 %v188
    %208 = vmatprep.subr.bf16.mxu0 0
    %209 = vmatpush1.bf16.msra.mxu0 %v187
    %210 = vmatprep.subr.bf16.mxu0 0
    %211 = vmatpush1.bf16.msra.mxu0 %v186
    %212 = vmatprep.subr.bf16.mxu0 0
    %213 = vmatpush1.bf16.msra.mxu0 %v185
    %214 = vmatprep.subr.bf16.mxu0 0
    %215 = vmatpush1.bf16.msra.mxu0 %v184
    %216 = vmatprep.subr.bf16.mxu0 0
    %217 = vmatpush2.bf16.msra.mxu0 0
    %218 = vmatprep.subr.bf16.mxu0 0
    %219 = vmatpush2.bf16.msra.mxu0 0
    %220 = vmatprep.subr.bf16.mxu0 0
    %221 = vmatpush2.bf16.msra.mxu0 0
    %222 = vmatprep.subr.bf16.mxu0 0
    %223 = vmatpush2.bf16.msra.mxu0 0
    %224 = vmatprep.subr.bf16.mxu0 0
    %225 = vmatpush2.bf16.msra.mxu0 0
    %226 = vmatprep.subr.bf16.mxu0 0
    %227 = vmatpush2.bf16.msra.mxu0 0
    %228 = vmatprep.subr.bf16.mxu0 0
    %229 = vmatpush2.bf16.msra.mxu0 0
    %230 = vmatprep.subr.bf16.mxu0 0
    %231 = vmatpush2.bf16.msra.mxu0 0
    %232 = vmatprep.mubr.bf16.mxu0 0
    %233 = vmatmul.mubr.bf16.gmra.mxu0 %v128
    %v234 = vpop.f32.mrf.mxu0
    %v235 = vadd.f32 0.0, %v234
    %v236 = vpop.f32.mrf.mxu0
    %v237 = vpop.f32.mrf.mxu0
    %v238 = vadd.f32 0.0, %v237
    %v239 = vpop.f32.mrf.mxu0
    %240 = vmatprep.mubr.bf16.mxu0 0
    %241 = vmatmul.mubr.bf16.gmra.mxu0 %v129
    %v242 = vpop.f32.mrf.mxu0
    %v243 = vadd.f32 0.0, %v242
    %v244 = vpop.f32.mrf.mxu0
    %v245 = vpop.f32.mrf.mxu0
    %v246 = vadd.f32 0.0, %v245
    %v247 = vpop.f32.mrf.mxu0
    %248 = vmatprep.mubr.bf16.mxu0 0
    %249 = vmatmul.mubr.bf16.gmra.mxu0 %v130
    %v250 = vpop.f32.mrf.mxu0
    %v251 = vadd.f32 0.0, %v250
    %v252 = vpop.f32.mrf.mxu0
    %v253 = vpop.f32.mrf.mxu0
    %v254 = vadd.f32 0.0, %v253
    %v255 = vpop.f32.mrf.mxu0
    %256 = vmatprep.mubr.bf16.mxu0 0
    %257 = vmatmul.mubr.bf16.gmra.mxu0 %v131
    %v258 = vpop.f32.mrf.mxu0
    %v259 = vadd.f32 0.0, %v258
    %v260 = vpop.f32.mrf.mxu0
    %v261 = vpop.f32.mrf.mxu0
    %v262 = vadd.f32 0.0, %v261
    %v263 = vpop.f32.mrf.mxu0
    %264 = vmatprep.mubr.bf16.mxu0 0
    %265 = vmatmul.mubr.bf16.gmra.mxu0 %v132
    %v266 = vpop.f32.mrf.mxu0
    %v267 = vadd.f32 0.0, %v266
    %v268 = vpop.f32.mrf.mxu0
    %v269 = vpop.f32.mrf.mxu0
    %v270 = vadd.f32 0.0, %v269
    %v271 = vpop.f32.mrf.mxu0
    %272 = vmatprep.mubr.bf16.mxu0 0
    %273 = vmatmul.mubr.bf16.gmra.mxu0 %v133
    %v274 = vpop.f32.mrf.mxu0
    %v275 = vadd.f32 0.0, %v274
    %v276 = vpop.f32.mrf.mxu0
    %v277 = vpop.f32.mrf.mxu0
    %v278 = vadd.f32 0.0, %v277
    %v279 = vpop.f32.mrf.mxu0
    %280 = vmatprep.mubr.bf16.mxu0 0
    %281 = vmatmul.mubr.bf16.gmra.mxu0 %v134
    %v282 = vpop.f32.mrf.mxu0
    %v283 = vadd.f32 0.0, %v282
    %v284 = vpop.f32.mrf.mxu0
    %v285 = vpop.f32.mrf.mxu0
    %v286 = vadd.f32 0.0, %v285
    %v287 = vpop.f32.mrf.mxu0
    %288 = vmatprep.mubr.bf16.mxu0 0
    %289 = vmatmul.mubr.bf16.gmra.mxu0 %v135
    %v290 = vpop.f32.mrf.mxu0
    %v291 = vadd.f32 0.0, %v290
    %v292 = vpop.f32.mrf.mxu0
    %v293 = vpop.f32.mrf.mxu0
    %v294 = vadd.f32 0.0, %v293
    %v295 = vpop.f32.mrf.mxu0
    %296 = vdwg.mxu0
    %v297 = vlaneseq
    %v298 = vshrl.u32 %v297, 7
    %v299 = vsub.s32 0, %v298
    %v300 = vrot.slane %v61, %v299
    %v301 = vadd.f32 %v300, %v235
    %v302 = vadd.f32 %v300, %v238
    %v303 = vadd.f32 %v300, %v243
    %v304 = vadd.f32 %v300, %v246
    %v305 = vadd.f32 %v300, %v251
    %v306 = vadd.f32 %v300, %v254
    %v307 = vadd.f32 %v300, %v259
    %v308 = vadd.f32 %v300, %v262
    %v309 = vadd.f32 %v300, %v267
    %v310 = vadd.f32 %v300, %v270
    %v311 = vadd.f32 %v300, %v275
    %v312 = vadd.f32 %v300, %v278
    %v313 = vadd.f32 %v300, %v283
    %v314 = vadd.f32 %v300, %v286
    %v315 = vadd.f32 %v300, %v291
    %v316 = vadd.f32 %v300, %v294
    %v317 = vmax.f32 %v301, 0.0
    %v318 = vmax.f32 %v302, 0.0
    %v319 = vmax.f32 %v303, 0.0
    %v320 = vmax.f32 %v304, 0.0
    %v321 = vmax.f32 %v305, 0.0
    %v322 = vmax.f32 %v306, 0.0
    %v323 = vmax.f32 %v307, 0.0
    %v324 = vmax.f32 %v308, 0.0
    %v325 = vmax.f32 %v309, 0.0
    %v326 = vmax.f32 %v310, 0.0
    %v327 = vmax.f32 %v311, 0.0
    %v328 = vmax.f32 %v312, 0.0
    %v329 = vmax.f32 %v313, 0.0
    %v330 = vmax.f32 %v314, 0.0
    %v331 = vmax.f32 %v315, 0.0
    %v332 = vmax.f32 %v316, 0.0
    %v333 = vld [vmem:[#allocation2 + $0x40] sm:$0xf]
    %v334 = vld [vmem:[#allocation2 + $0x44] sm:$0xf]
    %v335 = vld [vmem:[#allocation2 + $0x48] sm:$0xf]
    %v336 = vld [vmem:[#allocation2 + $0x4c] sm:$0xf]
    %v337 = vld [vmem:[#allocation2 + $0x50] sm:$0xf]
    %v338 = vld [vmem:[#allocation2 + $0x54] sm:$0xf]
    %v339 = vld [vmem:[#allocation2 + $0x58] sm:$0xf]
    %v340 = vld [vmem:[#allocation2 + $0x5c] sm:$0xf]
    %v341 = vld [vmem:[#allocation2 + $0x60] sm:$0xf]
    %v342 = vld [vmem:[#allocation2 + $0x64] sm:$0xf]
    %v343 = vld [vmem:[#allocation2 + $0x68] sm:$0xf]
    %v344 = vld [vmem:[#allocation2 + $0x6c] sm:$0xf]
    %v345 = vld [vmem:[#allocation2 + $0x70] sm:$0xf]
    %v346 = vld [vmem:[#allocation2 + $0x74] sm:$0xf]
    %v347 = vld [vmem:[#allocation2 + $0x78] sm:$0xf]
    %v348 = vld [vmem:[#allocation2 + $0x7c] sm:$0xf]
    %v349 = vld [vmem:[#allocation2 + $0x80] sm:$0xf]
    %v350 = vld [vmem:[#allocation2 + $0x84] sm:$0xf]
    %v351 = vld [vmem:[#allocation2 + $0x88] sm:$0xf]
    %v352 = vld [vmem:[#allocation2 + $0x8c] sm:$0xf]
    %v353 = vld [vmem:[#allocation2 + $0x90] sm:$0xf]
    %v354 = vld [vmem:[#allocation2 + $0x94] sm:$0xf]
    %v355 = vld [vmem:[#allocation2 + $0x98] sm:$0xf]
    %v356 = vld [vmem:[#allocation2 + $0x9c] sm:$0xf]
    %v357 = vld [vmem:[#allocation2 + $0xa0] sm:$0xf]
    %v358 = vld [vmem:[#allocation2 + $0xa4] sm:$0xf]
    %v359 = vld [vmem:[#allocation2 + $0xa8] sm:$0xf]
    %v360 = vld [vmem:[#allocation2 + $0xac] sm:$0xf]
    %v361 = vld [vmem:[#allocation2 + $0xb0] sm:$0xf]
    %v362 = vld [vmem:[#allocation2 + $0xb4] sm:$0xf]
    %v363 = vld [vmem:[#allocation2 + $0xb8] sm:$0xf]
    %v364 = vld [vmem:[#allocation2 + $0xbc] sm:$0xf]
    %v365 = vld [vmem:[#allocation2 + $0xc0] sm:$0xf]
    %v366 = vld [vmem:[#allocation2 + $0xc4] sm:$0xf]
    %v367 = vld [vmem:[#allocation2 + $0xc8] sm:$0xf]
    %v368 = vld [vmem:[#allocation2 + $0xcc] sm:$0xf]
    %v369 = vld [vmem:[#allocation2 + $0xd0] sm:$0xf]
    %v370 = vld [vmem:[#allocation2 + $0xd4] sm:$0xf]
    %v371 = vld [vmem:[#allocation2 + $0xd8] sm:$0xf]
    %v372 = vld [vmem:[#allocation2 + $0xdc] sm:$0xf]
    %v373 = vld [vmem:[#allocation2 + $0xe0] sm:$0xf]
    %v374 = vld [vmem:[#allocation2 + $0xe4] sm:$0xf]
    %v375 = vld [vmem:[#allocation2 + $0xe8] sm:$0xf]
    %v376 = vld [vmem:[#allocation2 + $0xec] sm:$0xf]
    %v377 = vld [vmem:[#allocation2 + $0xf0] sm:$0xf]
    %v378 = vld [vmem:[#allocation2 + $0xf4] sm:$0xf]
    %v379 = vld [vmem:[#allocation2 + $0xf8] sm:$0xf]
    %v380 = vld [vmem:[#allocation2 + $0xfc] sm:$0xf]
    %v381 = vpack.c.bf16 %v318, %v317
    %v382 = vpack.c.bf16 %v320, %v319
    %v383 = vpack.c.bf16 %v322, %v321
    %v384 = vpack.c.bf16 %v324, %v323
    %v385 = vpack.c.bf16 %v326, %v325
    %v386 = vpack.c.bf16 %v328, %v327
    %v387 = vpack.c.bf16 %v330, %v329
    %v388 = vpack.c.bf16 %v332, %v331
    %v437 = vunpack.c.l.b16 %v333
    %v438 = vunpack.c.l.b16 %v334
    %v439 = vunpack.c.l.b16 %v335
    %v440 = vunpack.c.l.b16 %v336
    %v441 = vunpack.c.l.b16 %v337
    %v442 = vunpack.c.l.b16 %v338
    %v443 = vunpack.c.l.b16 %v339
    %v444 = vunpack.c.l.b16 %v340
    %v445 = vunpack.c.l.b16 %v341
    %v446 = vunpack.c.l.b16 %v342
    %v447 = vunpack.c.l.b16 %v343
    %v448 = vunpack.c.l.b16 %v344
    %v449 = vunpack.c.l.b16 %v345
    %v450 = vunpack.c.l.b16 %v346
    %v451 = vunpack.c.l.b16 %v347
    %v452 = vunpack.c.l.b16 %v348
    %v453 = vunpack.c.l.b16 %v349
    %v454 = vunpack.c.l.b16 %v350
    %v455 = vunpack.c.l.b16 %v351
    %v456 = vunpack.c.l.b16 %v352
    %v457 = vunpack.c.l.b16 %v353
    %v458 = vunpack.c.l.b16 %v354
    %v459 = vunpack.c.l.b16 %v355
    %v460 = vunpack.c.l.b16 %v356
    %v461 = vunpack.c.l.b16 %v357
    %v462 = vunpack.c.l.b16 %v358
    %v463 = vunpack.c.l.b16 %v359
    %v464 = vunpack.c.l.b16 %v360
    %v465 = vunpack.c.l.b16 %v361
    %v466 = vunpack.c.l.b16 %v362
    %v467 = vunpack.c.l.b16 %v363
    %v468 = vunpack.c.l.b16 %v364
    %v469 = vunpack.c.l.b16 %v365
    %v470 = vunpack.c.l.b16 %v366
    %v471 = vunpack.c.l.b16 %v367
    %v472 = vunpack.c.l.b16 %v368
    %v473 = vunpack.c.l.b16 %v369
    %v474 = vunpack.c.l.b16 %v370
    %v475 = vunpack.c.l.b16 %v371
    %v476 = vunpack.c.l.b16 %v372
    %v477 = vunpack.c.l.b16 %v373
    %v478 = vunpack.c.l.b16 %v374
    %v479 = vunpack.c.l.b16 %v375
    %v480 = vunpack.c.l.b16 %v376
    %v481 = vunpack.c.l.b16 %v377
    %v482 = vunpack.c.l.b16 %v378
    %v483 = vunpack.c.l.b16 %v379
    %v484 = vunpack.c.l.b16 %v380
    %v485 = vpack.c.b16 %v438, %v437
    %v486 = vpack.c.b16 %v440, %v439
    %v487 = vpack.c.b16 %v442, %v441
    %v488 = vpack.c.b16 %v444, %v443
    %v489 = vpack.c.b16 %v446, %v445
    %v490 = vpack.c.b16 %v448, %v447
    %v491 = vpack.c.b16 %v450, %v449
    %v492 = vpack.c.b16 %v452, %v451
    %v493 = vpack.c.b16 %v454, %v453
    %v494 = vpack.c.b16 %v456, %v455
    %v495 = vpack.c.b16 %v458, %v457
    %v496 = vpack.c.b16 %v460, %v459
    %v497 = vpack.c.b16 %v462, %v461
    %v498 = vpack.c.b16 %v464, %v463
    %v499 = vpack.c.b16 %v466, %v465
    %v500 = vpack.c.b16 %v468, %v467
    %v501 = vpack.c.b16 %v470, %v469
    %v502 = vpack.c.b16 %v472, %v471
    %v503 = vpack.c.b16 %v474, %v473
    %v504 = vpack.c.b16 %v476, %v475
    %v505 = vpack.c.b16 %v478, %v477
    %v506 = vpack.c.b16 %v480, %v479
    %v507 = vpack.c.b16 %v482, %v481
    %v508 = vpack.c.b16 %v484, %v483
    %533 = vmatprep.subr.bf16.mxu0 0
    %534 = vmatpush1.bf16.msra.mxu0 %v388
    %535 = vmatprep.subr.bf16.mxu0 0
    %536 = vmatpush1.bf16.msra.mxu0 %v387
    %537 = vmatprep.subr.bf16.mxu0 0
    %538 = vmatpush1.bf16.msra.mxu0 %v386
    %539 = vmatprep.subr.bf16.mxu0 0
    %540 = vmatpush1.bf16.msra.mxu0 %v385
    %541 = vmatprep.subr.bf16.mxu0 0
    %542 = vmatpush1.bf16.msra.mxu0 %v384
    %543 = vmatprep.subr.bf16.mxu0 0
    %544 = vmatpush1.bf16.msra.mxu0 %v383
    %545 = vmatprep.subr.bf16.mxu0 0
    %546 = vmatpush1.bf16.msra.mxu0 %v382
    %547 = vmatprep.subr.bf16.mxu0 0
    %548 = vmatpush1.bf16.msra.mxu0 %v381
    %549 = vmatprep.subr.bf16.mxu0 0
    %550 = vmatpush2.bf16.msra.mxu0 0
    %551 = vmatprep.subr.bf16.mxu0 0
    %552 = vmatpush2.bf16.msra.mxu0 0
    %553 = vmatprep.subr.bf16.mxu0 0
    %554 = vmatpush2.bf16.msra.mxu0 0
    %555 = vmatprep.subr.bf16.mxu0 0
    %556 = vmatpush2.bf16.msra.mxu0 0
    %557 = vmatprep.subr.bf16.mxu0 0
    %558 = vmatpush2.bf16.msra.mxu0 0
    %559 = vmatprep.subr.bf16.mxu0 0
    %560 = vmatpush2.bf16.msra.mxu0 0
    %561 = vmatprep.subr.bf16.mxu0 0
    %562 = vmatpush2.bf16.msra.mxu0 0
    %563 = vmatprep.subr.bf16.mxu0 0
    %564 = vmatpush2.bf16.msra.mxu0 0
    %565 = vmatprep.mubr.bf16.mxu0 0
    %566 = vmatmul.mubr.bf16.gmra.mxu0 %v485
    %v567 = vpop.f32.mrf.mxu0
    %v568 = vadd.f32 0.0, %v567
    %v569 = vpop.f32.mrf.mxu0
    %v570 = vpop.f32.mrf.mxu0
    %v571 = vadd.f32 0.0, %v570
    %v572 = vpop.f32.mrf.mxu0
    %573 = vmatprep.mubr.bf16.mxu0 0
    %574 = vmatmul.mubr.bf16.gmra.mxu0 %v486
    %v575 = vpop.f32.mrf.mxu0
    %v576 = vadd.f32 0.0, %v575
    %v577 = vpop.f32.mrf.mxu0
    %v578 = vpop.f32.mrf.mxu0
    %v579 = vadd.f32 0.0, %v578
    %v580 = vpop.f32.mrf.mxu0
    %581 = vmatprep.mubr.bf16.mxu0 0
    %582 = vmatmul.mubr.bf16.gmra.mxu0 %v487
    %v583 = vpop.f32.mrf.mxu0
    %v584 = vadd.f32 0.0, %v583
    %v585 = vpop.f32.mrf.mxu0
    %v586 = vpop.f32.mrf.mxu0
    %v587 = vadd.f32 0.0, %v586
    %v588 = vpop.f32.mrf.mxu0
    %589 = vmatprep.mubr.bf16.mxu0 0
    %590 = vmatmul.mubr.bf16.gmra.mxu0 %v488
    %v591 = vpop.f32.mrf.mxu0
    %v592 = vadd.f32 0.0, %v591
    %v593 = vpop.f32.mrf.mxu0
    %v594 = vpop.f32.mrf.mxu0
    %v595 = vadd.f32 0.0, %v594
    %v596 = vpop.f32.mrf.mxu0
    %597 = vmatprep.mubr.bf16.mxu0 0
    %598 = vmatmul.mubr.bf16.gmra.mxu0 %v489
    %v599 = vpop.f32.mrf.mxu0
    %v600 = vadd.f32 0.0, %v599
    %v601 = vpop.f32.mrf.mxu0
    %v602 = vpop.f32.mrf.mxu0
    %v603 = vadd.f32 0.0, %v602
    %v604 = vpop.f32.mrf.mxu0
    %605 = vmatprep.mubr.bf16.mxu0 0
    %606 = vmatmul.mubr.bf16.gmra.mxu0 %v490
    %v607 = vpop.f32.mrf.mxu0
    %v608 = vadd.f32 0.0, %v607
    %v609 = vpop.f32.mrf.mxu0
    %v610 = vpop.f32.mrf.mxu0
    %v611 = vadd.f32 0.0, %v610
    %v612 = vpop.f32.mrf.mxu0
    %613 = vmatprep.mubr.bf16.mxu0 0
    %614 = vmatmul.mubr.bf16.gmra.mxu0 %v491
    %v615 = vpop.f32.mrf.mxu0
    %v616 = vadd.f32 0.0, %v615
    %v617 = vpop.f32.mrf.mxu0
    %v618 = vpop.f32.mrf.mxu0
    %v619 = vadd.f32 0.0, %v618
    %v620 = vpop.f32.mrf.mxu0
    %621 = vmatprep.mubr.bf16.mxu0 0
    %622 = vmatmul.mubr.bf16.gmra.mxu0 %v492
    %v623 = vpop.f32.mrf.mxu0
    %v624 = vadd.f32 0.0, %v623
    %v625 = vpop.f32.mrf.mxu0
    %v626 = vpop.f32.mrf.mxu0
    %v627 = vadd.f32 0.0, %v626
    %v628 = vpop.f32.mrf.mxu0
    %629 = vmatprep.mubr.bf16.mxu0 0
    %630 = vmatmul.mubr.bf16.gmra.mxu0 %v493
    %v631 = vpop.f32.mrf.mxu0
    %v632 = vadd.f32 0.0, %v631
    %v633 = vpop.f32.mrf.mxu0
    %v634 = vpop.f32.mrf.mxu0
    %v635 = vadd.f32 0.0, %v634
    %v636 = vpop.f32.mrf.mxu0
    %637 = vmatprep.mubr.bf16.mxu0 0
    %638 = vmatmul.mubr.bf16.gmra.mxu0 %v494
    %v639 = vpop.f32.mrf.mxu0
    %v640 = vadd.f32 0.0, %v639
    %v641 = vpop.f32.mrf.mxu0
    %v642 = vpop.f32.mrf.mxu0
    %v643 = vadd.f32 0.0, %v642
    %v644 = vpop.f32.mrf.mxu0
    %645 = vmatprep.mubr.bf16.mxu0 0
    %646 = vmatmul.mubr.bf16.gmra.mxu0 %v495
    %v647 = vpop.f32.mrf.mxu0
    %v648 = vadd.f32 0.0, %v647
    %v649 = vpop.f32.mrf.mxu0
    %v650 = vpop.f32.mrf.mxu0
    %v651 = vadd.f32 0.0, %v650
    %v652 = vpop.f32.mrf.mxu0
    %653 = vmatprep.mubr.bf16.mxu0 0
    %654 = vmatmul.mubr.bf16.gmra.mxu0 %v496
    %v655 = vpop.f32.mrf.mxu0
    %v656 = vadd.f32 0.0, %v655
    %v657 = vpop.f32.mrf.mxu0
    %v658 = vpop.f32.mrf.mxu0
    %v659 = vadd.f32 0.0, %v658
    %v660 = vpop.f32.mrf.mxu0
    %661 = vmatprep.mubr.bf16.mxu0 0
    %662 = vmatmul.mubr.bf16.gmra.mxu0 %v497
    %v663 = vpop.f32.mrf.mxu0
    %v664 = vadd.f32 0.0, %v663
    %v665 = vpop.f32.mrf.mxu0
    %v666 = vpop.f32.mrf.mxu0
    %v667 = vadd.f32 0.0, %v666
    %v668 = vpop.f32.mrf.mxu0
    %669 = vmatprep.mubr.bf16.mxu0 0
    %670 = vmatmul.mubr.bf16.gmra.mxu0 %v498
    %v671 = vpop.f32.mrf.mxu0
    %v672 = vadd.f32 0.0, %v671
    %v673 = vpop.f32.mrf.mxu0
    %v674 = vpop.f32.mrf.mxu0
    %v675 = vadd.f32 0.0, %v674
    %v676 = vpop.f32.mrf.mxu0
    %677 = vmatprep.mubr.bf16.mxu0 0
    %678 = vmatmul.mubr.bf16.gmra.mxu0 %v499
    %v679 = vpop.f32.mrf.mxu0
    %v680 = vadd.f32 0.0, %v679
    %v681 = vpop.f32.mrf.mxu0
    %v682 = vpop.f32.mrf.mxu0
    %v683 = vadd.f32 0.0, %v682
    %v684 = vpop.f32.mrf.mxu0
    %685 = vmatprep.mubr.bf16.mxu0 0
    %686 = vmatmul.mubr.bf16.gmra.mxu0 %v500
    %v687 = vpop.f32.mrf.mxu0
    %v688 = vadd.f32 0.0, %v687
    %v689 = vpop.f32.mrf.mxu0
    %v690 = vpop.f32.mrf.mxu0
    %v691 = vadd.f32 0.0, %v690
    %v692 = vpop.f32.mrf.mxu0
    %693 = vmatprep.mubr.bf16.mxu0 0
    %694 = vmatmul.mubr.bf16.gmra.mxu0 %v501
    %v695 = vpop.f32.mrf.mxu0
    %v696 = vadd.f32 0.0, %v695
    %v697 = vpop.f32.mrf.mxu0
    %v698 = vpop.f32.mrf.mxu0
    %v699 = vadd.f32 0.0, %v698
    %v700 = vpop.f32.mrf.mxu0
    %701 = vmatprep.mubr.bf16.mxu0 0
    %702 = vmatmul.mubr.bf16.gmra.mxu0 %v502
    %v703 = vpop.f32.mrf.mxu0
    %v704 = vadd.f32 0.0, %v703
    %v705 = vpop.f32.mrf.mxu0
    %v706 = vpop.f32.mrf.mxu0
    %v707 = vadd.f32 0.0, %v706
    %v708 = vpop.f32.mrf.mxu0
    %709 = vmatprep.mubr.bf16.mxu0 0
    %710 = vmatmul.mubr.bf16.gmra.mxu0 %v503
    %v711 = vpop.f32.mrf.mxu0
    %v712 = vadd.f32 0.0, %v711
    %v713 = vpop.f32.mrf.mxu0
    %v714 = vpop.f32.mrf.mxu0
    %v715 = vadd.f32 0.0, %v714
    %v716 = vpop.f32.mrf.mxu0
    %717 = vmatprep.mubr.bf16.mxu0 0
    %718 = vmatmul.mubr.bf16.gmra.mxu0 %v504
    %v719 = vpop.f32.mrf.mxu0
    %v720 = vadd.f32 0.0, %v719
    %v721 = vpop.f32.mrf.mxu0
    %v722 = vpop.f32.mrf.mxu0
    %v723 = vadd.f32 0.0, %v722
    %v724 = vpop.f32.mrf.mxu0
    %725 = vmatprep.mubr.bf16.mxu0 0
    %726 = vmatmul.mubr.bf16.gmra.mxu0 %v505
    %v727 = vpop.f32.mrf.mxu0
    %v728 = vadd.f32 0.0, %v727
    %v729 = vpop.f32.mrf.mxu0
    %v730 = vpop.f32.mrf.mxu0
    %v731 = vadd.f32 0.0, %v730
    %v732 = vpop.f32.mrf.mxu0
    %733 = vmatprep.mubr.bf16.mxu0 0
    %734 = vmatmul.mubr.bf16.gmra.mxu0 %v506
    %v735 = vpop.f32.mrf.mxu0
    %v736 = vadd.f32 0.0, %v735
    %v737 = vpop.f32.mrf.mxu0
    %v738 = vpop.f32.mrf.mxu0
    %v739 = vadd.f32 0.0, %v738
    %v740 = vpop.f32.mrf.mxu0
    %741 = vmatprep.mubr.bf16.mxu0 0
    %742 = vmatmul.mubr.bf16.gmra.mxu0 %v507
    %v743 = vpop.f32.mrf.mxu0
    %v744 = vadd.f32 0.0, %v743
    %v745 = vpop.f32.mrf.mxu0
    %v746 = vpop.f32.mrf.mxu0
    %v747 = vadd.f32 0.0, %v746
    %v748 = vpop.f32.mrf.mxu0
    %749 = vmatprep.mubr.bf16.mxu0 0
    %750 = vmatmul.mubr.bf16.gmra.mxu0 %v508
    %v751 = vpop.f32.mrf.mxu0
    %v752 = vadd.f32 0.0, %v751
    %v753 = vpop.f32.mrf.mxu0
    %v754 = vpop.f32.mrf.mxu0
    %v755 = vadd.f32 0.0, %v754
    %v756 = vpop.f32.mrf.mxu0
    %757 = vdwg.mxu0
    %v758 = vpack.c.bf16 %v571, %v568
    %v759 = vpack.c.bf16 %v579, %v576
    %v760 = vpack.c.bf16 %v587, %v584
    %v761 = vpack.c.bf16 %v595, %v592
    %v762 = vpack.c.bf16 %v603, %v600
    %v763 = vpack.c.bf16 %v611, %v608
    %v764 = vpack.c.bf16 %v619, %v616
    %v765 = vpack.c.bf16 %v627, %v624
    %v766 = vld [vmem:[#allocation2 + $0x100] sm:$0xf]
    %v767 = vld [vmem:[#allocation2 + $0x104] sm:$0xf]
    %v768 = vld [vmem:[#allocation2 + $0x108] sm:$0xf]
    %v769 = vld [vmem:[#allocation2 + $0x10c] sm:$0xf]
    %v770 = vld [vmem:[#allocation2 + $0x110] sm:$0xf]
    %v771 = vld [vmem:[#allocation2 + $0x114] sm:$0xf]
    %v772 = vld [vmem:[#allocation2 + $0x118] sm:$0xf]
    %v773 = vld [vmem:[#allocation2 + $0x11c] sm:$0xf]
    %v774 = vld [vmem:[#allocation2 + $0x120] sm:$0xf]
    %v775 = vld [vmem:[#allocation2 + $0x124] sm:$0xf]
    %v776 = vld [vmem:[#allocation2 + $0x128] sm:$0xf]
    %v777 = vld [vmem:[#allocation2 + $0x12c] sm:$0xf]
    %v778 = vld [vmem:[#allocation2 + $0x130] sm:$0xf]
    %v779 = vld [vmem:[#allocation2 + $0x134] sm:$0xf]
    %v780 = vld [vmem:[#allocation2 + $0x138] sm:$0xf]
    %v781 = vld [vmem:[#allocation2 + $0x13c] sm:$0xf]
    %v798 = vunpack.c.l.b16 %v766
    %v799 = vunpack.c.l.b16 %v767
    %v800 = vunpack.c.l.b16 %v768
    %v801 = vunpack.c.l.b16 %v769
    %v802 = vunpack.c.l.b16 %v770
    %v803 = vunpack.c.l.b16 %v771
    %v804 = vunpack.c.l.b16 %v772
    %v805 = vunpack.c.l.b16 %v773
    %v806 = vunpack.c.l.b16 %v774
    %v807 = vunpack.c.l.b16 %v775
    %v808 = vunpack.c.l.b16 %v776
    %v809 = vunpack.c.l.b16 %v777
    %v810 = vunpack.c.l.b16 %v778
    %v811 = vunpack.c.l.b16 %v779
    %v812 = vunpack.c.l.b16 %v780
    %v813 = vunpack.c.l.b16 %v781
    %v814 = vpack.c.b16 %v799, %v798
    %v815 = vpack.c.b16 %v801, %v800
    %v816 = vpack.c.b16 %v803, %v802
    %v817 = vpack.c.b16 %v805, %v804
    %v818 = vpack.c.b16 %v807, %v806
    %v819 = vpack.c.b16 %v809, %v808
    %v820 = vpack.c.b16 %v811, %v810
    %v821 = vpack.c.b16 %v813, %v812
    %830 = vmatprep.subr.bf16.mxu0 0
    %831 = vmatpush1.bf16.msra.mxu0 %v821
    %832 = vmatprep.subr.bf16.mxu0 0
    %833 = vmatpush1.bf16.msra.mxu0 %v820
    %834 = vmatprep.subr.bf16.mxu0 0
    %835 = vmatpush1.bf16.msra.mxu0 %v819
    %836 = vmatprep.subr.bf16.mxu0 0
    %837 = vmatpush1.bf16.msra.mxu0 %v818
    %838 = vmatprep.subr.bf16.mxu0 0
    %839 = vmatpush1.bf16.msra.mxu0 %v817
    %840 = vmatprep.subr.bf16.mxu0 0
    %841 = vmatpush1.bf16.msra.mxu0 %v816
    %842 = vmatprep.subr.bf16.mxu0 0
    %843 = vmatpush1.bf16.msra.mxu0 %v815
    %844 = vmatprep.subr.bf16.mxu0 0
    %845 = vmatpush1.bf16.msra.mxu0 %v814
    %846 = vmatprep.subr.bf16.mxu0 0
    %847 = vmatpush2.bf16.msra.mxu0 0
    %848 = vmatprep.subr.bf16.mxu0 0
    %849 = vmatpush2.bf16.msra.mxu0 0
    %850 = vmatprep.subr.bf16.mxu0 0
    %851 = vmatpush2.bf16.msra.mxu0 0
    %852 = vmatprep.subr.bf16.mxu0 0
    %853 = vmatpush2.bf16.msra.mxu0 0
    %854 = vmatprep.subr.bf16.mxu0 0
    %855 = vmatpush2.bf16.msra.mxu0 0
    %856 = vmatprep.subr.bf16.mxu0 0
    %857 = vmatpush2.bf16.msra.mxu0 0
    %858 = vmatprep.subr.bf16.mxu0 0
    %859 = vmatpush2.bf16.msra.mxu0 0
    %860 = vmatprep.subr.bf16.mxu0 0
    %861 = vmatpush2.bf16.msra.mxu0 0
    %862 = vmatprep.mubr.bf16.mxu0 0
    %863 = vmatmul.mubr.bf16.gmra.mxu0 %v758
    %v864 = vpop.f32.mrf.mxu0
    %v865 = vadd.f32 0.0, %v864
    %v866 = vpop.f32.mrf.mxu0
    %v867 = vpop.f32.mrf.mxu0
    %v868 = vadd.f32 0.0, %v867
    %v869 = vpop.f32.mrf.mxu0
    %870 = vmatprep.mubr.bf16.mxu0 0
    %871 = vmatmul.mubr.bf16.gmra.mxu0 %v759
    %v872 = vpop.f32.mrf.mxu0
    %v873 = vadd.f32 0.0, %v872
    %v874 = vpop.f32.mrf.mxu0
    %v875 = vpop.f32.mrf.mxu0
    %v876 = vadd.f32 0.0, %v875
    %v877 = vpop.f32.mrf.mxu0
    %878 = vmatprep.mubr.bf16.mxu0 0
    %879 = vmatmul.mubr.bf16.gmra.mxu0 %v760
    %v880 = vpop.f32.mrf.mxu0
    %v881 = vadd.f32 0.0, %v880
    %v882 = vpop.f32.mrf.mxu0
    %v883 = vpop.f32.mrf.mxu0
    %v884 = vadd.f32 0.0, %v883
    %v885 = vpop.f32.mrf.mxu0
    %886 = vmatprep.mubr.bf16.mxu0 0
    %887 = vmatmul.mubr.bf16.gmra.mxu0 %v761
    %v888 = vpop.f32.mrf.mxu0
    %v889 = vadd.f32 0.0, %v888
    %v890 = vpop.f32.mrf.mxu0
    %v891 = vpop.f32.mrf.mxu0
    %v892 = vadd.f32 0.0, %v891
    %v893 = vpop.f32.mrf.mxu0
    %894 = vmatprep.mubr.bf16.mxu0 0
    %895 = vmatmul.mubr.bf16.gmra.mxu0 %v762
    %v896 = vpop.f32.mrf.mxu0
    %v897 = vadd.f32 0.0, %v896
    %v898 = vpop.f32.mrf.mxu0
    %v899 = vpop.f32.mrf.mxu0
    %v900 = vadd.f32 0.0, %v899
    %v901 = vpop.f32.mrf.mxu0
    %902 = vmatprep.mubr.bf16.mxu0 0
    %903 = vmatmul.mubr.bf16.gmra.mxu0 %v763
    %v904 = vpop.f32.mrf.mxu0
    %v905 = vadd.f32 0.0, %v904
    %v906 = vpop.f32.mrf.mxu0
    %v907 = vpop.f32.mrf.mxu0
    %v908 = vadd.f32 0.0, %v907
    %v909 = vpop.f32.mrf.mxu0
    %910 = vmatprep.mubr.bf16.mxu0 0
    %911 = vmatmul.mubr.bf16.gmra.mxu0 %v764
    %v912 = vpop.f32.mrf.mxu0
    %v913 = vadd.f32 0.0, %v912
    %v914 = vpop.f32.mrf.mxu0
    %v915 = vpop.f32.mrf.mxu0
    %v916 = vadd.f32 0.0, %v915
    %v917 = vpop.f32.mrf.mxu0
    %918 = vmatprep.mubr.bf16.mxu0 0
    %919 = vmatmul.mubr.bf16.gmra.mxu0 %v765
    %v920 = vpop.f32.mrf.mxu0
    %v921 = vadd.f32 0.0, %v920
    %v922 = vpop.f32.mrf.mxu0
    %v923 = vpop.f32.mrf.mxu0
    %v924 = vadd.f32 0.0, %v923
    %v925 = vpop.f32.mrf.mxu0
    %926 = vdwg.mxu0
    %v927 = vlaneseq
    %v928 = vshrl.u32 %v927, 7
    %v929 = vsub.s32 1, %v928
    %v930 = vrot.slane %v61, %v929
    %v931 = vadd.f32 %v930, %v865
    %v932 = vadd.f32 %v930, %v868
    %v933 = vadd.f32 %v930, %v873
    %v934 = vadd.f32 %v930, %v876
    %v935 = vadd.f32 %v930, %v881
    %v936 = vadd.f32 %v930, %v884
    %v937 = vadd.f32 %v930, %v889
    %v938 = vadd.f32 %v930, %v892
    %v939 = vadd.f32 %v930, %v897
    %v940 = vadd.f32 %v930, %v900
    %v941 = vadd.f32 %v930, %v905
    %v942 = vadd.f32 %v930, %v908
    %v943 = vadd.f32 %v930, %v913
    %v944 = vadd.f32 %v930, %v916
    %v945 = vadd.f32 %v930, %v921
    %v946 = vadd.f32 %v930, %v924
    %v947 = vpack.c.bf16 %v635, %v632
    %v948 = vpack.c.bf16 %v643, %v640
    %v949 = vpack.c.bf16 %v651, %v648
    %v950 = vpack.c.bf16 %v659, %v656
    %v951 = vpack.c.bf16 %v667, %v664
    %v952 = vpack.c.bf16 %v675, %v672
    %v953 = vpack.c.bf16 %v683, %v680
    %v954 = vpack.c.bf16 %v691, %v688
    %v955 = vld [vmem:[#allocation2 + $0x140] sm:$0xf]
    %v956 = vld [vmem:[#allocation2 + $0x144] sm:$0xf]
    %v957 = vld [vmem:[#allocation2 + $0x148] sm:$0xf]
    %v958 = vld [vmem:[#allocation2 + $0x14c] sm:$0xf]
    %v959 = vld [vmem:[#allocation2 + $0x150] sm:$0xf]
    %v960 = vld [vmem:[#allocation2 + $0x154] sm:$0xf]
    %v961 = vld [vmem:[#allocation2 + $0x158] sm:$0xf]
    %v962 = vld [vmem:[#allocation2 + $0x15c] sm:$0xf]
    %v963 = vld [vmem:[#allocation2 + $0x160] sm:$0xf]
    %v964 = vld [vmem:[#allocation2 + $0x164] sm:$0xf]
    %v965 = vld [vmem:[#allocation2 + $0x168] sm:$0xf]
    %v966 = vld [vmem:[#allocation2 + $0x16c] sm:$0xf]
    %v967 = vld [vmem:[#allocation2 + $0x170] sm:$0xf]
    %v968 = vld [vmem:[#allocation2 + $0x174] sm:$0xf]
    %v969 = vld [vmem:[#allocation2 + $0x178] sm:$0xf]
    %v970 = vld [vmem:[#allocation2 + $0x17c] sm:$0xf]
    %v987 = vunpack.c.l.b16 %v955
    %v988 = vunpack.c.l.b16 %v956
    %v989 = vunpack.c.l.b16 %v957
    %v990 = vunpack.c.l.b16 %v958
    %v991 = vunpack.c.l.b16 %v959
    %v992 = vunpack.c.l.b16 %v960
    %v993 = vunpack.c.l.b16 %v961
    %v994 = vunpack.c.l.b16 %v962
    %v995 = vunpack.c.l.b16 %v963
    %v996 = vunpack.c.l.b16 %v964
    %v997 = vunpack.c.l.b16 %v965
    %v998 = vunpack.c.l.b16 %v966
    %v999 = vunpack.c.l.b16 %v967
    %v1000 = vunpack.c.l.b16 %v968
    %v1001 = vunpack.c.l.b16 %v969
    %v1002 = vunpack.c.l.b16 %v970
    %v1003 = vpack.c.b16 %v988, %v987
    %v1004 = vpack.c.b16 %v990, %v989
    %v1005 = vpack.c.b16 %v992, %v991
    %v1006 = vpack.c.b16 %v994, %v993
    %v1007 = vpack.c.b16 %v996, %v995
    %v1008 = vpack.c.b16 %v998, %v997
    %v1009 = vpack.c.b16 %v1000, %v999
    %v1010 = vpack.c.b16 %v1002, %v1001
    %1019 = vmatprep.subr.bf16.mxu0 0
    %1020 = vmatpush1.bf16.msra.mxu0 %v1010
    %1021 = vmatprep.subr.bf16.mxu0 0
    %1022 = vmatpush1.bf16.msra.mxu0 %v1009
    %1023 = vmatprep.subr.bf16.mxu0 0
    %1024 = vmatpush1.bf16.msra.mxu0 %v1008
    %1025 = vmatprep.subr.bf16.mxu0 0
    %1026 = vmatpush1.bf16.msra.mxu0 %v1007
    %1027 = vmatprep.subr.bf16.mxu0 0
    %1028 = vmatpush1.bf16.msra.mxu0 %v1006
    %1029 = vmatprep.subr.bf16.mxu0 0
    %1030 = vmatpush1.bf16.msra.mxu0 %v1005
    %1031 = vmatprep.subr.bf16.mxu0 0
    %1032 = vmatpush1.bf16.msra.mxu0 %v1004
    %1033 = vmatprep.subr.bf16.mxu0 0
    %1034 = vmatpush1.bf16.msra.mxu0 %v1003
    %1035 = vmatprep.subr.bf16.mxu0 0
    %1036 = vmatpush2.bf16.msra.mxu0 0
    %1037 = vmatprep.subr.bf16.mxu0 0
    %1038 = vmatpush2.bf16.msra.mxu0 0
    %1039 = vmatprep.subr.bf16.mxu0 0
    %1040 = vmatpush2.bf16.msra.mxu0 0
    %1041 = vmatprep.subr.bf16.mxu0 0
    %1042 = vmatpush2.bf16.msra.mxu0 0
    %1043 = vmatprep.subr.bf16.mxu0 0
    %1044 = vmatpush2.bf16.msra.mxu0 0
    %1045 = vmatprep.subr.bf16.mxu0 0
    %1046 = vmatpush2.bf16.msra.mxu0 0
    %1047 = vmatprep.subr.bf16.mxu0 0
    %1048 = vmatpush2.bf16.msra.mxu0 0
    %1049 = vmatprep.subr.bf16.mxu0 0
    %1050 = vmatpush2.bf16.msra.mxu0 0
    %1051 = vmatprep.mubr.bf16.mxu0 0
    %1052 = vmatmul.mubr.bf16.gmra.mxu0 %v947
    %v1053 = vpop.f32.mrf.mxu0
    %v1054 = vadd.f32 0.0, %v1053
    %v1055 = vpop.f32.mrf.mxu0
    %v1056 = vpop.f32.mrf.mxu0
    %v1057 = vadd.f32 0.0, %v1056
    %v1058 = vpop.f32.mrf.mxu0
    %1059 = vmatprep.mubr.bf16.mxu0 0
    %1060 = vmatmul.mubr.bf16.gmra.mxu0 %v948
    %v1061 = vpop.f32.mrf.mxu0
    %v1062 = vadd.f32 0.0, %v1061
    %v1063 = vpop.f32.mrf.mxu0
    %v1064 = vpop.f32.mrf.mxu0
    %v1065 = vadd.f32 0.0, %v1064
    %v1066 = vpop.f32.mrf.mxu0
    %1067 = vmatprep.mubr.bf16.mxu0 0
    %1068 = vmatmul.mubr.bf16.gmra.mxu0 %v949
    %v1069 = vpop.f32.mrf.mxu0
    %v1070 = vadd.f32 0.0, %v1069
    %v1071 = vpop.f32.mrf.mxu0
    %v1072 = vpop.f32.mrf.mxu0
    %v1073 = vadd.f32 0.0, %v1072
    %v1074 = vpop.f32.mrf.mxu0
    %1075 = vmatprep.mubr.bf16.mxu0 0
    %1076 = vmatmul.mubr.bf16.gmra.mxu0 %v950
    %v1077 = vpop.f32.mrf.mxu0
    %v1078 = vadd.f32 0.0, %v1077
    %v1079 = vpop.f32.mrf.mxu0
    %v1080 = vpop.f32.mrf.mxu0
    %v1081 = vadd.f32 0.0, %v1080
    %v1082 = vpop.f32.mrf.mxu0
    %1083 = vmatprep.mubr.bf16.mxu0 0
    %1084 = vmatmul.mubr.bf16.gmra.mxu0 %v951
    %v1085 = vpop.f32.mrf.mxu0
    %v1086 = vadd.f32 0.0, %v1085
    %v1087 = vpop.f32.mrf.mxu0
    %v1088 = vpop.f32.mrf.mxu0
    %v1089 = vadd.f32 0.0, %v1088
    %v1090 = vpop.f32.mrf.mxu0
    %1091 = vmatprep.mubr.bf16.mxu0 0
    %1092 = vmatmul.mubr.bf16.gmra.mxu0 %v952
    %v1093 = vpop.f32.mrf.mxu0
    %v1094 = vadd.f32 0.0, %v1093
    %v1095 = vpop.f32.mrf.mxu0
    %v1096 = vpop.f32.mrf.mxu0
    %v1097 = vadd.f32 0.0, %v1096
    %v1098 = vpop.f32.mrf.mxu0
    %1099 = vmatprep.mubr.bf16.mxu0 0
    %1100 = vmatmul.mubr.bf16.gmra.mxu0 %v953
    %v1101 = vpop.f32.mrf.mxu0
    %v1102 = vadd.f32 0.0, %v1101
    %v1103 = vpop.f32.mrf.mxu0
    %v1104 = vpop.f32.mrf.mxu0
    %v1105 = vadd.f32 0.0, %v1104
    %v1106 = vpop.f32.mrf.mxu0
    %1107 = vmatprep.mubr.bf16.mxu0 0
    %1108 = vmatmul.mubr.bf16.gmra.mxu0 %v954
    %v1109 = vpop.f32.mrf.mxu0
    %v1110 = vadd.f32 0.0, %v1109
    %v1111 = vpop.f32.mrf.mxu0
    %v1112 = vpop.f32.mrf.mxu0
    %v1113 = vadd.f32 0.0, %v1112
    %v1114 = vpop.f32.mrf.mxu0
    %1115 = vdwg.mxu0
    %v1116 = vadd.f32 %v931, %v1054
    %v1117 = vadd.f32 %v932, %v1057
    %v1118 = vadd.f32 %v933, %v1062
    %v1119 = vadd.f32 %v934, %v1065
    %v1120 = vadd.f32 %v935, %v1070
    %v1121 = vadd.f32 %v936, %v1073
    %v1122 = vadd.f32 %v937, %v1078
    %v1123 = vadd.f32 %v938, %v1081
    %v1124 = vadd.f32 %v939, %v1086
    %v1125 = vadd.f32 %v940, %v1089
    %v1126 = vadd.f32 %v941, %v1094
    %v1127 = vadd.f32 %v942, %v1097
    %v1128 = vadd.f32 %v943, %v1102
    %v1129 = vadd.f32 %v944, %v1105
    %v1130 = vadd.f32 %v945, %v1110
    %v1131 = vadd.f32 %v946, %v1113
    %v1132 = vpack.c.bf16 %v699, %v696
    %v1133 = vpack.c.bf16 %v707, %v704
    %v1134 = vpack.c.bf16 %v715, %v712
    %v1135 = vpack.c.bf16 %v723, %v720
    %v1136 = vpack.c.bf16 %v731, %v728
    %v1137 = vpack.c.bf16 %v739, %v736
    %v1138 = vpack.c.bf16 %v747, %v744
    %v1139 = vpack.c.bf16 %v755, %v752
    %v1140 = vld [vmem:[#allocation2 + $0x180] sm:$0xf]
    %v1141 = vld [vmem:[#allocation2 + $0x184] sm:$0xf]
    %v1142 = vld [vmem:[#allocation2 + $0x188] sm:$0xf]
    %v1143 = vld [vmem:[#allocation2 + $0x18c] sm:$0xf]
    %v1144 = vld [vmem:[#allocation2 + $0x190] sm:$0xf]
    %v1145 = vld [vmem:[#allocation2 + $0x194] sm:$0xf]
    %v1146 = vld [vmem:[#allocation2 + $0x198] sm:$0xf]
    %v1147 = vld [vmem:[#allocation2 + $0x19c] sm:$0xf]
    %v1148 = vld [vmem:[#allocation2 + $0x1a0] sm:$0xf]
    %v1149 = vld [vmem:[#allocation2 + $0x1a4] sm:$0xf]
    %v1150 = vld [vmem:[#allocation2 + $0x1a8] sm:$0xf]
    %v1151 = vld [vmem:[#allocation2 + $0x1ac] sm:$0xf]
    %v1152 = vld [vmem:[#allocation2 + $0x1b0] sm:$0xf]
    %v1153 = vld [vmem:[#allocation2 + $0x1b4] sm:$0xf]
    %v1154 = vld [vmem:[#allocation2 + $0x1b8] sm:$0xf]
    %v1155 = vld [vmem:[#allocation2 + $0x1bc] sm:$0xf]
    %v1172 = vunpack.c.l.b16 %v1140
    %v1173 = vunpack.c.l.b16 %v1141
    %v1174 = vunpack.c.l.b16 %v1142
    %v1175 = vunpack.c.l.b16 %v1143
    %v1176 = vunpack.c.l.b16 %v1144
    %v1177 = vunpack.c.l.b16 %v1145
    %v1178 = vunpack.c.l.b16 %v1146
    %v1179 = vunpack.c.l.b16 %v1147
    %v1180 = vunpack.c.l.b16 %v1148
    %v1181 = vunpack.c.l.b16 %v1149
    %v1182 = vunpack.c.l.b16 %v1150
    %v1183 = vunpack.c.l.b16 %v1151
    %v1184 = vunpack.c.l.b16 %v1152
    %v1185 = vunpack.c.l.b16 %v1153
    %v1186 = vunpack.c.l.b16 %v1154
    %v1187 = vunpack.c.l.b16 %v1155
    %v1188 = vpack.c.b16 %v1173, %v1172
    %v1189 = vpack.c.b16 %v1175, %v1174
    %v1190 = vpack.c.b16 %v1177, %v1176
    %v1191 = vpack.c.b16 %v1179, %v1178
    %v1192 = vpack.c.b16 %v1181, %v1180
    %v1193 = vpack.c.b16 %v1183, %v1182
    %v1194 = vpack.c.b16 %v1185, %v1184
    %v1195 = vpack.c.b16 %v1187, %v1186
    %1204 = vmatprep.subr.bf16.mxu0 0
    %1205 = vmatpush1.bf16.msra.mxu0 %v1195
    %1206 = vmatprep.subr.bf16.mxu0 0
    %1207 = vmatpush1.bf16.msra.mxu0 %v1194
    %1208 = vmatprep.subr.bf16.mxu0 0
    %1209 = vmatpush1.bf16.msra.mxu0 %v1193
    %1210 = vmatprep.subr.bf16.mxu0 0
    %1211 = vmatpush1.bf16.msra.mxu0 %v1192
    %1212 = vmatprep.subr.bf16.mxu0 0
    %1213 = vmatpush1.bf16.msra.mxu0 %v1191
    %1214 = vmatprep.subr.bf16.mxu0 0
    %1215 = vmatpush1.bf16.msra.mxu0 %v1190
    %1216 = vmatprep.subr.bf16.mxu0 0
    %1217 = vmatpush1.bf16.msra.mxu0 %v1189
    %1218 = vmatprep.subr.bf16.mxu0 0
    %1219 = vmatpush1.bf16.msra.mxu0 %v1188
    %1220 = vmatprep.subr.bf16.mxu0 0
    %1221 = vmatpush2.bf16.msra.mxu0 0
    %1222 = vmatprep.subr.bf16.mxu0 0
    %1223 = vmatpush2.bf16.msra.mxu0 0
    %1224 = vmatprep.subr.bf16.mxu0 0
    %1225 = vmatpush2.bf16.msra.mxu0 0
    %1226 = vmatprep.subr.bf16.mxu0 0
    %1227 = vmatpush2.bf16.msra.mxu0 0
    %1228 = vmatprep.subr.bf16.mxu0 0
    %1229 = vmatpush2.bf16.msra.mxu0 0
    %1230 = vmatprep.subr.bf16.mxu0 0
    %1231 = vmatpush2.bf16.msra.mxu0 0
    %1232 = vmatprep.subr.bf16.mxu0 0
    %1233 = vmatpush2.bf16.msra.mxu0 0
    %1234 = vmatprep.subr.bf16.mxu0 0
    %1235 = vmatpush2.bf16.msra.mxu0 0
    %1236 = vmatprep.mubr.bf16.mxu0 0
    %1237 = vmatmul.mubr.bf16.gmra.mxu0 %v1132
    %v1238 = vpop.f32.mrf.mxu0
    %v1239 = vadd.f32 0.0, %v1238
    %v1240 = vpop.f32.mrf.mxu0
    %v1241 = vpop.f32.mrf.mxu0
    %v1242 = vadd.f32 0.0, %v1241
    %v1243 = vpop.f32.mrf.mxu0
    %1244 = vmatprep.mubr.bf16.mxu0 0
    %1245 = vmatmul.mubr.bf16.gmra.mxu0 %v1133
    %v1246 = vpop.f32.mrf.mxu0
    %v1247 = vadd.f32 0.0, %v1246
    %v1248 = vpop.f32.mrf.mxu0
    %v1249 = vpop.f32.mrf.mxu0
    %v1250 = vadd.f32 0.0, %v1249
    %v1251 = vpop.f32.mrf.mxu0
    %1252 = vmatprep.mubr.bf16.mxu0 0
    %1253 = vmatmul.mubr.bf16.gmra.mxu0 %v1134
    %v1254 = vpop.f32.mrf.mxu0
    %v1255 = vadd.f32 0.0, %v1254
    %v1256 = vpop.f32.mrf.mxu0
    %v1257 = vpop.f32.mrf.mxu0
    %v1258 = vadd.f32 0.0, %v1257
    %v1259 = vpop.f32.mrf.mxu0
    %1260 = vmatprep.mubr.bf16.mxu0 0
    %1261 = vmatmul.mubr.bf16.gmra.mxu0 %v1135
    %v1262 = vpop.f32.mrf.mxu0
    %v1263 = vadd.f32 0.0, %v1262
    %v1264 = vpop.f32.mrf.mxu0
    %v1265 = vpop.f32.mrf.mxu0
    %v1266 = vadd.f32 0.0, %v1265
    %v1267 = vpop.f32.mrf.mxu0
    %1268 = vmatprep.mubr.bf16.mxu0 0
    %1269 = vmatmul.mubr.bf16.gmra.mxu0 %v1136
    %v1270 = vpop.f32.mrf.mxu0
    %v1271 = vadd.f32 0.0, %v1270
    %v1272 = vpop.f32.mrf.mxu0
    %v1273 = vpop.f32.mrf.mxu0
    %v1274 = vadd.f32 0.0, %v1273
    %v1275 = vpop.f32.mrf.mxu0
    %1276 = vmatprep.mubr.bf16.mxu0 0
    %1277 = vmatmul.mubr.bf16.gmra.mxu0 %v1137
    %v1278 = vpop.f32.mrf.mxu0
    %v1279 = vadd.f32 0.0, %v1278
    %v1280 = vpop.f32.mrf.mxu0
    %v1281 = vpop.f32.mrf.mxu0
    %v1282 = vadd.f32 0.0, %v1281
    %v1283 = vpop.f32.mrf.mxu0
    %1284 = vmatprep.mubr.bf16.mxu0 0
    %1285 = vmatmul.mubr.bf16.gmra.mxu0 %v1138
    %v1286 = vpop.f32.mrf.mxu0
    %v1287 = vadd.f32 0.0, %v1286
    %v1288 = vpop.f32.mrf.mxu0
    %v1289 = vpop.f32.mrf.mxu0
    %v1290 = vadd.f32 0.0, %v1289
    %v1291 = vpop.f32.mrf.mxu0
    %1292 = vmatprep.mubr.bf16.mxu0 0
    %1293 = vmatmul.mubr.bf16.gmra.mxu0 %v1139
    %v1294 = vpop.f32.mrf.mxu0
    %v1295 = vadd.f32 0.0, %v1294
    %v1296 = vpop.f32.mrf.mxu0
    %v1297 = vpop.f32.mrf.mxu0
    %v1298 = vadd.f32 0.0, %v1297
    %v1299 = vpop.f32.mrf.mxu0
    %1300 = vdwg.mxu0
    %v1301 = vadd.f32 %v1116, %v1239
    %v1302 = vadd.f32 %v1117, %v1242
    %v1303 = vadd.f32 %v1118, %v1247
    %v1304 = vadd.f32 %v1119, %v1250
    %v1305 = vadd.f32 %v1120, %v1255
    %v1306 = vadd.f32 %v1121, %v1258
    %v1307 = vadd.f32 %v1122, %v1263
    %v1308 = vadd.f32 %v1123, %v1266
    %v1309 = vadd.f32 %v1124, %v1271
    %v1310 = vadd.f32 %v1125, %v1274
    %v1311 = vadd.f32 %v1126, %v1279
    %v1312 = vadd.f32 %v1127, %v1282
    %v1313 = vadd.f32 %v1128, %v1287
    %v1314 = vadd.f32 %v1129, %v1290
    %v1315 = vadd.f32 %v1130, %v1295
    %v1316 = vadd.f32 %v1131, %v1298
    %v1317 = vmax.f32 %v1301, 0.0
    %v1318 = vmax.f32 %v1302, 0.0
    %v1319 = vmax.f32 %v1303, 0.0
    %v1320 = vmax.f32 %v1304, 0.0
    %v1321 = vmax.f32 %v1305, 0.0
    %v1322 = vmax.f32 %v1306, 0.0
    %v1323 = vmax.f32 %v1307, 0.0
    %v1324 = vmax.f32 %v1308, 0.0
    %v1325 = vmax.f32 %v1309, 0.0
    %v1326 = vmax.f32 %v1310, 0.0
    %v1327 = vmax.f32 %v1311, 0.0
    %v1328 = vmax.f32 %v1312, 0.0
    %v1329 = vmax.f32 %v1313, 0.0
    %v1330 = vmax.f32 %v1314, 0.0
    %v1331 = vmax.f32 %v1315, 0.0
    %v1332 = vmax.f32 %v1316, 0.0
    %vm1349 = vcmask 1046528
    %v1350 = vrot.slane %v1317, 1
    %v1351 = vrot.slane %v1318, 1
    %v1352 = vsel %vm1349, %v1350, %v1351
    %v1353 = vrot.slane %v1319, 1
    %v1354 = vsel %vm1349, %v1351, %v1353
    %v1355 = vrot.slane %v1320, 1
    %v1356 = vsel %vm1349, %v1353, %v1355
    %v1357 = vrot.slane %v1321, 1
    %v1358 = vsel %vm1349, %v1355, %v1357
    %v1359 = vrot.slane %v1322, 1
    %v1360 = vsel %vm1349, %v1357, %v1359
    %v1361 = vrot.slane %v1323, 1
    %v1362 = vsel %vm1349, %v1359, %v1361
    %v1363 = vrot.slane %v1324, 1
    %v1364 = vsel %vm1349, %v1361, %v1363
    %v1365 = vrot.slane %v1325, 1
    %v1366 = vsel %vm1349, %v1363, %v1365
    %v1367 = vrot.slane %v1326, 1
    %v1368 = vsel %vm1349, %v1365, %v1367
    %v1369 = vrot.slane %v1327, 1
    %v1370 = vsel %vm1349, %v1367, %v1369
    %v1371 = vrot.slane %v1328, 1
    %v1372 = vsel %vm1349, %v1369, %v1371
    %v1373 = vrot.slane %v1329, 1
    %v1374 = vsel %vm1349, %v1371, %v1373
    %v1375 = vrot.slane %v1330, 1
    %v1376 = vsel %vm1349, %v1373, %v1375
    %v1377 = vrot.slane %v1331, 1
    %v1378 = vsel %vm1349, %v1375, %v1377
    %v1379 = vrot.slane %v1332, 1
    %v1380 = vsel %vm1349, %v1377, %v1379
    %v1398 = vsel %vm1349, %v1379, %v1350
    %v1399 = vmax.f32 %v1317, %v1352
    %v1400 = vmax.f32 %v1318, %v1354
    %v1401 = vmax.f32 %v1319, %v1356
    %v1402 = vmax.f32 %v1320, %v1358
    %v1403 = vmax.f32 %v1321, %v1360
    %v1404 = vmax.f32 %v1322, %v1362
    %v1405 = vmax.f32 %v1323, %v1364
    %v1406 = vmax.f32 %v1324, %v1366
    %v1407 = vmax.f32 %v1325, %v1368
    %v1408 = vmax.f32 %v1326, %v1370
    %v1409 = vmax.f32 %v1327, %v1372
    %v1410 = vmax.f32 %v1328, %v1374
    %v1411 = vmax.f32 %v1329, %v1376
    %v1412 = vmax.f32 %v1330, %v1378
    %v1413 = vmax.f32 %v1331, %v1380
    %v1414 = vmax.f32 %v1332, %v1398
    %v1415 = vpack.c.bf16 %v1400, %v1399
    %v1416 = vpack.c.bf16 %v1402, %v1401
    %v1417 = vpack.c.bf16 %v1404, %v1403
    %v1418 = vpack.c.bf16 %v1406, %v1405
    %v1419 = vpack.c.bf16 %v1408, %v1407
    %v1420 = vpack.c.bf16 %v1410, %v1409
    %v1421 = vpack.c.bf16 %v1412, %v1411
    %v1422 = vpack.c.bf16 %v1414, %v1413
    %v1423 = vld [vmem:[#allocation2 + $0x1c0] sm:$0xf]
    %v1424 = vld [vmem:[#allocation2 + $0x1c4] sm:$0xf]
    %v1425 = vld [vmem:[#allocation2 + $0x1c8] sm:$0xf]
    %v1426 = vld [vmem:[#allocation2 + $0x1cc] sm:$0xf]
    %v1427 = vld [vmem:[#allocation2 + $0x1d0] sm:$0xf]
    %v1428 = vld [vmem:[#allocation2 + $0x1d4] sm:$0xf]
    %v1429 = vld [vmem:[#allocation2 + $0x1d8] sm:$0xf]
    %v1430 = vld [vmem:[#allocation2 + $0x1dc] sm:$0xf]
    %v1431 = vld [vmem:[#allocation2 + $0x1e0] sm:$0xf]
    %v1432 = vld [vmem:[#allocation2 + $0x1e4] sm:$0xf]
    %v1433 = vld [vmem:[#allocation2 + $0x1e8] sm:$0xf]
    %v1434 = vld [vmem:[#allocation2 + $0x1ec] sm:$0xf]
    %v1435 = vld [vmem:[#allocation2 + $0x1f0] sm:$0xf]
    %v1436 = vld [vmem:[#allocation2 + $0x1f4] sm:$0xf]
    %v1437 = vld [vmem:[#allocation2 + $0x1f8] sm:$0xf]
    %v1438 = vld [vmem:[#allocation2 + $0x1fc] sm:$0xf]
    %v1455 = vunpack.c.l.b16 %v1423
    %v1456 = vunpack.c.l.b16 %v1424
    %v1457 = vunpack.c.l.b16 %v1425
    %v1458 = vunpack.c.l.b16 %v1426
    %v1459 = vunpack.c.l.b16 %v1427
    %v1460 = vunpack.c.l.b16 %v1428
    %v1461 = vunpack.c.l.b16 %v1429
    %v1462 = vunpack.c.l.b16 %v1430
    %v1463 = vunpack.c.l.b16 %v1431
    %v1464 = vunpack.c.l.b16 %v1432
    %v1465 = vunpack.c.l.b16 %v1433
    %v1466 = vunpack.c.l.b16 %v1434
    %v1467 = vunpack.c.l.b16 %v1435
    %v1468 = vunpack.c.l.b16 %v1436
    %v1469 = vunpack.c.l.b16 %v1437
    %v1470 = vunpack.c.l.b16 %v1438
    %v1471 = vpack.c.b16 %v1456, %v1455
    %v1472 = vpack.c.b16 %v1458, %v1457
    %v1473 = vpack.c.b16 %v1460, %v1459
    %v1474 = vpack.c.b16 %v1462, %v1461
    %v1475 = vpack.c.b16 %v1464, %v1463
    %v1476 = vpack.c.b16 %v1466, %v1465
    %v1477 = vpack.c.b16 %v1468, %v1467
    %v1478 = vpack.c.b16 %v1470, %v1469
    %1487 = vmatprep.subr.bf16.mxu0 0
    %1488 = vmatpush1.bf16.msra.mxu0 %v1478
    %1489 = vmatprep.subr.bf16.mxu0 0
    %1490 = vmatpush1.bf16.msra.mxu0 %v1477
    %1491 = vmatprep.subr.bf16.mxu0 0
    %1492 = vmatpush1.bf16.msra.mxu0 %v1476
    %1493 = vmatprep.subr.bf16.mxu0 0
    %1494 = vmatpush1.bf16.msra.mxu0 %v1475
    %1495 = vmatprep.subr.bf16.mxu0 0
    %1496 = vmatpush1.bf16.msra.mxu0 %v1474
    %1497 = vmatprep.subr.bf16.mxu0 0
    %1498 = vmatpush1.bf16.msra.mxu0 %v1473
    %1499 = vmatprep.subr.bf16.mxu0 0
    %1500 = vmatpush1.bf16.msra.mxu0 %v1472
    %1501 = vmatprep.subr.bf16.mxu0 0
    %1502 = vmatpush1.bf16.msra.mxu0 %v1471
    %1503 = vmatprep.subr.bf16.mxu0 0
    %1504 = vmatpush2.bf16.msra.mxu0 0
    %1505 = vmatprep.subr.bf16.mxu0 0
    %1506 = vmatpush2.bf16.msra.mxu0 0
    %1507 = vmatprep.subr.bf16.mxu0 0
    %1508 = vmatpush2.bf16.msra.mxu0 0
    %1509 = vmatprep.subr.bf16.mxu0 0
    %1510 = vmatpush2.bf16.msra.mxu0 0
    %1511 = vmatprep.subr.bf16.mxu0 0
    %1512 = vmatpush2.bf16.msra.mxu0 0
    %1513 = vmatprep.subr.bf16.mxu0 0
    %1514 = vmatpush2.bf16.msra.mxu0 0
    %1515 = vmatprep.subr.bf16.mxu0 0
    %1516 = vmatpush2.bf16.msra.mxu0 0
    %1517 = vmatprep.subr.bf16.mxu0 0
    %1518 = vmatpush2.bf16.msra.mxu0 0
    %1519 = vmatprep.mubr.bf16.mxu0 0
    %1520 = vmatmul.mubr.bf16.gmra.mxu0 %v1415
    %v1521 = vpop.f32.mrf.mxu0
    %v1522 = vadd.f32 0.0, %v1521
    %v1523 = vpop.f32.mrf.mxu0
    %v1524 = vpop.f32.mrf.mxu0
    %v1525 = vadd.f32 0.0, %v1524
    %v1526 = vpop.f32.mrf.mxu0
    %1527 = vmatprep.mubr.bf16.mxu0 0
    %1528 = vmatmul.mubr.bf16.gmra.mxu0 %v1416
    %v1529 = vpop.f32.mrf.mxu0
    %v1530 = vadd.f32 0.0, %v1529
    %v1531 = vpop.f32.mrf.mxu0
    %v1532 = vpop.f32.mrf.mxu0
    %v1533 = vadd.f32 0.0, %v1532
    %v1534 = vpop.f32.mrf.mxu0
    %1535 = vmatprep.mubr.bf16.mxu0 0
    %1536 = vmatmul.mubr.bf16.gmra.mxu0 %v1417
    %v1537 = vpop.f32.mrf.mxu0
    %v1538 = vadd.f32 0.0, %v1537
    %v1539 = vpop.f32.mrf.mxu0
    %v1540 = vpop.f32.mrf.mxu0
    %v1541 = vadd.f32 0.0, %v1540
    %v1542 = vpop.f32.mrf.mxu0
    %1543 = vmatprep.mubr.bf16.mxu0 0
    %1544 = vmatmul.mubr.bf16.gmra.mxu0 %v1418
    %v1545 = vpop.f32.mrf.mxu0
    %v1546 = vadd.f32 0.0, %v1545
    %v1547 = vpop.f32.mrf.mxu0
    %v1548 = vpop.f32.mrf.mxu0
    %v1549 = vadd.f32 0.0, %v1548
    %v1550 = vpop.f32.mrf.mxu0
    %1551 = vmatprep.mubr.bf16.mxu0 0
    %1552 = vmatmul.mubr.bf16.gmra.mxu0 %v1419
    %v1553 = vpop.f32.mrf.mxu0
    %v1554 = vadd.f32 0.0, %v1553
    %v1555 = vpop.f32.mrf.mxu0
    %v1556 = vpop.f32.mrf.mxu0
    %v1557 = vadd.f32 0.0, %v1556
    %v1558 = vpop.f32.mrf.mxu0
    %1559 = vmatprep.mubr.bf16.mxu0 0
    %1560 = vmatmul.mubr.bf16.gmra.mxu0 %v1420
    %v1561 = vpop.f32.mrf.mxu0
    %v1562 = vadd.f32 0.0, %v1561
    %v1563 = vpop.f32.mrf.mxu0
    %v1564 = vpop.f32.mrf.mxu0
    %v1565 = vadd.f32 0.0, %v1564
    %v1566 = vpop.f32.mrf.mxu0
    %1567 = vmatprep.mubr.bf16.mxu0 0
    %1568 = vmatmul.mubr.bf16.gmra.mxu0 %v1421
    %v1569 = vpop.f32.mrf.mxu0
    %v1570 = vadd.f32 0.0, %v1569
    %v1571 = vpop.f32.mrf.mxu0
    %v1572 = vpop.f32.mrf.mxu0
    %v1573 = vadd.f32 0.0, %v1572
    %v1574 = vpop.f32.mrf.mxu0
    %1575 = vmatprep.mubr.bf16.mxu0 0
    %1576 = vmatmul.mubr.bf16.gmra.mxu0 %v1422
    %v1577 = vpop.f32.mrf.mxu0
    %v1578 = vadd.f32 0.0, %v1577
    %v1579 = vpop.f32.mrf.mxu0
    %v1580 = vpop.f32.mrf.mxu0
    %v1581 = vadd.f32 0.0, %v1580
    %v1582 = vpop.f32.mrf.mxu0
    %1583 = vdwg.mxu0
    %v1584 = vld [vmem:[#allocation2 + $0x200] sm:$0xf]
    %v1585 = vld [vmem:[#allocation2 + $0x204] sm:$0xf]
    %v1586 = vld [vmem:[#allocation2 + $0x208] sm:$0xf]
    %v1587 = vld [vmem:[#allocation2 + $0x20c] sm:$0xf]
    %v1588 = vld [vmem:[#allocation2 + $0x210] sm:$0xf]
    %v1589 = vld [vmem:[#allocation2 + $0x214] sm:$0xf]
    %v1590 = vld [vmem:[#allocation2 + $0x218] sm:$0xf]
    %v1591 = vld [vmem:[#allocation2 + $0x21c] sm:$0xf]
    %v1592 = vld [vmem:[#allocation2 + $0x220] sm:$0xf]
    %v1593 = vld [vmem:[#allocation2 + $0x224] sm:$0xf]
    %v1594 = vld [vmem:[#allocation2 + $0x228] sm:$0xf]
    %v1595 = vld [vmem:[#allocation2 + $0x22c] sm:$0xf]
    %v1596 = vld [vmem:[#allocation2 + $0x230] sm:$0xf]
    %v1597 = vld [vmem:[#allocation2 + $0x234] sm:$0xf]
    %v1598 = vld [vmem:[#allocation2 + $0x238] sm:$0xf]
    %v1599 = vld [vmem:[#allocation2 + $0x23c] sm:$0xf]
    %v1616 = vunpack.c.l.b16 %v1584
    %v1617 = vunpack.c.l.b16 %v1585
    %v1618 = vunpack.c.l.b16 %v1586
    %v1619 = vunpack.c.l.b16 %v1587
    %v1620 = vunpack.c.l.b16 %v1588
    %v1621 = vunpack.c.l.b16 %v1589
    %v1622 = vunpack.c.l.b16 %v1590
    %v1623 = vunpack.c.l.b16 %v1591
    %v1624 = vunpack.c.l.b16 %v1592
    %v1625 = vunpack.c.l.b16 %v1593
    %v1626 = vunpack.c.l.b16 %v1594
    %v1627 = vunpack.c.l.b16 %v1595
    %v1628 = vunpack.c.l.b16 %v1596
    %v1629 = vunpack.c.l.b16 %v1597
    %v1630 = vunpack.c.l.b16 %v1598
    %v1631 = vunpack.c.l.b16 %v1599
    %v1632 = vpack.c.b16 %v1617, %v1616
    %v1633 = vpack.c.b16 %v1619, %v1618
    %v1634 = vpack.c.b16 %v1621, %v1620
    %v1635 = vpack.c.b16 %v1623, %v1622
    %v1636 = vpack.c.b16 %v1625, %v1624
    %v1637 = vpack.c.b16 %v1627, %v1626
    %v1638 = vpack.c.b16 %v1629, %v1628
    %v1639 = vpack.c.b16 %v1631, %v1630
    %1648 = vmatprep.subr.bf16.mxu0 0
    %1649 = vmatpush1.bf16.msra.mxu0 %v1639
    %1650 = vmatprep.subr.bf16.mxu0 0
    %1651 = vmatpush1.bf16.msra.mxu0 %v1638
    %1652 = vmatprep.subr.bf16.mxu0 0
    %1653 = vmatpush1.bf16.msra.mxu0 %v1637
    %1654 = vmatprep.subr.bf16.mxu0 0
    %1655 = vmatpush1.bf16.msra.mxu0 %v1636
    %1656 = vmatprep.subr.bf16.mxu0 0
    %1657 = vmatpush1.bf16.msra.mxu0 %v1635
    %1658 = vmatprep.subr.bf16.mxu0 0
    %1659 = vmatpush1.bf16.msra.mxu0 %v1634
    %1660 = vmatprep.subr.bf16.mxu0 0
    %1661 = vmatpush1.bf16.msra.mxu0 %v1633
    %1662 = vmatprep.subr.bf16.mxu0 0
    %1663 = vmatpush1.bf16.msra.mxu0 %v1632
    %1664 = vmatprep.subr.bf16.mxu0 0
    %1665 = vmatpush2.bf16.msra.mxu0 0
    %1666 = vmatprep.subr.bf16.mxu0 0
    %1667 = vmatpush2.bf16.msra.mxu0 0
    %1668 = vmatprep.subr.bf16.mxu0 0
    %1669 = vmatpush2.bf16.msra.mxu0 0
    %1670 = vmatprep.subr.bf16.mxu0 0
    %1671 = vmatpush2.bf16.msra.mxu0 0
    %1672 = vmatprep.subr.bf16.mxu0 0
    %1673 = vmatpush2.bf16.msra.mxu0 0
    %1674 = vmatprep.subr.bf16.mxu0 0
    %1675 = vmatpush2.bf16.msra.mxu0 0
    %1676 = vmatprep.subr.bf16.mxu0 0
    %1677 = vmatpush2.bf16.msra.mxu0 0
    %1678 = vmatprep.subr.bf16.mxu0 0
    %1679 = vmatpush2.bf16.msra.mxu0 0
    %1680 = vmatprep.mubr.bf16.mxu0 0
    %1681 = vmatmul.mubr.bf16.gmra.mxu0 %v1415
    %v1682 = vpop.f32.mrf.mxu0
    %v1683 = vadd.f32 0.0, %v1682
    %v1684 = vpop.f32.mrf.mxu0
    %v1685 = vpop.f32.mrf.mxu0
    %v1686 = vadd.f32 0.0, %v1685
    %v1687 = vpop.f32.mrf.mxu0
    %1688 = vmatprep.mubr.bf16.mxu0 0
    %1689 = vmatmul.mubr.bf16.gmra.mxu0 %v1416
    %v1690 = vpop.f32.mrf.mxu0
    %v1691 = vadd.f32 0.0, %v1690
    %v1692 = vpop.f32.mrf.mxu0
    %v1693 = vpop.f32.mrf.mxu0
    %v1694 = vadd.f32 0.0, %v1693
    %v1695 = vpop.f32.mrf.mxu0
    %1696 = vmatprep.mubr.bf16.mxu0 0
    %1697 = vmatmul.mubr.bf16.gmra.mxu0 %v1417
    %v1698 = vpop.f32.mrf.mxu0
    %v1699 = vadd.f32 0.0, %v1698
    %v1700 = vpop.f32.mrf.mxu0
    %v1701 = vpop.f32.mrf.mxu0
    %v1702 = vadd.f32 0.0, %v1701
    %v1703 = vpop.f32.mrf.mxu0
    %1704 = vmatprep.mubr.bf16.mxu0 0
    %1705 = vmatmul.mubr.bf16.gmra.mxu0 %v1418
    %v1706 = vpop.f32.mrf.mxu0
    %v1707 = vadd.f32 0.0, %v1706
    %v1708 = vpop.f32.mrf.mxu0
    %v1709 = vpop.f32.mrf.mxu0
    %v1710 = vadd.f32 0.0, %v1709
    %v1711 = vpop.f32.mrf.mxu0
    %1712 = vmatprep.mubr.bf16.mxu0 0
    %1713 = vmatmul.mubr.bf16.gmra.mxu0 %v1419
    %v1714 = vpop.f32.mrf.mxu0
    %v1715 = vadd.f32 0.0, %v1714
    %v1716 = vpop.f32.mrf.mxu0
    %v1717 = vpop.f32.mrf.mxu0
    %v1718 = vadd.f32 0.0, %v1717
    %v1719 = vpop.f32.mrf.mxu0
    %1720 = vmatprep.mubr.bf16.mxu0 0
    %1721 = vmatmul.mubr.bf16.gmra.mxu0 %v1420
    %v1722 = vpop.f32.mrf.mxu0
    %v1723 = vadd.f32 0.0, %v1722
    %v1724 = vpop.f32.mrf.mxu0
    %v1725 = vpop.f32.mrf.mxu0
    %v1726 = vadd.f32 0.0, %v1725
    %v1727 = vpop.f32.mrf.mxu0
    %1728 = vmatprep.mubr.bf16.mxu0 0
    %1729 = vmatmul.mubr.bf16.gmra.mxu0 %v1421
    %v1730 = vpop.f32.mrf.mxu0
    %v1731 = vadd.f32 0.0, %v1730
    %v1732 = vpop.f32.mrf.mxu0
    %v1733 = vpop.f32.mrf.mxu0
    %v1734 = vadd.f32 0.0, %v1733
    %v1735 = vpop.f32.mrf.mxu0
    %1736 = vmatprep.mubr.bf16.mxu0 0
    %1737 = vmatmul.mubr.bf16.gmra.mxu0 %v1422
    %v1738 = vpop.f32.mrf.mxu0
    %v1739 = vadd.f32 0.0, %v1738
    %v1740 = vpop.f32.mrf.mxu0
    %v1741 = vpop.f32.mrf.mxu0
    %v1742 = vadd.f32 0.0, %v1741
    %v1743 = vpop.f32.mrf.mxu0
    %1744 = vdwg.mxu0
    %v1745 = vmax.f32 %v1522, %v1683
    %v1746 = vmax.f32 %v1525, %v1686
    %v1747 = vmax.f32 %v1530, %v1691
    %v1748 = vmax.f32 %v1533, %v1694
    %v1749 = vmax.f32 %v1538, %v1699
    %v1750 = vmax.f32 %v1541, %v1702
    %v1751 = vmax.f32 %v1546, %v1707
    %v1752 = vmax.f32 %v1549, %v1710
    %v1753 = vmax.f32 %v1554, %v1715
    %v1754 = vmax.f32 %v1557, %v1718
    %v1755 = vmax.f32 %v1562, %v1723
    %v1756 = vmax.f32 %v1565, %v1726
    %v1757 = vmax.f32 %v1570, %v1731
    %v1758 = vmax.f32 %v1573, %v1734
    %v1759 = vmax.f32 %v1578, %v1739
    %v1760 = vmax.f32 %v1581, %v1742
    %v1761 = vld [vmem:[#allocation2 + $0x240] sm:$0xf]
    %v1762 = vld [vmem:[#allocation2 + $0x244] sm:$0xf]
    %v1763 = vld [vmem:[#allocation2 + $0x248] sm:$0xf]
    %v1764 = vld [vmem:[#allocation2 + $0x24c] sm:$0xf]
    %v1765 = vld [vmem:[#allocation2 + $0x250] sm:$0xf]
    %v1766 = vld [vmem:[#allocation2 + $0x254] sm:$0xf]
    %v1767 = vld [vmem:[#allocation2 + $0x258] sm:$0xf]
    %v1768 = vld [vmem:[#allocation2 + $0x25c] sm:$0xf]
    %v1769 = vld [vmem:[#allocation2 + $0x260] sm:$0xf]
    %v1770 = vld [vmem:[#allocation2 + $0x264] sm:$0xf]
    %v1771 = vld [vmem:[#allocation2 + $0x268] sm:$0xf]
    %v1772 = vld [vmem:[#allocation2 + $0x26c] sm:$0xf]
    %v1773 = vld [vmem:[#allocation2 + $0x270] sm:$0xf]
    %v1774 = vld [vmem:[#allocation2 + $0x274] sm:$0xf]
    %v1775 = vld [vmem:[#allocation2 + $0x278] sm:$0xf]
    %v1776 = vld [vmem:[#allocation2 + $0x27c] sm:$0xf]
    %v1777 = vld [vmem:[#allocation2 + $0x280] sm:$0xf]
    %v1778 = vld [vmem:[#allocation2 + $0x284] sm:$0xf]
    %v1779 = vld [vmem:[#allocation2 + $0x288] sm:$0xf]
    %v1780 = vld [vmem:[#allocation2 + $0x28c] sm:$0xf]
    %v1781 = vld [vmem:[#allocation2 + $0x290] sm:$0xf]
    %v1782 = vld [vmem:[#allocation2 + $0x294] sm:$0xf]
    %v1783 = vld [vmem:[#allocation2 + $0x298] sm:$0xf]
    %v1784 = vld [vmem:[#allocation2 + $0x29c] sm:$0xf]
    %v1785 = vld [vmem:[#allocation2 + $0x2a0] sm:$0xf]
    %v1786 = vld [vmem:[#allocation2 + $0x2a4] sm:$0xf]
    %v1787 = vld [vmem:[#allocation2 + $0x2a8] sm:$0xf]
    %v1788 = vld [vmem:[#allocation2 + $0x2ac] sm:$0xf]
    %v1789 = vld [vmem:[#allocation2 + $0x2b0] sm:$0xf]
    %v1790 = vld [vmem:[#allocation2 + $0x2b4] sm:$0xf]
    %v1791 = vld [vmem:[#allocation2 + $0x2b8] sm:$0xf]
    %v1792 = vld [vmem:[#allocation2 + $0x2bc] sm:$0xf]
    %v1793 = vld [vmem:[#allocation2 + $0x2c0] sm:$0xf]
    %v1794 = vld [vmem:[#allocation2 + $0x2c4] sm:$0xf]
    %v1795 = vld [vmem:[#allocation2 + $0x2c8] sm:$0xf]
    %v1796 = vld [vmem:[#allocation2 + $0x2cc] sm:$0xf]
    %v1797 = vld [vmem:[#allocation2 + $0x2d0] sm:$0xf]
    %v1798 = vld [vmem:[#allocation2 + $0x2d4] sm:$0xf]
    %v1799 = vld [vmem:[#allocation2 + $0x2d8] sm:$0xf]
    %v1800 = vld [vmem:[#allocation2 + $0x2dc] sm:$0xf]
    %v1801 = vld [vmem:[#allocation2 + $0x2e0] sm:$0xf]
    %v1802 = vld [vmem:[#allocation2 + $0x2e4] sm:$0xf]
    %v1803 = vld [vmem:[#allocation2 + $0x2e8] sm:$0xf]
    %v1804 = vld [vmem:[#allocation2 + $0x2ec] sm:$0xf]
    %v1805 = vld [vmem:[#allocation2 + $0x2f0] sm:$0xf]
    %v1806 = vld [vmem:[#allocation2 + $0x2f4] sm:$0xf]
    %v1807 = vld [vmem:[#allocation2 + $0x2f8] sm:$0xf]
    %v1808 = vld [vmem:[#allocation2 + $0x2fc] sm:$0xf]
    %v1809 = vpack.c.bf16 %v1746, %v1745
    %v1810 = vpack.c.bf16 %v1748, %v1747
    %v1811 = vpack.c.bf16 %v1750, %v1749
    %v1812 = vpack.c.bf16 %v1752, %v1751
    %v1813 = vpack.c.bf16 %v1754, %v1753
    %v1814 = vpack.c.bf16 %v1756, %v1755
    %v1815 = vpack.c.bf16 %v1758, %v1757
    %v1816 = vpack.c.bf16 %v1760, %v1759
    %v1865 = vunpack.c.l.b16 %v1761
    %v1866 = vunpack.c.l.b16 %v1762
    %v1867 = vunpack.c.l.b16 %v1763
    %v1868 = vunpack.c.l.b16 %v1764
    %v1869 = vunpack.c.l.b16 %v1765
    %v1870 = vunpack.c.l.b16 %v1766
    %v1871 = vunpack.c.l.b16 %v1767
    %v1872 = vunpack.c.l.b16 %v1768
    %v1873 = vunpack.c.l.b16 %v1769
    %v1874 = vunpack.c.l.b16 %v1770
    %v1875 = vunpack.c.l.b16 %v1771
    %v1876 = vunpack.c.l.b16 %v1772
    %v1877 = vunpack.c.l.b16 %v1773
    %v1878 = vunpack.c.l.b16 %v1774
    %v1879 = vunpack.c.l.b16 %v1775
    %v1880 = vunpack.c.l.b16 %v1776
    %v1881 = vunpack.c.l.b16 %v1777
    %v1882 = vunpack.c.l.b16 %v1778
    %v1883 = vunpack.c.l.b16 %v1779
    %v1884 = vunpack.c.l.b16 %v1780
    %v1885 = vunpack.c.l.b16 %v1781
    %v1886 = vunpack.c.l.b16 %v1782
    %v1887 = vunpack.c.l.b16 %v1783
    %v1888 = vunpack.c.l.b16 %v1784
    %v1889 = vunpack.c.l.b16 %v1785
    %v1890 = vunpack.c.l.b16 %v1786
    %v1891 = vunpack.c.l.b16 %v1787
    %v1892 = vunpack.c.l.b16 %v1788
    %v1893 = vunpack.c.l.b16 %v1789
    %v1894 = vunpack.c.l.b16 %v1790
    %v1895 = vunpack.c.l.b16 %v1791
    %v1896 = vunpack.c.l.b16 %v1792
    %v1897 = vunpack.c.l.b16 %v1793
    %v1898 = vunpack.c.l.b16 %v1794
    %v1899 = vunpack.c.l.b16 %v1795
    %v1900 = vunpack.c.l.b16 %v1796
    %v1901 = vunpack.c.l.b16 %v1797
    %v1902 = vunpack.c.l.b16 %v1798
    %v1903 = vunpack.c.l.b16 %v1799
    %v1904 = vunpack.c.l.b16 %v1800
    %v1905 = vunpack.c.l.b16 %v1801
    %v1906 = vunpack.c.l.b16 %v1802
    %v1907 = vunpack.c.l.b16 %v1803
    %v1908 = vunpack.c.l.b16 %v1804
    %v1909 = vunpack.c.l.b16 %v1805
    %v1910 = vunpack.c.l.b16 %v1806
    %v1911 = vunpack.c.l.b16 %v1807
    %v1912 = vunpack.c.l.b16 %v1808
    %v1913 = vpack.c.b16 %v1866, %v1865
    %v1914 = vpack.c.b16 %v1868, %v1867
    %v1915 = vpack.c.b16 %v1870, %v1869
    %v1916 = vpack.c.b16 %v1872, %v1871
    %v1917 = vpack.c.b16 %v1874, %v1873
    %v1918 = vpack.c.b16 %v1876, %v1875
    %v1919 = vpack.c.b16 %v1878, %v1877
    %v1920 = vpack.c.b16 %v1880, %v1879
    %v1921 = vpack.c.b16 %v1882, %v1881
    %v1922 = vpack.c.b16 %v1884, %v1883
    %v1923 = vpack.c.b16 %v1886, %v1885
    %v1924 = vpack.c.b16 %v1888, %v1887
    %v1925 = vpack.c.b16 %v1890, %v1889
    %v1926 = vpack.c.b16 %v1892, %v1891
    %v1927 = vpack.c.b16 %v1894, %v1893
    %v1928 = vpack.c.b16 %v1896, %v1895
    %v1929 = vpack.c.b16 %v1898, %v1897
    %v1930 = vpack.c.b16 %v1900, %v1899
    %v1931 = vpack.c.b16 %v1902, %v1901
    %v1932 = vpack.c.b16 %v1904, %v1903
    %v1933 = vpack.c.b16 %v1906, %v1905
    %v1934 = vpack.c.b16 %v1908, %v1907
    %v1935 = vpack.c.b16 %v1910, %v1909
    %v1936 = vpack.c.b16 %v1912, %v1911
    %1961 = vmatprep.subr.bf16.mxu0 0
    %1962 = vmatpush1.bf16.msra.mxu0 %v1816
    %1963 = vmatprep.subr.bf16.mxu0 0
    %1964 = vmatpush1.bf16.msra.mxu0 %v1815
    %1965 = vmatprep.subr.bf16.mxu0 0
    %1966 = vmatpush1.bf16.msra.mxu0 %v1814
    %1967 = vmatprep.subr.bf16.mxu0 0
    %1968 = vmatpush1.bf16.msra.mxu0 %v1813
    %1969 = vmatprep.subr.bf16.mxu0 0
    %1970 = vmatpush1.bf16.msra.mxu0 %v1812
    %1971 = vmatprep.subr.bf16.mxu0 0
    %1972 = vmatpush1.bf16.msra.mxu0 %v1811
    %1973 = vmatprep.subr.bf16.mxu0 0
    %1974 = vmatpush1.bf16.msra.mxu0 %v1810
    %1975 = vmatprep.subr.bf16.mxu0 0
    %1976 = vmatpush1.bf16.msra.mxu0 %v1809
    %1977 = vmatprep.subr.bf16.mxu0 0
    %1978 = vmatpush2.bf16.msra.mxu0 0
    %1979 = vmatprep.subr.bf16.mxu0 0
    %1980 = vmatpush2.bf16.msra.mxu0 0
    %1981 = vmatprep.subr.bf16.mxu0 0
    %1982 = vmatpush2.bf16.msra.mxu0 0
    %1983 = vmatprep.subr.bf16.mxu0 0
    %1984 = vmatpush2.bf16.msra.mxu0 0
    %1985 = vmatprep.subr.bf16.mxu0 0
    %1986 = vmatpush2.bf16.msra.mxu0 0
    %1987 = vmatprep.subr.bf16.mxu0 0
    %1988 = vmatpush2.bf16.msra.mxu0 0
    %1989 = vmatprep.subr.bf16.mxu0 0
    %1990 = vmatpush2.bf16.msra.mxu0 0
    %1991 = vmatprep.subr.bf16.mxu0 0
    %1992 = vmatpush2.bf16.msra.mxu0 0
    %1993 = vmatprep.mubr.bf16.mxu0 0
    %1994 = vmatmul.mubr.bf16.gmra.mxu0 %v1913
    %v1995 = vpop.f32.mrf.mxu0
    %v1996 = vadd.f32 0.0, %v1995
    %v1997 = vpop.f32.mrf.mxu0
    %v1998 = vpop.f32.mrf.mxu0
    %v1999 = vadd.f32 0.0, %v1998
    %v2000 = vpop.f32.mrf.mxu0
    %2001 = vmatprep.mubr.bf16.mxu0 0
    %2002 = vmatmul.mubr.bf16.gmra.mxu0 %v1914
    %v2003 = vpop.f32.mrf.mxu0
    %v2004 = vadd.f32 0.0, %v2003
    %v2005 = vpop.f32.mrf.mxu0
    %v2006 = vpop.f32.mrf.mxu0
    %v2007 = vadd.f32 0.0, %v2006
    %v2008 = vpop.f32.mrf.mxu0
    %2009 = vmatprep.mubr.bf16.mxu0 0
    %2010 = vmatmul.mubr.bf16.gmra.mxu0 %v1915
    %v2011 = vpop.f32.mrf.mxu0
    %v2012 = vadd.f32 0.0, %v2011
    %v2013 = vpop.f32.mrf.mxu0
    %v2014 = vpop.f32.mrf.mxu0
    %v2015 = vadd.f32 0.0, %v2014
    %v2016 = vpop.f32.mrf.mxu0
    %2017 = vmatprep.mubr.bf16.mxu0 0
    %2018 = vmatmul.mubr.bf16.gmra.mxu0 %v1916
    %v2019 = vpop.f32.mrf.mxu0
    %v2020 = vadd.f32 0.0, %v2019
    %v2021 = vpop.f32.mrf.mxu0
    %v2022 = vpop.f32.mrf.mxu0
    %v2023 = vadd.f32 0.0, %v2022
    %v2024 = vpop.f32.mrf.mxu0
    %2025 = vmatprep.mubr.bf16.mxu0 0
    %2026 = vmatmul.mubr.bf16.gmra.mxu0 %v1917
    %v2027 = vpop.f32.mrf.mxu0
    %v2028 = vadd.f32 0.0, %v2027
    %v2029 = vpop.f32.mrf.mxu0
    %v2030 = vpop.f32.mrf.mxu0
    %v2031 = vadd.f32 0.0, %v2030
    %v2032 = vpop.f32.mrf.mxu0
    %2033 = vmatprep.mubr.bf16.mxu0 0
    %2034 = vmatmul.mubr.bf16.gmra.mxu0 %v1918
    %v2035 = vpop.f32.mrf.mxu0
    %v2036 = vadd.f32 0.0, %v2035
    %v2037 = vpop.f32.mrf.mxu0
    %v2038 = vpop.f32.mrf.mxu0
    %v2039 = vadd.f32 0.0, %v2038
    %v2040 = vpop.f32.mrf.mxu0
    %2041 = vmatprep.mubr.bf16.mxu0 0
    %2042 = vmatmul.mubr.bf16.gmra.mxu0 %v1919
    %v2043 = vpop.f32.mrf.mxu0
    %v2044 = vadd.f32 0.0, %v2043
    %v2045 = vpop.f32.mrf.mxu0
    %v2046 = vpop.f32.mrf.mxu0
    %v2047 = vadd.f32 0.0, %v2046
    %v2048 = vpop.f32.mrf.mxu0
    %2049 = vmatprep.mubr.bf16.mxu0 0
    %2050 = vmatmul.mubr.bf16.gmra.mxu0 %v1920
    %v2051 = vpop.f32.mrf.mxu0
    %v2052 = vadd.f32 0.0, %v2051
    %v2053 = vpop.f32.mrf.mxu0
    %v2054 = vpop.f32.mrf.mxu0
    %v2055 = vadd.f32 0.0, %v2054
    %v2056 = vpop.f32.mrf.mxu0
    %2057 = vmatprep.mubr.bf16.mxu0 0
    %2058 = vmatmul.mubr.bf16.gmra.mxu0 %v1921
    %v2059 = vpop.f32.mrf.mxu0
    %v2060 = vadd.f32 0.0, %v2059
    %v2061 = vpop.f32.mrf.mxu0
    %v2062 = vpop.f32.mrf.mxu0
    %v2063 = vadd.f32 0.0, %v2062
    %v2064 = vpop.f32.mrf.mxu0
    %2065 = vmatprep.mubr.bf16.mxu0 0
    %2066 = vmatmul.mubr.bf16.gmra.mxu0 %v1922
    %v2067 = vpop.f32.mrf.mxu0
    %v2068 = vadd.f32 0.0, %v2067
    %v2069 = vpop.f32.mrf.mxu0
    %v2070 = vpop.f32.mrf.mxu0
    %v2071 = vadd.f32 0.0, %v2070
    %v2072 = vpop.f32.mrf.mxu0
    %2073 = vmatprep.mubr.bf16.mxu0 0
    %2074 = vmatmul.mubr.bf16.gmra.mxu0 %v1923
    %v2075 = vpop.f32.mrf.mxu0
    %v2076 = vadd.f32 0.0, %v2075
    %v2077 = vpop.f32.mrf.mxu0
    %v2078 = vpop.f32.mrf.mxu0
    %v2079 = vadd.f32 0.0, %v2078
    %v2080 = vpop.f32.mrf.mxu0
    %2081 = vmatprep.mubr.bf16.mxu0 0
    %2082 = vmatmul.mubr.bf16.gmra.mxu0 %v1924
    %v2083 = vpop.f32.mrf.mxu0
    %v2084 = vadd.f32 0.0, %v2083
    %v2085 = vpop.f32.mrf.mxu0
    %v2086 = vpop.f32.mrf.mxu0
    %v2087 = vadd.f32 0.0, %v2086
    %v2088 = vpop.f32.mrf.mxu0
    %2089 = vmatprep.mubr.bf16.mxu0 0
    %2090 = vmatmul.mubr.bf16.gmra.mxu0 %v1925
    %v2091 = vpop.f32.mrf.mxu0
    %v2092 = vadd.f32 0.0, %v2091
    %v2093 = vpop.f32.mrf.mxu0
    %v2094 = vpop.f32.mrf.mxu0
    %v2095 = vadd.f32 0.0, %v2094
    %v2096 = vpop.f32.mrf.mxu0
    %2097 = vmatprep.mubr.bf16.mxu0 0
    %2098 = vmatmul.mubr.bf16.gmra.mxu0 %v1926
    %v2099 = vpop.f32.mrf.mxu0
    %v2100 = vadd.f32 0.0, %v2099
    %v2101 = vpop.f32.mrf.mxu0
    %v2102 = vpop.f32.mrf.mxu0
    %v2103 = vadd.f32 0.0, %v2102
    %v2104 = vpop.f32.mrf.mxu0
    %2105 = vmatprep.mubr.bf16.mxu0 0
    %2106 = vmatmul.mubr.bf16.gmra.mxu0 %v1927
    %v2107 = vpop.f32.mrf.mxu0
    %v2108 = vadd.f32 0.0, %v2107
    %v2109 = vpop.f32.mrf.mxu0
    %v2110 = vpop.f32.mrf.mxu0
    %v2111 = vadd.f32 0.0, %v2110
    %v2112 = vpop.f32.mrf.mxu0
    %2113 = vmatprep.mubr.bf16.mxu0 0
    %2114 = vmatmul.mubr.bf16.gmra.mxu0 %v1928
    %v2115 = vpop.f32.mrf.mxu0
    %v2116 = vadd.f32 0.0, %v2115
    %v2117 = vpop.f32.mrf.mxu0
    %v2118 = vpop.f32.mrf.mxu0
    %v2119 = vadd.f32 0.0, %v2118
    %v2120 = vpop.f32.mrf.mxu0
    %2121 = vmatprep.mubr.bf16.mxu0 0
    %2122 = vmatmul.mubr.bf16.gmra.mxu0 %v1929
    %v2123 = vpop.f32.mrf.mxu0
    %v2124 = vadd.f32 0.0, %v2123
    %v2125 = vpop.f32.mrf.mxu0
    %v2126 = vpop.f32.mrf.mxu0
    %v2127 = vadd.f32 0.0, %v2126
    %v2128 = vpop.f32.mrf.mxu0
    %2129 = vmatprep.mubr.bf16.mxu0 0
    %2130 = vmatmul.mubr.bf16.gmra.mxu0 %v1930
    %v2131 = vpop.f32.mrf.mxu0
    %v2132 = vadd.f32 0.0, %v2131
    %v2133 = vpop.f32.mrf.mxu0
    %v2134 = vpop.f32.mrf.mxu0
    %v2135 = vadd.f32 0.0, %v2134
    %v2136 = vpop.f32.mrf.mxu0
    %2137 = vmatprep.mubr.bf16.mxu0 0
    %2138 = vmatmul.mubr.bf16.gmra.mxu0 %v1931
    %v2139 = vpop.f32.mrf.mxu0
    %v2140 = vadd.f32 0.0, %v2139
    %v2141 = vpop.f32.mrf.mxu0
    %v2142 = vpop.f32.mrf.mxu0
    %v2143 = vadd.f32 0.0, %v2142
    %v2144 = vpop.f32.mrf.mxu0
    %2145 = vmatprep.mubr.bf16.mxu0 0
    %2146 = vmatmul.mubr.bf16.gmra.mxu0 %v1932
    %v2147 = vpop.f32.mrf.mxu0
    %v2148 = vadd.f32 0.0, %v2147
    %v2149 = vpop.f32.mrf.mxu0
    %v2150 = vpop.f32.mrf.mxu0
    %v2151 = vadd.f32 0.0, %v2150
    %v2152 = vpop.f32.mrf.mxu0
    %2153 = vmatprep.mubr.bf16.mxu0 0
    %2154 = vmatmul.mubr.bf16.gmra.mxu0 %v1933
    %v2155 = vpop.f32.mrf.mxu0
    %v2156 = vadd.f32 0.0, %v2155
    %v2157 = vpop.f32.mrf.mxu0
    %v2158 = vpop.f32.mrf.mxu0
    %v2159 = vadd.f32 0.0, %v2158
    %v2160 = vpop.f32.mrf.mxu0
    %2161 = vmatprep.mubr.bf16.mxu0 0
    %2162 = vmatmul.mubr.bf16.gmra.mxu0 %v1934
    %v2163 = vpop.f32.mrf.mxu0
    %v2164 = vadd.f32 0.0, %v2163
    %v2165 = vpop.f32.mrf.mxu0
    %v2166 = vpop.f32.mrf.mxu0
    %v2167 = vadd.f32 0.0, %v2166
    %v2168 = vpop.f32.mrf.mxu0
    %2169 = vmatprep.mubr.bf16.mxu0 0
    %2170 = vmatmul.mubr.bf16.gmra.mxu0 %v1935
    %v2171 = vpop.f32.mrf.mxu0
    %v2172 = vadd.f32 0.0, %v2171
    %v2173 = vpop.f32.mrf.mxu0
    %v2174 = vpop.f32.mrf.mxu0
    %v2175 = vadd.f32 0.0, %v2174
    %v2176 = vpop.f32.mrf.mxu0
    %2177 = vmatprep.mubr.bf16.mxu0 0
    %2178 = vmatmul.mubr.bf16.gmra.mxu0 %v1936
    %v2179 = vpop.f32.mrf.mxu0
    %v2180 = vadd.f32 0.0, %v2179
    %v2181 = vpop.f32.mrf.mxu0
    %v2182 = vpop.f32.mrf.mxu0
    %v2183 = vadd.f32 0.0, %v2182
    %v2184 = vpop.f32.mrf.mxu0
    %2185 = vdwg.mxu0
    %v2186 = vpack.c.bf16 %v1999, %v1996
    %v2187 = vpack.c.bf16 %v2007, %v2004
    %v2188 = vpack.c.bf16 %v2015, %v2012
    %v2189 = vpack.c.bf16 %v2023, %v2020
    %v2190 = vpack.c.bf16 %v2031, %v2028
    %v2191 = vpack.c.bf16 %v2039, %v2036
    %v2192 = vpack.c.bf16 %v2047, %v2044
    %v2193 = vpack.c.bf16 %v2055, %v2052
    %v2194 = vld [vmem:[#allocation2 + $0x300] sm:$0xf]
    %v2195 = vld [vmem:[#allocation2 + $0x304] sm:$0xf]
    %v2196 = vld [vmem:[#allocation2 + $0x308] sm:$0xf]
    %v2197 = vld [vmem:[#allocation2 + $0x30c] sm:$0xf]
    %v2198 = vld [vmem:[#allocation2 + $0x310] sm:$0xf]
    %v2199 = vld [vmem:[#allocation2 + $0x314] sm:$0xf]
    %v2200 = vld [vmem:[#allocation2 + $0x318] sm:$0xf]
    %v2201 = vld [vmem:[#allocation2 + $0x31c] sm:$0xf]
    %v2202 = vld [vmem:[#allocation2 + $0x320] sm:$0xf]
    %v2203 = vld [vmem:[#allocation2 + $0x324] sm:$0xf]
    %v2204 = vld [vmem:[#allocation2 + $0x328] sm:$0xf]
    %v2205 = vld [vmem:[#allocation2 + $0x32c] sm:$0xf]
    %v2206 = vld [vmem:[#allocation2 + $0x330] sm:$0xf]
    %v2207 = vld [vmem:[#allocation2 + $0x334] sm:$0xf]
    %v2208 = vld [vmem:[#allocation2 + $0x338] sm:$0xf]
    %v2209 = vld [vmem:[#allocation2 + $0x33c] sm:$0xf]
    %v2226 = vunpack.c.l.b16 %v2194
    %v2227 = vunpack.c.l.b16 %v2195
    %v2228 = vunpack.c.l.b16 %v2196
    %v2229 = vunpack.c.l.b16 %v2197
    %v2230 = vunpack.c.l.b16 %v2198
    %v2231 = vunpack.c.l.b16 %v2199
    %v2232 = vunpack.c.l.b16 %v2200
    %v2233 = vunpack.c.l.b16 %v2201
    %v2234 = vunpack.c.l.b16 %v2202
    %v2235 = vunpack.c.l.b16 %v2203
    %v2236 = vunpack.c.l.b16 %v2204
    %v2237 = vunpack.c.l.b16 %v2205
    %v2238 = vunpack.c.l.b16 %v2206
    %v2239 = vunpack.c.l.b16 %v2207
    %v2240 = vunpack.c.l.b16 %v2208
    %v2241 = vunpack.c.l.b16 %v2209
    %v2242 = vpack.c.b16 %v2227, %v2226
    %v2243 = vpack.c.b16 %v2229, %v2228
    %v2244 = vpack.c.b16 %v2231, %v2230
    %v2245 = vpack.c.b16 %v2233, %v2232
    %v2246 = vpack.c.b16 %v2235, %v2234
    %v2247 = vpack.c.b16 %v2237, %v2236
    %v2248 = vpack.c.b16 %v2239, %v2238
    %v2249 = vpack.c.b16 %v2241, %v2240
    %2258 = vmatprep.subr.bf16.mxu0 0
    %2259 = vmatpush1.bf16.msra.mxu0 %v2249
    %2260 = vmatprep.subr.bf16.mxu0 0
    %2261 = vmatpush1.bf16.msra.mxu0 %v2248
    %2262 = vmatprep.subr.bf16.mxu0 0
    %2263 = vmatpush1.bf16.msra.mxu0 %v2247
    %2264 = vmatprep.subr.bf16.mxu0 0
    %2265 = vmatpush1.bf16.msra.mxu0 %v2246
    %2266 = vmatprep.subr.bf16.mxu0 0
    %2267 = vmatpush1.bf16.msra.mxu0 %v2245
    %2268 = vmatprep.subr.bf16.mxu0 0
    %2269 = vmatpush1.bf16.msra.mxu0 %v2244
    %2270 = vmatprep.subr.bf16.mxu0 0
    %2271 = vmatpush1.bf16.msra.mxu0 %v2243
    %2272 = vmatprep.subr.bf16.mxu0 0
    %2273 = vmatpush1.bf16.msra.mxu0 %v2242
    %2274 = vmatprep.subr.bf16.mxu0 0
    %2275 = vmatpush2.bf16.msra.mxu0 0
    %2276 = vmatprep.subr.bf16.mxu0 0
    %2277 = vmatpush2.bf16.msra.mxu0 0
    %2278 = vmatprep.subr.bf16.mxu0 0
    %2279 = vmatpush2.bf16.msra.mxu0 0
    %2280 = vmatprep.subr.bf16.mxu0 0
    %2281 = vmatpush2.bf16.msra.mxu0 0
    %2282 = vmatprep.subr.bf16.mxu0 0
    %2283 = vmatpush2.bf16.msra.mxu0 0
    %2284 = vmatprep.subr.bf16.mxu0 0
    %2285 = vmatpush2.bf16.msra.mxu0 0
    %2286 = vmatprep.subr.bf16.mxu0 0
    %2287 = vmatpush2.bf16.msra.mxu0 0
    %2288 = vmatprep.subr.bf16.mxu0 0
    %2289 = vmatpush2.bf16.msra.mxu0 0
    %2290 = vmatprep.mubr.bf16.mxu0 0
    %2291 = vmatmul.mubr.bf16.gmra.mxu0 %v2186
    %v2292 = vpop.f32.mrf.mxu0
    %v2293 = vadd.f32 0.0, %v2292
    %v2294 = vpop.f32.mrf.mxu0
    %v2295 = vpop.f32.mrf.mxu0
    %v2296 = vadd.f32 0.0, %v2295
    %v2297 = vpop.f32.mrf.mxu0
    %2298 = vmatprep.mubr.bf16.mxu0 0
    %2299 = vmatmul.mubr.bf16.gmra.mxu0 %v2187
    %v2300 = vpop.f32.mrf.mxu0
    %v2301 = vadd.f32 0.0, %v2300
    %v2302 = vpop.f32.mrf.mxu0
    %v2303 = vpop.f32.mrf.mxu0
    %v2304 = vadd.f32 0.0, %v2303
    %v2305 = vpop.f32.mrf.mxu0
    %2306 = vmatprep.mubr.bf16.mxu0 0
    %2307 = vmatmul.mubr.bf16.gmra.mxu0 %v2188
    %v2308 = vpop.f32.mrf.mxu0
    %v2309 = vadd.f32 0.0, %v2308
    %v2310 = vpop.f32.mrf.mxu0
    %v2311 = vpop.f32.mrf.mxu0
    %v2312 = vadd.f32 0.0, %v2311
    %v2313 = vpop.f32.mrf.mxu0
    %2314 = vmatprep.mubr.bf16.mxu0 0
    %2315 = vmatmul.mubr.bf16.gmra.mxu0 %v2189
    %v2316 = vpop.f32.mrf.mxu0
    %v2317 = vadd.f32 0.0, %v2316
    %v2318 = vpop.f32.mrf.mxu0
    %v2319 = vpop.f32.mrf.mxu0
    %v2320 = vadd.f32 0.0, %v2319
    %v2321 = vpop.f32.mrf.mxu0
    %2322 = vmatprep.mubr.bf16.mxu0 0
    %2323 = vmatmul.mubr.bf16.gmra.mxu0 %v2190
    %v2324 = vpop.f32.mrf.mxu0
    %v2325 = vadd.f32 0.0, %v2324
    %v2326 = vpop.f32.mrf.mxu0
    %v2327 = vpop.f32.mrf.mxu0
    %v2328 = vadd.f32 0.0, %v2327
    %v2329 = vpop.f32.mrf.mxu0
    %2330 = vmatprep.mubr.bf16.mxu0 0
    %2331 = vmatmul.mubr.bf16.gmra.mxu0 %v2191
    %v2332 = vpop.f32.mrf.mxu0
    %v2333 = vadd.f32 0.0, %v2332
    %v2334 = vpop.f32.mrf.mxu0
    %v2335 = vpop.f32.mrf.mxu0
    %v2336 = vadd.f32 0.0, %v2335
    %v2337 = vpop.f32.mrf.mxu0
    %2338 = vmatprep.mubr.bf16.mxu0 0
    %2339 = vmatmul.mubr.bf16.gmra.mxu0 %v2192
    %v2340 = vpop.f32.mrf.mxu0
    %v2341 = vadd.f32 0.0, %v2340
    %v2342 = vpop.f32.mrf.mxu0
    %v2343 = vpop.f32.mrf.mxu0
    %v2344 = vadd.f32 0.0, %v2343
    %v2345 = vpop.f32.mrf.mxu0
    %2346 = vmatprep.mubr.bf16.mxu0 0
    %2347 = vmatmul.mubr.bf16.gmra.mxu0 %v2193
    %v2348 = vpop.f32.mrf.mxu0
    %v2349 = vadd.f32 0.0, %v2348
    %v2350 = vpop.f32.mrf.mxu0
    %v2351 = vpop.f32.mrf.mxu0
    %v2352 = vadd.f32 0.0, %v2351
    %v2353 = vpop.f32.mrf.mxu0
    %2354 = vdwg.mxu0
    %v2355 = vlaneseq
    %v2356 = vshrl.u32 %v2355, 7
    %v2357 = vsub.s32 2, %v2356
    %v2358 = vrot.slane %v61, %v2357
    %v2359 = vadd.f32 %v2358, %v2293
    %v2360 = vadd.f32 %v2358, %v2296
    %v2361 = vadd.f32 %v2358, %v2301
    %v2362 = vadd.f32 %v2358, %v2304
    %v2363 = vadd.f32 %v2358, %v2309
    %v2364 = vadd.f32 %v2358, %v2312
    %v2365 = vadd.f32 %v2358, %v2317
    %v2366 = vadd.f32 %v2358, %v2320
    %v2367 = vadd.f32 %v2358, %v2325
    %v2368 = vadd.f32 %v2358, %v2328
    %v2369 = vadd.f32 %v2358, %v2333
    %v2370 = vadd.f32 %v2358, %v2336
    %v2371 = vadd.f32 %v2358, %v2341
    %v2372 = vadd.f32 %v2358, %v2344
    %v2373 = vadd.f32 %v2358, %v2349
    %v2374 = vadd.f32 %v2358, %v2352
    %v2375 = vpack.c.bf16 %v2063, %v2060
    %v2376 = vpack.c.bf16 %v2071, %v2068
    %v2377 = vpack.c.bf16 %v2079, %v2076
    %v2378 = vpack.c.bf16 %v2087, %v2084
    %v2379 = vpack.c.bf16 %v2095, %v2092
    %v2380 = vpack.c.bf16 %v2103, %v2100
    %v2381 = vpack.c.bf16 %v2111, %v2108
    %v2382 = vpack.c.bf16 %v2119, %v2116
    %v2383 = vld [vmem:[#allocation2 + $0x340] sm:$0xf]
    %v2384 = vld [vmem:[#allocation2 + $0x344] sm:$0xf]
    %v2385 = vld [vmem:[#allocation2 + $0x348] sm:$0xf]
    %v2386 = vld [vmem:[#allocation2 + $0x34c] sm:$0xf]
    %v2387 = vld [vmem:[#allocation2 + $0x350] sm:$0xf]
    %v2388 = vld [vmem:[#allocation2 + $0x354] sm:$0xf]
    %v2389 = vld [vmem:[#allocation2 + $0x358] sm:$0xf]
    %v2390 = vld [vmem:[#allocation2 + $0x35c] sm:$0xf]
    %v2391 = vld [vmem:[#allocation2 + $0x360] sm:$0xf]
    %v2392 = vld [vmem:[#allocation2 + $0x364] sm:$0xf]
    %v2393 = vld [vmem:[#allocation2 + $0x368] sm:$0xf]
    %v2394 = vld [vmem:[#allocation2 + $0x36c] sm:$0xf]
    %v2395 = vld [vmem:[#allocation2 + $0x370] sm:$0xf]
    %v2396 = vld [vmem:[#allocation2 + $0x374] sm:$0xf]
    %v2397 = vld [vmem:[#allocation2 + $0x378] sm:$0xf]
    %v2398 = vld [vmem:[#allocation2 + $0x37c] sm:$0xf]
    %v2415 = vunpack.c.l.b16 %v2383
    %v2416 = vunpack.c.l.b16 %v2384
    %v2417 = vunpack.c.l.b16 %v2385
    %v2418 = vunpack.c.l.b16 %v2386
    %v2419 = vunpack.c.l.b16 %v2387
    %v2420 = vunpack.c.l.b16 %v2388
    %v2421 = vunpack.c.l.b16 %v2389
    %v2422 = vunpack.c.l.b16 %v2390
    %v2423 = vunpack.c.l.b16 %v2391
    %v2424 = vunpack.c.l.b16 %v2392
    %v2425 = vunpack.c.l.b16 %v2393
    %v2426 = vunpack.c.l.b16 %v2394
    %v2427 = vunpack.c.l.b16 %v2395
    %v2428 = vunpack.c.l.b16 %v2396
    %v2429 = vunpack.c.l.b16 %v2397
    %v2430 = vunpack.c.l.b16 %v2398
    %v2431 = vpack.c.b16 %v2416, %v2415
    %v2432 = vpack.c.b16 %v2418, %v2417
    %v2433 = vpack.c.b16 %v2420, %v2419
    %v2434 = vpack.c.b16 %v2422, %v2421
    %v2435 = vpack.c.b16 %v2424, %v2423
    %v2436 = vpack.c.b16 %v2426, %v2425
    %v2437 = vpack.c.b16 %v2428, %v2427
    %v2438 = vpack.c.b16 %v2430, %v2429
    %2447 = vmatprep.subr.bf16.mxu0 0
    %2448 = vmatpush1.bf16.msra.mxu0 %v2438
    %2449 = vmatprep.subr.bf16.mxu0 0
    %2450 = vmatpush1.bf16.msra.mxu0 %v2437
    %2451 = vmatprep.subr.bf16.mxu0 0
    %2452 = vmatpush1.bf16.msra.mxu0 %v2436
    %2453 = vmatprep.subr.bf16.mxu0 0
    %2454 = vmatpush1.bf16.msra.mxu0 %v2435
    %2455 = vmatprep.subr.bf16.mxu0 0
    %2456 = vmatpush1.bf16.msra.mxu0 %v2434
    %2457 = vmatprep.subr.bf16.mxu0 0
    %2458 = vmatpush1.bf16.msra.mxu0 %v2433
    %2459 = vmatprep.subr.bf16.mxu0 0
    %2460 = vmatpush1.bf16.msra.mxu0 %v2432
    %2461 = vmatprep.subr.bf16.mxu0 0
    %2462 = vmatpush1.bf16.msra.mxu0 %v2431
    %2463 = vmatprep.subr.bf16.mxu0 0
    %2464 = vmatpush2.bf16.msra.mxu0 0
    %2465 = vmatprep.subr.bf16.mxu0 0
    %2466 = vmatpush2.bf16.msra.mxu0 0
    %2467 = vmatprep.subr.bf16.mxu0 0
    %2468 = vmatpush2.bf16.msra.mxu0 0
    %2469 = vmatprep.subr.bf16.mxu0 0
    %2470 = vmatpush2.bf16.msra.mxu0 0
    %2471 = vmatprep.subr.bf16.mxu0 0
    %2472 = vmatpush2.bf16.msra.mxu0 0
    %2473 = vmatprep.subr.bf16.mxu0 0
    %2474 = vmatpush2.bf16.msra.mxu0 0
    %2475 = vmatprep.subr.bf16.mxu0 0
    %2476 = vmatpush2.bf16.msra.mxu0 0
    %2477 = vmatprep.subr.bf16.mxu0 0
    %2478 = vmatpush2.bf16.msra.mxu0 0
    %2479 = vmatprep.mubr.bf16.mxu0 0
    %2480 = vmatmul.mubr.bf16.gmra.mxu0 %v2375
    %v2481 = vpop.f32.mrf.mxu0
    %v2482 = vadd.f32 0.0, %v2481
    %v2483 = vpop.f32.mrf.mxu0
    %v2484 = vpop.f32.mrf.mxu0
    %v2485 = vadd.f32 0.0, %v2484
    %v2486 = vpop.f32.mrf.mxu0
    %2487 = vmatprep.mubr.bf16.mxu0 0
    %2488 = vmatmul.mubr.bf16.gmra.mxu0 %v2376
    %v2489 = vpop.f32.mrf.mxu0
    %v2490 = vadd.f32 0.0, %v2489
    %v2491 = vpop.f32.mrf.mxu0
    %v2492 = vpop.f32.mrf.mxu0
    %v2493 = vadd.f32 0.0, %v2492
    %v2494 = vpop.f32.mrf.mxu0
    %2495 = vmatprep.mubr.bf16.mxu0 0
    %2496 = vmatmul.mubr.bf16.gmra.mxu0 %v2377
    %v2497 = vpop.f32.mrf.mxu0
    %v2498 = vadd.f32 0.0, %v2497
    %v2499 = vpop.f32.mrf.mxu0
    %v2500 = vpop.f32.mrf.mxu0
    %v2501 = vadd.f32 0.0, %v2500
    %v2502 = vpop.f32.mrf.mxu0
    %2503 = vmatprep.mubr.bf16.mxu0 0
    %2504 = vmatmul.mubr.bf16.gmra.mxu0 %v2378
    %v2505 = vpop.f32.mrf.mxu0
    %v2506 = vadd.f32 0.0, %v2505
    %v2507 = vpop.f32.mrf.mxu0
    %v2508 = vpop.f32.mrf.mxu0
    %v2509 = vadd.f32 0.0, %v2508
    %v2510 = vpop.f32.mrf.mxu0
    %2511 = vmatprep.mubr.bf16.mxu0 0
    %2512 = vmatmul.mubr.bf16.gmra.mxu0 %v2379
    %v2513 = vpop.f32.mrf.mxu0
    %v2514 = vadd.f32 0.0, %v2513
    %v2515 = vpop.f32.mrf.mxu0
    %v2516 = vpop.f32.mrf.mxu0
    %v2517 = vadd.f32 0.0, %v2516
    %v2518 = vpop.f32.mrf.mxu0
    %2519 = vmatprep.mubr.bf16.mxu0 0
    %2520 = vmatmul.mubr.bf16.gmra.mxu0 %v2380
    %v2521 = vpop.f32.mrf.mxu0
    %v2522 = vadd.f32 0.0, %v2521
    %v2523 = vpop.f32.mrf.mxu0
    %v2524 = vpop.f32.mrf.mxu0
    %v2525 = vadd.f32 0.0, %v2524
    %v2526 = vpop.f32.mrf.mxu0
    %2527 = vmatprep.mubr.bf16.mxu0 0
    %2528 = vmatmul.mubr.bf16.gmra.mxu0 %v2381
    %v2529 = vpop.f32.mrf.mxu0
    %v2530 = vadd.f32 0.0, %v2529
    %v2531 = vpop.f32.mrf.mxu0
    %v2532 = vpop.f32.mrf.mxu0
    %v2533 = vadd.f32 0.0, %v2532
    %v2534 = vpop.f32.mrf.mxu0
    %2535 = vmatprep.mubr.bf16.mxu0 0
    %2536 = vmatmul.mubr.bf16.gmra.mxu0 %v2382
    %v2537 = vpop.f32.mrf.mxu0
    %v2538 = vadd.f32 0.0, %v2537
    %v2539 = vpop.f32.mrf.mxu0
    %v2540 = vpop.f32.mrf.mxu0
    %v2541 = vadd.f32 0.0, %v2540
    %v2542 = vpop.f32.mrf.mxu0
    %2543 = vdwg.mxu0
    %v2544 = vadd.f32 %v2359, %v2482
    %v2545 = vadd.f32 %v2360, %v2485
    %v2546 = vadd.f32 %v2361, %v2490
    %v2547 = vadd.f32 %v2362, %v2493
    %v2548 = vadd.f32 %v2363, %v2498
    %v2549 = vadd.f32 %v2364, %v2501
    %v2550 = vadd.f32 %v2365, %v2506
    %v2551 = vadd.f32 %v2366, %v2509
    %v2552 = vadd.f32 %v2367, %v2514
    %v2553 = vadd.f32 %v2368, %v2517
    %v2554 = vadd.f32 %v2369, %v2522
    %v2555 = vadd.f32 %v2370, %v2525
    %v2556 = vadd.f32 %v2371, %v2530
    %v2557 = vadd.f32 %v2372, %v2533
    %v2558 = vadd.f32 %v2373, %v2538
    %v2559 = vadd.f32 %v2374, %v2541
    %v2560 = vpack.c.bf16 %v2127, %v2124
    %v2561 = vpack.c.bf16 %v2135, %v2132
    %v2562 = vpack.c.bf16 %v2143, %v2140
    %v2563 = vpack.c.bf16 %v2151, %v2148
    %v2564 = vpack.c.bf16 %v2159, %v2156
    %v2565 = vpack.c.bf16 %v2167, %v2164
    %v2566 = vpack.c.bf16 %v2175, %v2172
    %v2567 = vpack.c.bf16 %v2183, %v2180
    %v2568 = vld [vmem:[#allocation2 + $0x380] sm:$0xf]
    %v2569 = vld [vmem:[#allocation2 + $0x384] sm:$0xf]
    %v2570 = vld [vmem:[#allocation2 + $0x388] sm:$0xf]
    %v2571 = vld [vmem:[#allocation2 + $0x38c] sm:$0xf]
    %v2572 = vld [vmem:[#allocation2 + $0x390] sm:$0xf]
    %v2573 = vld [vmem:[#allocation2 + $0x394] sm:$0xf]
    %v2574 = vld [vmem:[#allocation2 + $0x398] sm:$0xf]
    %v2575 = vld [vmem:[#allocation2 + $0x39c] sm:$0xf]
    %v2576 = vld [vmem:[#allocation2 + $0x3a0] sm:$0xf]
    %v2577 = vld [vmem:[#allocation2 + $0x3a4] sm:$0xf]
    %v2578 = vld [vmem:[#allocation2 + $0x3a8] sm:$0xf]
    %v2579 = vld [vmem:[#allocation2 + $0x3ac] sm:$0xf]
    %v2580 = vld [vmem:[#allocation2 + $0x3b0] sm:$0xf]
    %v2581 = vld [vmem:[#allocation2 + $0x3b4] sm:$0xf]
    %v2582 = vld [vmem:[#allocation2 + $0x3b8] sm:$0xf]
    %v2583 = vld [vmem:[#allocation2 + $0x3bc] sm:$0xf]
    %v2600 = vunpack.c.l.b16 %v2568
    %v2601 = vunpack.c.l.b16 %v2569
    %v2602 = vunpack.c.l.b16 %v2570
    %v2603 = vunpack.c.l.b16 %v2571
    %v2604 = vunpack.c.l.b16 %v2572
    %v2605 = vunpack.c.l.b16 %v2573
    %v2606 = vunpack.c.l.b16 %v2574
    %v2607 = vunpack.c.l.b16 %v2575
    %v2608 = vunpack.c.l.b16 %v2576
    %v2609 = vunpack.c.l.b16 %v2577
    %v2610 = vunpack.c.l.b16 %v2578
    %v2611 = vunpack.c.l.b16 %v2579
    %v2612 = vunpack.c.l.b16 %v2580
    %v2613 = vunpack.c.l.b16 %v2581
    %v2614 = vunpack.c.l.b16 %v2582
    %v2615 = vunpack.c.l.b16 %v2583
    %v2616 = vpack.c.b16 %v2601, %v2600
    %v2617 = vpack.c.b16 %v2603, %v2602
    %v2618 = vpack.c.b16 %v2605, %v2604
    %v2619 = vpack.c.b16 %v2607, %v2606
    %v2620 = vpack.c.b16 %v2609, %v2608
    %v2621 = vpack.c.b16 %v2611, %v2610
    %v2622 = vpack.c.b16 %v2613, %v2612
    %v2623 = vpack.c.b16 %v2615, %v2614
    %2632 = vmatprep.subr.bf16.mxu0 0
    %2633 = vmatpush1.bf16.msra.mxu0 %v2623
    %2634 = vmatprep.subr.bf16.mxu0 0
    %2635 = vmatpush1.bf16.msra.mxu0 %v2622
    %2636 = vmatprep.subr.bf16.mxu0 0
    %2637 = vmatpush1.bf16.msra.mxu0 %v2621
    %2638 = vmatprep.subr.bf16.mxu0 0
    %2639 = vmatpush1.bf16.msra.mxu0 %v2620
    %2640 = vmatprep.subr.bf16.mxu0 0
    %2641 = vmatpush1.bf16.msra.mxu0 %v2619
    %2642 = vmatprep.subr.bf16.mxu0 0
    %2643 = vmatpush1.bf16.msra.mxu0 %v2618
    %2644 = vmatprep.subr.bf16.mxu0 0
    %2645 = vmatpush1.bf16.msra.mxu0 %v2617
    %2646 = vmatprep.subr.bf16.mxu0 0
    %2647 = vmatpush1.bf16.msra.mxu0 %v2616
    %2648 = vmatprep.subr.bf16.mxu0 0
    %2649 = vmatpush2.bf16.msra.mxu0 0
    %2650 = vmatprep.subr.bf16.mxu0 0
    %2651 = vmatpush2.bf16.msra.mxu0 0
    %2652 = vmatprep.subr.bf16.mxu0 0
    %2653 = vmatpush2.bf16.msra.mxu0 0
    %2654 = vmatprep.subr.bf16.mxu0 0
    %2655 = vmatpush2.bf16.msra.mxu0 0
    %2656 = vmatprep.subr.bf16.mxu0 0
    %2657 = vmatpush2.bf16.msra.mxu0 0
    %2658 = vmatprep.subr.bf16.mxu0 0
    %2659 = vmatpush2.bf16.msra.mxu0 0
    %2660 = vmatprep.subr.bf16.mxu0 0
    %2661 = vmatpush2.bf16.msra.mxu0 0
    %2662 = vmatprep.subr.bf16.mxu0 0
    %2663 = vmatpush2.bf16.msra.mxu0 0
    %2664 = vmatprep.mubr.bf16.mxu0 0
    %2665 = vmatmul.mubr.bf16.gmra.mxu0 %v2560
    %v2666 = vpop.f32.mrf.mxu0
    %v2667 = vadd.f32 0.0, %v2666
    %v2668 = vpop.f32.mrf.mxu0
    %v2669 = vpop.f32.mrf.mxu0
    %v2670 = vadd.f32 0.0, %v2669
    %v2671 = vpop.f32.mrf.mxu0
    %2672 = vmatprep.mubr.bf16.mxu0 0
    %2673 = vmatmul.mubr.bf16.gmra.mxu0 %v2561
    %v2674 = vpop.f32.mrf.mxu0
    %v2675 = vadd.f32 0.0, %v2674
    %v2676 = vpop.f32.mrf.mxu0
    %v2677 = vpop.f32.mrf.mxu0
    %v2678 = vadd.f32 0.0, %v2677
    %v2679 = vpop.f32.mrf.mxu0
    %2680 = vmatprep.mubr.bf16.mxu0 0
    %2681 = vmatmul.mubr.bf16.gmra.mxu0 %v2562
    %v2682 = vpop.f32.mrf.mxu0
    %v2683 = vadd.f32 0.0, %v2682
    %v2684 = vpop.f32.mrf.mxu0
    %v2685 = vpop.f32.mrf.mxu0
    %v2686 = vadd.f32 0.0, %v2685
    %v2687 = vpop.f32.mrf.mxu0
    %2688 = vmatprep.mubr.bf16.mxu0 0
    %2689 = vmatmul.mubr.bf16.gmra.mxu0 %v2563
    %v2690 = vpop.f32.mrf.mxu0
    %v2691 = vadd.f32 0.0, %v2690
    %v2692 = vpop.f32.mrf.mxu0
    %v2693 = vpop.f32.mrf.mxu0
    %v2694 = vadd.f32 0.0, %v2693
    %v2695 = vpop.f32.mrf.mxu0
    %2696 = vmatprep.mubr.bf16.mxu0 0
    %2697 = vmatmul.mubr.bf16.gmra.mxu0 %v2564
    %v2698 = vpop.f32.mrf.mxu0
    %v2699 = vadd.f32 0.0, %v2698
    %v2700 = vpop.f32.mrf.mxu0
    %v2701 = vpop.f32.mrf.mxu0
    %v2702 = vadd.f32 0.0, %v2701
    %v2703 = vpop.f32.mrf.mxu0
    %2704 = vmatprep.mubr.bf16.mxu0 0
    %2705 = vmatmul.mubr.bf16.gmra.mxu0 %v2565
    %v2706 = vpop.f32.mrf.mxu0
    %v2707 = vadd.f32 0.0, %v2706
    %v2708 = vpop.f32.mrf.mxu0
    %v2709 = vpop.f32.mrf.mxu0
    %v2710 = vadd.f32 0.0, %v2709
    %v2711 = vpop.f32.mrf.mxu0
    %2712 = vmatprep.mubr.bf16.mxu0 0
    %2713 = vmatmul.mubr.bf16.gmra.mxu0 %v2566
    %v2714 = vpop.f32.mrf.mxu0
    %v2715 = vadd.f32 0.0, %v2714
    %v2716 = vpop.f32.mrf.mxu0
    %v2717 = vpop.f32.mrf.mxu0
    %v2718 = vadd.f32 0.0, %v2717
    %v2719 = vpop.f32.mrf.mxu0
    %2720 = vmatprep.mubr.bf16.mxu0 0
    %2721 = vmatmul.mubr.bf16.gmra.mxu0 %v2567
    %v2722 = vpop.f32.mrf.mxu0
    %v2723 = vadd.f32 0.0, %v2722
    %v2724 = vpop.f32.mrf.mxu0
    %v2725 = vpop.f32.mrf.mxu0
    %v2726 = vadd.f32 0.0, %v2725
    %v2727 = vpop.f32.mrf.mxu0
    %2728 = vdwg.mxu0
    %v2729 = vadd.f32 %v2544, %v2667
    %v2730 = vadd.f32 %v2545, %v2670
    %v2731 = vadd.f32 %v2546, %v2675
    %v2732 = vadd.f32 %v2547, %v2678
    %v2733 = vadd.f32 %v2548, %v2683
    %v2734 = vadd.f32 %v2549, %v2686
    %v2735 = vadd.f32 %v2550, %v2691
    %v2736 = vadd.f32 %v2551, %v2694
    %v2737 = vadd.f32 %v2552, %v2699
    %v2738 = vadd.f32 %v2553, %v2702
    %v2739 = vadd.f32 %v2554, %v2707
    %v2740 = vadd.f32 %v2555, %v2710
    %v2741 = vadd.f32 %v2556, %v2715
    %v2742 = vadd.f32 %v2557, %v2718
    %v2743 = vadd.f32 %v2558, %v2723
    %v2744 = vadd.f32 %v2559, %v2726
    %v2745 = vmax.f32 %v2729, 0.0
    %v2746 = vmax.f32 %v2730, 0.0
    %v2747 = vmax.f32 %v2731, 0.0
    %v2748 = vmax.f32 %v2732, 0.0
    %v2749 = vmax.f32 %v2733, 0.0
    %v2750 = vmax.f32 %v2734, 0.0
    %v2751 = vmax.f32 %v2735, 0.0
    %v2752 = vmax.f32 %v2736, 0.0
    %v2753 = vmax.f32 %v2737, 0.0
    %v2754 = vmax.f32 %v2738, 0.0
    %v2755 = vmax.f32 %v2739, 0.0
    %v2756 = vmax.f32 %v2740, 0.0
    %v2757 = vmax.f32 %v2741, 0.0
    %v2758 = vmax.f32 %v2742, 0.0
    %v2759 = vmax.f32 %v2743, 0.0
    %v2760 = vmax.f32 %v2744, 0.0
    %v2761 = vld [vmem:[#allocation2 + $0x3c0] sm:$0xf]
    %v2762 = vld [vmem:[#allocation2 + $0x3c4] sm:$0xf]
    %v2763 = vld [vmem:[#allocation2 + $0x3c8] sm:$0xf]
    %v2764 = vld [vmem:[#allocation2 + $0x3cc] sm:$0xf]
    %v2765 = vld [vmem:[#allocation2 + $0x3d0] sm:$0xf]
    %v2766 = vld [vmem:[#allocation2 + $0x3d4] sm:$0xf]
    %v2767 = vld [vmem:[#allocation2 + $0x3d8] sm:$0xf]
    %v2768 = vld [vmem:[#allocation2 + $0x3dc] sm:$0xf]
    %v2769 = vld [vmem:[#allocation2 + $0x3e0] sm:$0xf]
    %v2770 = vld [vmem:[#allocation2 + $0x3e4] sm:$0xf]
    %v2771 = vld [vmem:[#allocation2 + $0x3e8] sm:$0xf]
    %v2772 = vld [vmem:[#allocation2 + $0x3ec] sm:$0xf]
    %v2773 = vld [vmem:[#allocation2 + $0x3f0] sm:$0xf]
    %v2774 = vld [vmem:[#allocation2 + $0x3f4] sm:$0xf]
    %v2775 = vld [vmem:[#allocation2 + $0x3f8] sm:$0xf]
    %v2776 = vld [vmem:[#allocation2 + $0x3fc] sm:$0xf]
    %v2777 = vld [vmem:[#allocation2 + $0x400] sm:$0xf]
    %v2778 = vld [vmem:[#allocation2 + $0x404] sm:$0xf]
    %v2779 = vld [vmem:[#allocation2 + $0x408] sm:$0xf]
    %v2780 = vld [vmem:[#allocation2 + $0x40c] sm:$0xf]
    %v2781 = vld [vmem:[#allocation2 + $0x410] sm:$0xf]
    %v2782 = vld [vmem:[#allocation2 + $0x414] sm:$0xf]
    %v2783 = vld [vmem:[#allocation2 + $0x418] sm:$0xf]
    %v2784 = vld [vmem:[#allocation2 + $0x41c] sm:$0xf]
    %v2785 = vld [vmem:[#allocation2 + $0x420] sm:$0xf]
    %v2786 = vld [vmem:[#allocation2 + $0x424] sm:$0xf]
    %v2787 = vld [vmem:[#allocation2 + $0x428] sm:$0xf]
    %v2788 = vld [vmem:[#allocation2 + $0x42c] sm:$0xf]
    %v2789 = vld [vmem:[#allocation2 + $0x430] sm:$0xf]
    %v2790 = vld [vmem:[#allocation2 + $0x434] sm:$0xf]
    %v2791 = vld [vmem:[#allocation2 + $0x438] sm:$0xf]
    %v2792 = vld [vmem:[#allocation2 + $0x43c] sm:$0xf]
    %v2793 = vld [vmem:[#allocation2 + $0x440] sm:$0xf]
    %v2794 = vld [vmem:[#allocation2 + $0x444] sm:$0xf]
    %v2795 = vld [vmem:[#allocation2 + $0x448] sm:$0xf]
    %v2796 = vld [vmem:[#allocation2 + $0x44c] sm:$0xf]
    %v2797 = vld [vmem:[#allocation2 + $0x450] sm:$0xf]
    %v2798 = vld [vmem:[#allocation2 + $0x454] sm:$0xf]
    %v2799 = vld [vmem:[#allocation2 + $0x458] sm:$0xf]
    %v2800 = vld [vmem:[#allocation2 + $0x45c] sm:$0xf]
    %v2801 = vld [vmem:[#allocation2 + $0x460] sm:$0xf]
    %v2802 = vld [vmem:[#allocation2 + $0x464] sm:$0xf]
    %v2803 = vld [vmem:[#allocation2 + $0x468] sm:$0xf]
    %v2804 = vld [vmem:[#allocation2 + $0x46c] sm:$0xf]
    %v2805 = vld [vmem:[#allocation2 + $0x470] sm:$0xf]
    %v2806 = vld [vmem:[#allocation2 + $0x474] sm:$0xf]
    %v2807 = vld [vmem:[#allocation2 + $0x478] sm:$0xf]
    %v2808 = vld [vmem:[#allocation2 + $0x47c] sm:$0xf]
    %v2809 = vld [vmem:[#allocation2 + $0x480] sm:$0xf]
    %v2810 = vld [vmem:[#allocation2 + $0x484] sm:$0xf]
    %v2811 = vld [vmem:[#allocation2 + $0x488] sm:$0xf]
    %v2812 = vld [vmem:[#allocation2 + $0x48c] sm:$0xf]
    %v2813 = vld [vmem:[#allocation2 + $0x490] sm:$0xf]
    %v2814 = vld [vmem:[#allocation2 + $0x494] sm:$0xf]
    %v2815 = vld [vmem:[#allocation2 + $0x498] sm:$0xf]
    %v2816 = vld [vmem:[#allocation2 + $0x49c] sm:$0xf]
    %v2817 = vld [vmem:[#allocation2 + $0x4a0] sm:$0xf]
    %v2818 = vld [vmem:[#allocation2 + $0x4a4] sm:$0xf]
    %v2819 = vld [vmem:[#allocation2 + $0x4a8] sm:$0xf]
    %v2820 = vld [vmem:[#allocation2 + $0x4ac] sm:$0xf]
    %v2821 = vld [vmem:[#allocation2 + $0x4b0] sm:$0xf]
    %v2822 = vld [vmem:[#allocation2 + $0x4b4] sm:$0xf]
    %v2823 = vld [vmem:[#allocation2 + $0x4b8] sm:$0xf]
    %v2824 = vld [vmem:[#allocation2 + $0x4bc] sm:$0xf]
    %v2825 = vld [vmem:[#allocation2 + $0x4c0] sm:$0xf]
    %v2826 = vld [vmem:[#allocation2 + $0x4c4] sm:$0xf]
    %v2827 = vld [vmem:[#allocation2 + $0x4c8] sm:$0xf]
    %v2828 = vld [vmem:[#allocation2 + $0x4cc] sm:$0xf]
    %v2829 = vld [vmem:[#allocation2 + $0x4d0] sm:$0xf]
    %v2830 = vld [vmem:[#allocation2 + $0x4d4] sm:$0xf]
    %v2831 = vld [vmem:[#allocation2 + $0x4d8] sm:$0xf]
    %v2832 = vld [vmem:[#allocation2 + $0x4dc] sm:$0xf]
    %v2833 = vld [vmem:[#allocation2 + $0x4e0] sm:$0xf]
    %v2834 = vld [vmem:[#allocation2 + $0x4e4] sm:$0xf]
    %v2835 = vld [vmem:[#allocation2 + $0x4e8] sm:$0xf]
    %v2836 = vld [vmem:[#allocation2 + $0x4ec] sm:$0xf]
    %v2837 = vld [vmem:[#allocation2 + $0x4f0] sm:$0xf]
    %v2838 = vld [vmem:[#allocation2 + $0x4f4] sm:$0xf]
    %v2839 = vld [vmem:[#allocation2 + $0x4f8] sm:$0xf]
    %v2840 = vld [vmem:[#allocation2 + $0x4fc] sm:$0xf]
    %v2841 = vpack.c.bf16 %v2746, %v2745
    %v2842 = vpack.c.bf16 %v2748, %v2747
    %v2843 = vpack.c.bf16 %v2750, %v2749
    %v2844 = vpack.c.bf16 %v2752, %v2751
    %v2845 = vpack.c.bf16 %v2754, %v2753
    %v2846 = vpack.c.bf16 %v2756, %v2755
    %v2847 = vpack.c.bf16 %v2758, %v2757
    %v2848 = vpack.c.bf16 %v2760, %v2759
    %v2929 = vunpack.c.l.b16 %v2761
    %v2930 = vunpack.c.l.b16 %v2762
    %v2931 = vunpack.c.l.b16 %v2763
    %v2932 = vunpack.c.l.b16 %v2764
    %v2933 = vunpack.c.l.b16 %v2765
    %v2934 = vunpack.c.l.b16 %v2766
    %v2935 = vunpack.c.l.b16 %v2767
    %v2936 = vunpack.c.l.b16 %v2768
    %v2937 = vunpack.c.l.b16 %v2769
    %v2938 = vunpack.c.l.b16 %v2770
    %v2939 = vunpack.c.l.b16 %v2771
    %v2940 = vunpack.c.l.b16 %v2772
    %v2941 = vunpack.c.l.b16 %v2773
    %v2942 = vunpack.c.l.b16 %v2774
    %v2943 = vunpack.c.l.b16 %v2775
    %v2944 = vunpack.c.l.b16 %v2776
    %v2945 = vunpack.c.l.b16 %v2777
    %v2946 = vunpack.c.l.b16 %v2778
    %v2947 = vunpack.c.l.b16 %v2779
    %v2948 = vunpack.c.l.b16 %v2780
    %v2949 = vunpack.c.l.b16 %v2781
    %v2950 = vunpack.c.l.b16 %v2782
    %v2951 = vunpack.c.l.b16 %v2783
    %v2952 = vunpack.c.l.b16 %v2784
    %v2953 = vunpack.c.l.b16 %v2785
    %v2954 = vunpack.c.l.b16 %v2786
    %v2955 = vunpack.c.l.b16 %v2787
    %v2956 = vunpack.c.l.b16 %v2788
    %v2957 = vunpack.c.l.b16 %v2789
    %v2958 = vunpack.c.l.b16 %v2790
    %v2959 = vunpack.c.l.b16 %v2791
    %v2960 = vunpack.c.l.b16 %v2792
    %v2961 = vunpack.c.l.b16 %v2793
    %v2962 = vunpack.c.l.b16 %v2794
    %v2963 = vunpack.c.l.b16 %v2795
    %v2964 = vunpack.c.l.b16 %v2796
    %v2965 = vunpack.c.l.b16 %v2797
    %v2966 = vunpack.c.l.b16 %v2798
    %v2967 = vunpack.c.l.b16 %v2799
    %v2968 = vunpack.c.l.b16 %v2800
    %v2969 = vunpack.c.l.b16 %v2801
    %v2970 = vunpack.c.l.b16 %v2802
    %v2971 = vunpack.c.l.b16 %v2803
    %v2972 = vunpack.c.l.b16 %v2804
    %v2973 = vunpack.c.l.b16 %v2805
    %v2974 = vunpack.c.l.b16 %v2806
    %v2975 = vunpack.c.l.b16 %v2807
    %v2976 = vunpack.c.l.b16 %v2808
    %v2977 = vunpack.c.l.b16 %v2809
    %v2978 = vunpack.c.l.b16 %v2810
    %v2979 = vunpack.c.l.b16 %v2811
    %v2980 = vunpack.c.l.b16 %v2812
    %v2981 = vunpack.c.l.b16 %v2813
    %v2982 = vunpack.c.l.b16 %v2814
    %v2983 = vunpack.c.l.b16 %v2815
    %v2984 = vunpack.c.l.b16 %v2816
    %v2985 = vunpack.c.l.b16 %v2817
    %v2986 = vunpack.c.l.b16 %v2818
    %v2987 = vunpack.c.l.b16 %v2819
    %v2988 = vunpack.c.l.b16 %v2820
    %v2989 = vunpack.c.l.b16 %v2821
    %v2990 = vunpack.c.l.b16 %v2822
    %v2991 = vunpack.c.l.b16 %v2823
    %v2992 = vunpack.c.l.b16 %v2824
    %v2993 = vunpack.c.l.b16 %v2825
    %v2994 = vunpack.c.l.b16 %v2826
    %v2995 = vunpack.c.l.b16 %v2827
    %v2996 = vunpack.c.l.b16 %v2828
    %v2997 = vunpack.c.l.b16 %v2829
    %v2998 = vunpack.c.l.b16 %v2830
    %v2999 = vunpack.c.l.b16 %v2831
    %v3000 = vunpack.c.l.b16 %v2832
    %v3001 = vunpack.c.l.b16 %v2833
    %v3002 = vunpack.c.l.b16 %v2834
    %v3003 = vunpack.c.l.b16 %v2835
    %v3004 = vunpack.c.l.b16 %v2836
    %v3005 = vunpack.c.l.b16 %v2837
    %v3006 = vunpack.c.l.b16 %v2838
    %v3007 = vunpack.c.l.b16 %v2839
    %v3008 = vunpack.c.l.b16 %v2840
    %v3009 = vpack.c.b16 %v2930, %v2929
    %v3010 = vpack.c.b16 %v2932, %v2931
    %v3011 = vpack.c.b16 %v2934, %v2933
    %v3012 = vpack.c.b16 %v2936, %v2935
    %v3013 = vpack.c.b16 %v2938, %v2937
    %v3014 = vpack.c.b16 %v2940, %v2939
    %v3015 = vpack.c.b16 %v2942, %v2941
    %v3016 = vpack.c.b16 %v2944, %v2943
    %v3017 = vpack.c.b16 %v2946, %v2945
    %v3018 = vpack.c.b16 %v2948, %v2947
    %v3019 = vpack.c.b16 %v2950, %v2949
    %v3020 = vpack.c.b16 %v2952, %v2951
    %v3021 = vpack.c.b16 %v2954, %v2953
    %v3022 = vpack.c.b16 %v2956, %v2955
    %v3023 = vpack.c.b16 %v2958, %v2957
    %v3024 = vpack.c.b16 %v2960, %v2959
    %v3025 = vpack.c.b16 %v2962, %v2961
    %v3026 = vpack.c.b16 %v2964, %v2963
    %v3027 = vpack.c.b16 %v2966, %v2965
    %v3028 = vpack.c.b16 %v2968, %v2967
    %v3029 = vpack.c.b16 %v2970, %v2969
    %v3030 = vpack.c.b16 %v2972, %v2971
    %v3031 = vpack.c.b16 %v2974, %v2973
    %v3032 = vpack.c.b16 %v2976, %v2975
    %v3033 = vpack.c.b16 %v2978, %v2977
    %v3034 = vpack.c.b16 %v2980, %v2979
    %v3035 = vpack.c.b16 %v2982, %v2981
    %v3036 = vpack.c.b16 %v2984, %v2983
    %v3037 = vpack.c.b16 %v2986, %v2985
    %v3038 = vpack.c.b16 %v2988, %v2987
    %v3039 = vpack.c.b16 %v2990, %v2989
    %v3040 = vpack.c.b16 %v2992, %v2991
    %v3041 = vpack.c.b16 %v2994, %v2993
    %v3042 = vpack.c.b16 %v2996, %v2995
    %v3043 = vpack.c.b16 %v2998, %v2997
    %v3044 = vpack.c.b16 %v3000, %v2999
    %v3045 = vpack.c.b16 %v3002, %v3001
    %v3046 = vpack.c.b16 %v3004, %v3003
    %v3047 = vpack.c.b16 %v3006, %v3005
    %v3048 = vpack.c.b16 %v3008, %v3007
    %3089 = vmatprep.subr.bf16.mxu0 0
    %3090 = vmatpush1.bf16.msra.mxu0 %v2848
    %3091 = vmatprep.subr.bf16.mxu0 0
    %3092 = vmatpush1.bf16.msra.mxu0 %v2847
    %3093 = vmatprep.subr.bf16.mxu0 0
    %3094 = vmatpush1.bf16.msra.mxu0 %v2846
    %3095 = vmatprep.subr.bf16.mxu0 0
    %3096 = vmatpush1.bf16.msra.mxu0 %v2845
    %3097 = vmatprep.subr.bf16.mxu0 0
    %3098 = vmatpush1.bf16.msra.mxu0 %v2844
    %3099 = vmatprep.subr.bf16.mxu0 0
    %3100 = vmatpush1.bf16.msra.mxu0 %v2843
    %3101 = vmatprep.subr.bf16.mxu0 0
    %3102 = vmatpush1.bf16.msra.mxu0 %v2842
    %3103 = vmatprep.subr.bf16.mxu0 0
    %3104 = vmatpush1.bf16.msra.mxu0 %v2841
    %3105 = vmatprep.subr.bf16.mxu0 0
    %3106 = vmatpush2.bf16.msra.mxu0 0
    %3107 = vmatprep.subr.bf16.mxu0 0
    %3108 = vmatpush2.bf16.msra.mxu0 0
    %3109 = vmatprep.subr.bf16.mxu0 0
    %3110 = vmatpush2.bf16.msra.mxu0 0
    %3111 = vmatprep.subr.bf16.mxu0 0
    %3112 = vmatpush2.bf16.msra.mxu0 0
    %3113 = vmatprep.subr.bf16.mxu0 0
    %3114 = vmatpush2.bf16.msra.mxu0 0
    %3115 = vmatprep.subr.bf16.mxu0 0
    %3116 = vmatpush2.bf16.msra.mxu0 0
    %3117 = vmatprep.subr.bf16.mxu0 0
    %3118 = vmatpush2.bf16.msra.mxu0 0
    %3119 = vmatprep.subr.bf16.mxu0 0
    %3120 = vmatpush2.bf16.msra.mxu0 0
    %3121 = vmatprep.mubr.bf16.mxu0 0
    %3122 = vmatmul.mubr.bf16.gmra.mxu0 %v3009
    %v3123 = vpop.f32.mrf.mxu0
    %v3124 = vadd.f32 0.0, %v3123
    %v3125 = vpop.f32.mrf.mxu0
    %v3126 = vpop.f32.mrf.mxu0
    %v3127 = vadd.f32 0.0, %v3126
    %v3128 = vpop.f32.mrf.mxu0
    %3129 = vmatprep.mubr.bf16.mxu0 0
    %3130 = vmatmul.mubr.bf16.gmra.mxu0 %v3010
    %v3131 = vpop.f32.mrf.mxu0
    %v3132 = vadd.f32 0.0, %v3131
    %v3133 = vpop.f32.mrf.mxu0
    %v3134 = vpop.f32.mrf.mxu0
    %v3135 = vadd.f32 0.0, %v3134
    %v3136 = vpop.f32.mrf.mxu0
    %3137 = vmatprep.mubr.bf16.mxu0 0
    %3138 = vmatmul.mubr.bf16.gmra.mxu0 %v3011
    %v3139 = vpop.f32.mrf.mxu0
    %v3140 = vadd.f32 0.0, %v3139
    %v3141 = vpop.f32.mrf.mxu0
    %v3142 = vpop.f32.mrf.mxu0
    %v3143 = vadd.f32 0.0, %v3142
    %v3144 = vpop.f32.mrf.mxu0
    %3145 = vmatprep.mubr.bf16.mxu0 0
    %3146 = vmatmul.mubr.bf16.gmra.mxu0 %v3012
    %v3147 = vpop.f32.mrf.mxu0
    %v3148 = vadd.f32 0.0, %v3147
    %v3149 = vpop.f32.mrf.mxu0
    %v3150 = vpop.f32.mrf.mxu0
    %v3151 = vadd.f32 0.0, %v3150
    %v3152 = vpop.f32.mrf.mxu0
    %3153 = vmatprep.mubr.bf16.mxu0 0
    %3154 = vmatmul.mubr.bf16.gmra.mxu0 %v3013
    %v3155 = vpop.f32.mrf.mxu0
    %v3156 = vadd.f32 0.0, %v3155
    %v3157 = vpop.f32.mrf.mxu0
    %v3158 = vpop.f32.mrf.mxu0
    %v3159 = vadd.f32 0.0, %v3158
    %v3160 = vpop.f32.mrf.mxu0
    %3161 = vmatprep.mubr.bf16.mxu0 0
    %3162 = vmatmul.mubr.bf16.gmra.mxu0 %v3014
    %v3163 = vpop.f32.mrf.mxu0
    %v3164 = vadd.f32 0.0, %v3163
    %v3165 = vpop.f32.mrf.mxu0
    %v3166 = vpop.f32.mrf.mxu0
    %v3167 = vadd.f32 0.0, %v3166
    %v3168 = vpop.f32.mrf.mxu0
    %3169 = vmatprep.mubr.bf16.mxu0 0
    %3170 = vmatmul.mubr.bf16.gmra.mxu0 %v3015
    %v3171 = vpop.f32.mrf.mxu0
    %v3172 = vadd.f32 0.0, %v3171
    %v3173 = vpop.f32.mrf.mxu0
    %v3174 = vpop.f32.mrf.mxu0
    %v3175 = vadd.f32 0.0, %v3174
    %v3176 = vpop.f32.mrf.mxu0
    %3177 = vmatprep.mubr.bf16.mxu0 0
    %3178 = vmatmul.mubr.bf16.gmra.mxu0 %v3016
    %v3179 = vpop.f32.mrf.mxu0
    %v3180 = vadd.f32 0.0, %v3179
    %v3181 = vpop.f32.mrf.mxu0
    %v3182 = vpop.f32.mrf.mxu0
    %v3183 = vadd.f32 0.0, %v3182
    %v3184 = vpop.f32.mrf.mxu0
    %3185 = vmatprep.mubr.bf16.mxu0 0
    %3186 = vmatmul.mubr.bf16.gmra.mxu0 %v3017
    %v3187 = vpop.f32.mrf.mxu0
    %v3188 = vadd.f32 0.0, %v3187
    %v3189 = vpop.f32.mrf.mxu0
    %v3190 = vpop.f32.mrf.mxu0
    %v3191 = vadd.f32 0.0, %v3190
    %v3192 = vpop.f32.mrf.mxu0
    %3193 = vmatprep.mubr.bf16.mxu0 0
    %3194 = vmatmul.mubr.bf16.gmra.mxu0 %v3018
    %v3195 = vpop.f32.mrf.mxu0
    %v3196 = vadd.f32 0.0, %v3195
    %v3197 = vpop.f32.mrf.mxu0
    %v3198 = vpop.f32.mrf.mxu0
    %v3199 = vadd.f32 0.0, %v3198
    %v3200 = vpop.f32.mrf.mxu0
    %3201 = vmatprep.mubr.bf16.mxu0 0
    %3202 = vmatmul.mubr.bf16.gmra.mxu0 %v3019
    %v3203 = vpop.f32.mrf.mxu0
    %v3204 = vadd.f32 0.0, %v3203
    %v3205 = vpop.f32.mrf.mxu0
    %v3206 = vpop.f32.mrf.mxu0
    %v3207 = vadd.f32 0.0, %v3206
    %v3208 = vpop.f32.mrf.mxu0
    %3209 = vmatprep.mubr.bf16.mxu0 0
    %3210 = vmatmul.mubr.bf16.gmra.mxu0 %v3020
    %v3211 = vpop.f32.mrf.mxu0
    %v3212 = vadd.f32 0.0, %v3211
    %v3213 = vpop.f32.mrf.mxu0
    %v3214 = vpop.f32.mrf.mxu0
    %v3215 = vadd.f32 0.0, %v3214
    %v3216 = vpop.f32.mrf.mxu0
    %3217 = vmatprep.mubr.bf16.mxu0 0
    %3218 = vmatmul.mubr.bf16.gmra.mxu0 %v3021
    %v3219 = vpop.f32.mrf.mxu0
    %v3220 = vadd.f32 0.0, %v3219
    %v3221 = vpop.f32.mrf.mxu0
    %v3222 = vpop.f32.mrf.mxu0
    %v3223 = vadd.f32 0.0, %v3222
    %v3224 = vpop.f32.mrf.mxu0
    %3225 = vmatprep.mubr.bf16.mxu0 0
    %3226 = vmatmul.mubr.bf16.gmra.mxu0 %v3022
    %v3227 = vpop.f32.mrf.mxu0
    %v3228 = vadd.f32 0.0, %v3227
    %v3229 = vpop.f32.mrf.mxu0
    %v3230 = vpop.f32.mrf.mxu0
    %v3231 = vadd.f32 0.0, %v3230
    %v3232 = vpop.f32.mrf.mxu0
    %3233 = vmatprep.mubr.bf16.mxu0 0
    %3234 = vmatmul.mubr.bf16.gmra.mxu0 %v3023
    %v3235 = vpop.f32.mrf.mxu0
    %v3236 = vadd.f32 0.0, %v3235
    %v3237 = vpop.f32.mrf.mxu0
    %v3238 = vpop.f32.mrf.mxu0
    %v3239 = vadd.f32 0.0, %v3238
    %v3240 = vpop.f32.mrf.mxu0
    %3241 = vmatprep.mubr.bf16.mxu0 0
    %3242 = vmatmul.mubr.bf16.gmra.mxu0 %v3024
    %v3243 = vpop.f32.mrf.mxu0
    %v3244 = vadd.f32 0.0, %v3243
    %v3245 = vpop.f32.mrf.mxu0
    %v3246 = vpop.f32.mrf.mxu0
    %v3247 = vadd.f32 0.0, %v3246
    %v3248 = vpop.f32.mrf.mxu0
    %3249 = vmatprep.mubr.bf16.mxu0 0
    %3250 = vmatmul.mubr.bf16.gmra.mxu0 %v3025
    %v3251 = vpop.f32.mrf.mxu0
    %v3252 = vadd.f32 0.0, %v3251
    %v3253 = vpop.f32.mrf.mxu0
    %v3254 = vpop.f32.mrf.mxu0
    %v3255 = vadd.f32 0.0, %v3254
    %v3256 = vpop.f32.mrf.mxu0
    %3257 = vmatprep.mubr.bf16.mxu0 0
    %3258 = vmatmul.mubr.bf16.gmra.mxu0 %v3026
    %v3259 = vpop.f32.mrf.mxu0
    %v3260 = vadd.f32 0.0, %v3259
    %v3261 = vpop.f32.mrf.mxu0
    %v3262 = vpop.f32.mrf.mxu0
    %v3263 = vadd.f32 0.0, %v3262
    %v3264 = vpop.f32.mrf.mxu0
    %3265 = vmatprep.mubr.bf16.mxu0 0
    %3266 = vmatmul.mubr.bf16.gmra.mxu0 %v3027
    %v3267 = vpop.f32.mrf.mxu0
    %v3268 = vadd.f32 0.0, %v3267
    %v3269 = vpop.f32.mrf.mxu0
    %v3270 = vpop.f32.mrf.mxu0
    %v3271 = vadd.f32 0.0, %v3270
    %v3272 = vpop.f32.mrf.mxu0
    %3273 = vmatprep.mubr.bf16.mxu0 0
    %3274 = vmatmul.mubr.bf16.gmra.mxu0 %v3028
    %v3275 = vpop.f32.mrf.mxu0
    %v3276 = vadd.f32 0.0, %v3275
    %v3277 = vpop.f32.mrf.mxu0
    %v3278 = vpop.f32.mrf.mxu0
    %v3279 = vadd.f32 0.0, %v3278
    %v3280 = vpop.f32.mrf.mxu0
    %3281 = vmatprep.mubr.bf16.mxu0 0
    %3282 = vmatmul.mubr.bf16.gmra.mxu0 %v3029
    %v3283 = vpop.f32.mrf.mxu0
    %v3284 = vadd.f32 0.0, %v3283
    %v3285 = vpop.f32.mrf.mxu0
    %v3286 = vpop.f32.mrf.mxu0
    %v3287 = vadd.f32 0.0, %v3286
    %v3288 = vpop.f32.mrf.mxu0
    %3289 = vmatprep.mubr.bf16.mxu0 0
    %3290 = vmatmul.mubr.bf16.gmra.mxu0 %v3030
    %v3291 = vpop.f32.mrf.mxu0
    %v3292 = vadd.f32 0.0, %v3291
    %v3293 = vpop.f32.mrf.mxu0
    %v3294 = vpop.f32.mrf.mxu0
    %v3295 = vadd.f32 0.0, %v3294
    %v3296 = vpop.f32.mrf.mxu0
    %3297 = vmatprep.mubr.bf16.mxu0 0
    %3298 = vmatmul.mubr.bf16.gmra.mxu0 %v3031
    %v3299 = vpop.f32.mrf.mxu0
    %v3300 = vadd.f32 0.0, %v3299
    %v3301 = vpop.f32.mrf.mxu0
    %v3302 = vpop.f32.mrf.mxu0
    %v3303 = vadd.f32 0.0, %v3302
    %v3304 = vpop.f32.mrf.mxu0
    %3305 = vmatprep.mubr.bf16.mxu0 0
    %3306 = vmatmul.mubr.bf16.gmra.mxu0 %v3032
    %v3307 = vpop.f32.mrf.mxu0
    %v3308 = vadd.f32 0.0, %v3307
    %v3309 = vpop.f32.mrf.mxu0
    %v3310 = vpop.f32.mrf.mxu0
    %v3311 = vadd.f32 0.0, %v3310
    %v3312 = vpop.f32.mrf.mxu0
    %3313 = vmatprep.mubr.bf16.mxu0 0
    %3314 = vmatmul.mubr.bf16.gmra.mxu0 %v3033
    %v3315 = vpop.f32.mrf.mxu0
    %v3316 = vadd.f32 0.0, %v3315
    %v3317 = vpop.f32.mrf.mxu0
    %v3318 = vpop.f32.mrf.mxu0
    %v3319 = vadd.f32 0.0, %v3318
    %v3320 = vpop.f32.mrf.mxu0
    %3321 = vmatprep.mubr.bf16.mxu0 0
    %3322 = vmatmul.mubr.bf16.gmra.mxu0 %v3034
    %v3323 = vpop.f32.mrf.mxu0
    %v3324 = vadd.f32 0.0, %v3323
    %v3325 = vpop.f32.mrf.mxu0
    %v3326 = vpop.f32.mrf.mxu0
    %v3327 = vadd.f32 0.0, %v3326
    %v3328 = vpop.f32.mrf.mxu0
    %3329 = vmatprep.mubr.bf16.mxu0 0
    %3330 = vmatmul.mubr.bf16.gmra.mxu0 %v3035
    %v3331 = vpop.f32.mrf.mxu0
    %v3332 = vadd.f32 0.0, %v3331
    %v3333 = vpop.f32.mrf.mxu0
    %v3334 = vpop.f32.mrf.mxu0
    %v3335 = vadd.f32 0.0, %v3334
    %v3336 = vpop.f32.mrf.mxu0
    %3337 = vmatprep.mubr.bf16.mxu0 0
    %3338 = vmatmul.mubr.bf16.gmra.mxu0 %v3036
    %v3339 = vpop.f32.mrf.mxu0
    %v3340 = vadd.f32 0.0, %v3339
    %v3341 = vpop.f32.mrf.mxu0
    %v3342 = vpop.f32.mrf.mxu0
    %v3343 = vadd.f32 0.0, %v3342
    %v3344 = vpop.f32.mrf.mxu0
    %3345 = vmatprep.mubr.bf16.mxu0 0
    %3346 = vmatmul.mubr.bf16.gmra.mxu0 %v3037
    %v3347 = vpop.f32.mrf.mxu0
    %v3348 = vadd.f32 0.0, %v3347
    %v3349 = vpop.f32.mrf.mxu0
    %v3350 = vpop.f32.mrf.mxu0
    %v3351 = vadd.f32 0.0, %v3350
    %v3352 = vpop.f32.mrf.mxu0
    %3353 = vmatprep.mubr.bf16.mxu0 0
    %3354 = vmatmul.mubr.bf16.gmra.mxu0 %v3038
    %v3355 = vpop.f32.mrf.mxu0
    %v3356 = vadd.f32 0.0, %v3355
    %v3357 = vpop.f32.mrf.mxu0
    %v3358 = vpop.f32.mrf.mxu0
    %v3359 = vadd.f32 0.0, %v3358
    %v3360 = vpop.f32.mrf.mxu0
    %3361 = vmatprep.mubr.bf16.mxu0 0
    %3362 = vmatmul.mubr.bf16.gmra.mxu0 %v3039
    %v3363 = vpop.f32.mrf.mxu0
    %v3364 = vadd.f32 0.0, %v3363
    %v3365 = vpop.f32.mrf.mxu0
    %v3366 = vpop.f32.mrf.mxu0
    %v3367 = vadd.f32 0.0, %v3366
    %v3368 = vpop.f32.mrf.mxu0
    %3369 = vmatprep.mubr.bf16.mxu0 0
    %3370 = vmatmul.mubr.bf16.gmra.mxu0 %v3040
    %v3371 = vpop.f32.mrf.mxu0
    %v3372 = vadd.f32 0.0, %v3371
    %v3373 = vpop.f32.mrf.mxu0
    %v3374 = vpop.f32.mrf.mxu0
    %v3375 = vadd.f32 0.0, %v3374
    %v3376 = vpop.f32.mrf.mxu0
    %3377 = vmatprep.mubr.bf16.mxu0 0
    %3378 = vmatmul.mubr.bf16.gmra.mxu0 %v3041
    %v3379 = vpop.f32.mrf.mxu0
    %v3380 = vadd.f32 0.0, %v3379
    %v3381 = vpop.f32.mrf.mxu0
    %v3382 = vpop.f32.mrf.mxu0
    %v3383 = vadd.f32 0.0, %v3382
    %v3384 = vpop.f32.mrf.mxu0
    %3385 = vmatprep.mubr.bf16.mxu0 0
    %3386 = vmatmul.mubr.bf16.gmra.mxu0 %v3042
    %v3387 = vpop.f32.mrf.mxu0
    %v3388 = vadd.f32 0.0, %v3387
    %v3389 = vpop.f32.mrf.mxu0
    %v3390 = vpop.f32.mrf.mxu0
    %v3391 = vadd.f32 0.0, %v3390
    %v3392 = vpop.f32.mrf.mxu0
    %3393 = vmatprep.mubr.bf16.mxu0 0
    %3394 = vmatmul.mubr.bf16.gmra.mxu0 %v3043
    %v3395 = vpop.f32.mrf.mxu0
    %v3396 = vadd.f32 0.0, %v3395
    %v3397 = vpop.f32.mrf.mxu0
    %v3398 = vpop.f32.mrf.mxu0
    %v3399 = vadd.f32 0.0, %v3398
    %v3400 = vpop.f32.mrf.mxu0
    %3401 = vmatprep.mubr.bf16.mxu0 0
    %3402 = vmatmul.mubr.bf16.gmra.mxu0 %v3044
    %v3403 = vpop.f32.mrf.mxu0
    %v3404 = vadd.f32 0.0, %v3403
    %v3405 = vpop.f32.mrf.mxu0
    %v3406 = vpop.f32.mrf.mxu0
    %v3407 = vadd.f32 0.0, %v3406
    %v3408 = vpop.f32.mrf.mxu0
    %3409 = vmatprep.mubr.bf16.mxu0 0
    %3410 = vmatmul.mubr.bf16.gmra.mxu0 %v3045
    %v3411 = vpop.f32.mrf.mxu0
    %v3412 = vadd.f32 0.0, %v3411
    %v3413 = vpop.f32.mrf.mxu0
    %v3414 = vpop.f32.mrf.mxu0
    %v3415 = vadd.f32 0.0, %v3414
    %v3416 = vpop.f32.mrf.mxu0
    %3417 = vmatprep.mubr.bf16.mxu0 0
    %3418 = vmatmul.mubr.bf16.gmra.mxu0 %v3046
    %v3419 = vpop.f32.mrf.mxu0
    %v3420 = vadd.f32 0.0, %v3419
    %v3421 = vpop.f32.mrf.mxu0
    %v3422 = vpop.f32.mrf.mxu0
    %v3423 = vadd.f32 0.0, %v3422
    %v3424 = vpop.f32.mrf.mxu0
    %3425 = vmatprep.mubr.bf16.mxu0 0
    %3426 = vmatmul.mubr.bf16.gmra.mxu0 %v3047
    %v3427 = vpop.f32.mrf.mxu0
    %v3428 = vadd.f32 0.0, %v3427
    %v3429 = vpop.f32.mrf.mxu0
    %v3430 = vpop.f32.mrf.mxu0
    %v3431 = vadd.f32 0.0, %v3430
    %v3432 = vpop.f32.mrf.mxu0
    %3433 = vmatprep.mubr.bf16.mxu0 0
    %3434 = vmatmul.mubr.bf16.gmra.mxu0 %v3048
    %v3435 = vpop.f32.mrf.mxu0
    %v3436 = vadd.f32 0.0, %v3435
    %v3437 = vpop.f32.mrf.mxu0
    %v3438 = vpop.f32.mrf.mxu0
    %v3439 = vadd.f32 0.0, %v3438
    %v3440 = vpop.f32.mrf.mxu0
    %3441 = vdwg.mxu0
    %v3442 = vpack.c.bf16 %v3127, %v3124
    %v3443 = vpack.c.bf16 %v3135, %v3132
    %v3444 = vpack.c.bf16 %v3143, %v3140
    %v3445 = vpack.c.bf16 %v3151, %v3148
    %v3446 = vpack.c.bf16 %v3159, %v3156
    %v3447 = vpack.c.bf16 %v3167, %v3164
    %v3448 = vpack.c.bf16 %v3175, %v3172
    %v3449 = vpack.c.bf16 %v3183, %v3180
    %v3450 = vld [vmem:[#allocation2 + $0x500] sm:$0xf]
    %v3451 = vld [vmem:[#allocation2 + $0x504] sm:$0xf]
    %v3452 = vld [vmem:[#allocation2 + $0x508] sm:$0xf]
    %v3453 = vld [vmem:[#allocation2 + $0x50c] sm:$0xf]
    %v3454 = vld [vmem:[#allocation2 + $0x510] sm:$0xf]
    %v3455 = vld [vmem:[#allocation2 + $0x514] sm:$0xf]
    %v3456 = vld [vmem:[#allocation2 + $0x518] sm:$0xf]
    %v3457 = vld [vmem:[#allocation2 + $0x51c] sm:$0xf]
    %v3458 = vld [vmem:[#allocation2 + $0x520] sm:$0xf]
    %v3459 = vld [vmem:[#allocation2 + $0x524] sm:$0xf]
    %v3460 = vld [vmem:[#allocation2 + $0x528] sm:$0xf]
    %v3461 = vld [vmem:[#allocation2 + $0x52c] sm:$0xf]
    %v3462 = vld [vmem:[#allocation2 + $0x530] sm:$0xf]
    %v3463 = vld [vmem:[#allocation2 + $0x534] sm:$0xf]
    %v3464 = vld [vmem:[#allocation2 + $0x538] sm:$0xf]
    %v3465 = vld [vmem:[#allocation2 + $0x53c] sm:$0xf]
    %v3482 = vunpack.c.l.b16 %v3450
    %v3483 = vunpack.c.l.b16 %v3451
    %v3484 = vunpack.c.l.b16 %v3452
    %v3485 = vunpack.c.l.b16 %v3453
    %v3486 = vunpack.c.l.b16 %v3454
    %v3487 = vunpack.c.l.b16 %v3455
    %v3488 = vunpack.c.l.b16 %v3456
    %v3489 = vunpack.c.l.b16 %v3457
    %v3490 = vunpack.c.l.b16 %v3458
    %v3491 = vunpack.c.l.b16 %v3459
    %v3492 = vunpack.c.l.b16 %v3460
    %v3493 = vunpack.c.l.b16 %v3461
    %v3494 = vunpack.c.l.b16 %v3462
    %v3495 = vunpack.c.l.b16 %v3463
    %v3496 = vunpack.c.l.b16 %v3464
    %v3497 = vunpack.c.l.b16 %v3465
    %v3498 = vpack.c.b16 %v3483, %v3482
    %v3499 = vpack.c.b16 %v3485, %v3484
    %v3500 = vpack.c.b16 %v3487, %v3486
    %v3501 = vpack.c.b16 %v3489, %v3488
    %v3502 = vpack.c.b16 %v3491, %v3490
    %v3503 = vpack.c.b16 %v3493, %v3492
    %v3504 = vpack.c.b16 %v3495, %v3494
    %v3505 = vpack.c.b16 %v3497, %v3496
    %3514 = vmatprep.subr.bf16.mxu0 0
    %3515 = vmatpush1.bf16.msra.mxu0 %v3505
    %3516 = vmatprep.subr.bf16.mxu0 0
    %3517 = vmatpush1.bf16.msra.mxu0 %v3504
    %3518 = vmatprep.subr.bf16.mxu0 0
    %3519 = vmatpush1.bf16.msra.mxu0 %v3503
    %3520 = vmatprep.subr.bf16.mxu0 0
    %3521 = vmatpush1.bf16.msra.mxu0 %v3502
    %3522 = vmatprep.subr.bf16.mxu0 0
    %3523 = vmatpush1.bf16.msra.mxu0 %v3501
    %3524 = vmatprep.subr.bf16.mxu0 0
    %3525 = vmatpush1.bf16.msra.mxu0 %v3500
    %3526 = vmatprep.subr.bf16.mxu0 0
    %3527 = vmatpush1.bf16.msra.mxu0 %v3499
    %3528 = vmatprep.subr.bf16.mxu0 0
    %3529 = vmatpush1.bf16.msra.mxu0 %v3498
    %3530 = vmatprep.subr.bf16.mxu0 0
    %3531 = vmatpush2.bf16.msra.mxu0 0
    %3532 = vmatprep.subr.bf16.mxu0 0
    %3533 = vmatpush2.bf16.msra.mxu0 0
    %3534 = vmatprep.subr.bf16.mxu0 0
    %3535 = vmatpush2.bf16.msra.mxu0 0
    %3536 = vmatprep.subr.bf16.mxu0 0
    %3537 = vmatpush2.bf16.msra.mxu0 0
    %3538 = vmatprep.subr.bf16.mxu0 0
    %3539 = vmatpush2.bf16.msra.mxu0 0
    %3540 = vmatprep.subr.bf16.mxu0 0
    %3541 = vmatpush2.bf16.msra.mxu0 0
    %3542 = vmatprep.subr.bf16.mxu0 0
    %3543 = vmatpush2.bf16.msra.mxu0 0
    %3544 = vmatprep.subr.bf16.mxu0 0
    %3545 = vmatpush2.bf16.msra.mxu0 0
    %3546 = vmatprep.mubr.bf16.mxu0 0
    %3547 = vmatmul.mubr.bf16.gmra.mxu0 %v3442
    %v3548 = vpop.f32.mrf.mxu0
    %v3549 = vadd.f32 0.0, %v3548
    %v3550 = vpop.f32.mrf.mxu0
    %v3551 = vpop.f32.mrf.mxu0
    %v3552 = vadd.f32 0.0, %v3551
    %v3553 = vpop.f32.mrf.mxu0
    %3554 = vmatprep.mubr.bf16.mxu0 0
    %3555 = vmatmul.mubr.bf16.gmra.mxu0 %v3443
    %v3556 = vpop.f32.mrf.mxu0
    %v3557 = vadd.f32 0.0, %v3556
    %v3558 = vpop.f32.mrf.mxu0
    %v3559 = vpop.f32.mrf.mxu0
    %v3560 = vadd.f32 0.0, %v3559
    %v3561 = vpop.f32.mrf.mxu0
    %3562 = vmatprep.mubr.bf16.mxu0 0
    %3563 = vmatmul.mubr.bf16.gmra.mxu0 %v3444
    %v3564 = vpop.f32.mrf.mxu0
    %v3565 = vadd.f32 0.0, %v3564
    %v3566 = vpop.f32.mrf.mxu0
    %v3567 = vpop.f32.mrf.mxu0
    %v3568 = vadd.f32 0.0, %v3567
    %v3569 = vpop.f32.mrf.mxu0
    %3570 = vmatprep.mubr.bf16.mxu0 0
    %3571 = vmatmul.mubr.bf16.gmra.mxu0 %v3445
    %v3572 = vpop.f32.mrf.mxu0
    %v3573 = vadd.f32 0.0, %v3572
    %v3574 = vpop.f32.mrf.mxu0
    %v3575 = vpop.f32.mrf.mxu0
    %v3576 = vadd.f32 0.0, %v3575
    %v3577 = vpop.f32.mrf.mxu0
    %3578 = vmatprep.mubr.bf16.mxu0 0
    %3579 = vmatmul.mubr.bf16.gmra.mxu0 %v3446
    %v3580 = vpop.f32.mrf.mxu0
    %v3581 = vadd.f32 0.0, %v3580
    %v3582 = vpop.f32.mrf.mxu0
    %v3583 = vpop.f32.mrf.mxu0
    %v3584 = vadd.f32 0.0, %v3583
    %v3585 = vpop.f32.mrf.mxu0
    %3586 = vmatprep.mubr.bf16.mxu0 0
    %3587 = vmatmul.mubr.bf16.gmra.mxu0 %v3447
    %v3588 = vpop.f32.mrf.mxu0
    %v3589 = vadd.f32 0.0, %v3588
    %v3590 = vpop.f32.mrf.mxu0
    %v3591 = vpop.f32.mrf.mxu0
    %v3592 = vadd.f32 0.0, %v3591
    %v3593 = vpop.f32.mrf.mxu0
    %3594 = vmatprep.mubr.bf16.mxu0 0
    %3595 = vmatmul.mubr.bf16.gmra.mxu0 %v3448
    %v3596 = vpop.f32.mrf.mxu0
    %v3597 = vadd.f32 0.0, %v3596
    %v3598 = vpop.f32.mrf.mxu0
    %v3599 = vpop.f32.mrf.mxu0
    %v3600 = vadd.f32 0.0, %v3599
    %v3601 = vpop.f32.mrf.mxu0
    %3602 = vmatprep.mubr.bf16.mxu0 0
    %3603 = vmatmul.mubr.bf16.gmra.mxu0 %v3449
    %v3604 = vpop.f32.mrf.mxu0
    %v3605 = vadd.f32 0.0, %v3604
    %v3606 = vpop.f32.mrf.mxu0
    %v3607 = vpop.f32.mrf.mxu0
    %v3608 = vadd.f32 0.0, %v3607
    %v3609 = vpop.f32.mrf.mxu0
    %3610 = vdwg.mxu0
    %v3611 = vlaneseq
    %v3612 = vshrl.u32 %v3611, 7
    %v3613 = vsub.s32 3, %v3612
    %v3614 = vrot.slane %v61, %v3613
    %v3615 = vadd.f32 %v3614, %v3549
    %v3616 = vadd.f32 %v3614, %v3552
    %v3617 = vadd.f32 %v3614, %v3557
    %v3618 = vadd.f32 %v3614, %v3560
    %v3619 = vadd.f32 %v3614, %v3565
    %v3620 = vadd.f32 %v3614, %v3568
    %v3621 = vadd.f32 %v3614, %v3573
    %v3622 = vadd.f32 %v3614, %v3576
    %v3623 = vadd.f32 %v3614, %v3581
    %v3624 = vadd.f32 %v3614, %v3584
    %v3625 = vadd.f32 %v3614, %v3589
    %v3626 = vadd.f32 %v3614, %v3592
    %v3627 = vadd.f32 %v3614, %v3597
    %v3628 = vadd.f32 %v3614, %v3600
    %v3629 = vadd.f32 %v3614, %v3605
    %v3630 = vadd.f32 %v3614, %v3608
    %v3631 = vpack.c.bf16 %v3191, %v3188
    %v3632 = vpack.c.bf16 %v3199, %v3196
    %v3633 = vpack.c.bf16 %v3207, %v3204
    %v3634 = vpack.c.bf16 %v3215, %v3212
    %v3635 = vpack.c.bf16 %v3223, %v3220
    %v3636 = vpack.c.bf16 %v3231, %v3228
    %v3637 = vpack.c.bf16 %v3239, %v3236
    %v3638 = vpack.c.bf16 %v3247, %v3244
    %v3639 = vld [vmem:[#allocation2 + $0x540] sm:$0xf]
    %v3640 = vld [vmem:[#allocation2 + $0x544] sm:$0xf]
    %v3641 = vld [vmem:[#allocation2 + $0x548] sm:$0xf]
    %v3642 = vld [vmem:[#allocation2 + $0x54c] sm:$0xf]
    %v3643 = vld [vmem:[#allocation2 + $0x550] sm:$0xf]
    %v3644 = vld [vmem:[#allocation2 + $0x554] sm:$0xf]
    %v3645 = vld [vmem:[#allocation2 + $0x558] sm:$0xf]
    %v3646 = vld [vmem:[#allocation2 + $0x55c] sm:$0xf]
    %v3647 = vld [vmem:[#allocation2 + $0x560] sm:$0xf]
    %v3648 = vld [vmem:[#allocation2 + $0x564] sm:$0xf]
    %v3649 = vld [vmem:[#allocation2 + $0x568] sm:$0xf]
    %v3650 = vld [vmem:[#allocation2 + $0x56c] sm:$0xf]
    %v3651 = vld [vmem:[#allocation2 + $0x570] sm:$0xf]
    %v3652 = vld [vmem:[#allocation2 + $0x574] sm:$0xf]
    %v3653 = vld [vmem:[#allocation2 + $0x578] sm:$0xf]
    %v3654 = vld [vmem:[#allocation2 + $0x57c] sm:$0xf]
    %v3671 = vunpack.c.l.b16 %v3639
    %v3672 = vunpack.c.l.b16 %v3640
    %v3673 = vunpack.c.l.b16 %v3641
    %v3674 = vunpack.c.l.b16 %v3642
    %v3675 = vunpack.c.l.b16 %v3643
    %v3676 = vunpack.c.l.b16 %v3644
    %v3677 = vunpack.c.l.b16 %v3645
    %v3678 = vunpack.c.l.b16 %v3646
    %v3679 = vunpack.c.l.b16 %v3647
    %v3680 = vunpack.c.l.b16 %v3648
    %v3681 = vunpack.c.l.b16 %v3649
    %v3682 = vunpack.c.l.b16 %v3650
    %v3683 = vunpack.c.l.b16 %v3651
    %v3684 = vunpack.c.l.b16 %v3652
    %v3685 = vunpack.c.l.b16 %v3653
    %v3686 = vunpack.c.l.b16 %v3654
    %v3687 = vpack.c.b16 %v3672, %v3671
    %v3688 = vpack.c.b16 %v3674, %v3673
    %v3689 = vpack.c.b16 %v3676, %v3675
    %v3690 = vpack.c.b16 %v3678, %v3677
    %v3691 = vpack.c.b16 %v3680, %v3679
    %v3692 = vpack.c.b16 %v3682, %v3681
    %v3693 = vpack.c.b16 %v3684, %v3683
    %v3694 = vpack.c.b16 %v3686, %v3685
    %3703 = vmatprep.subr.bf16.mxu0 0
    %3704 = vmatpush1.bf16.msra.mxu0 %v3694
    %3705 = vmatprep.subr.bf16.mxu0 0
    %3706 = vmatpush1.bf16.msra.mxu0 %v3693
    %3707 = vmatprep.subr.bf16.mxu0 0
    %3708 = vmatpush1.bf16.msra.mxu0 %v3692
    %3709 = vmatprep.subr.bf16.mxu0 0
    %3710 = vmatpush1.bf16.msra.mxu0 %v3691
    %3711 = vmatprep.subr.bf16.mxu0 0
    %3712 = vmatpush1.bf16.msra.mxu0 %v3690
    %3713 = vmatprep.subr.bf16.mxu0 0
    %3714 = vmatpush1.bf16.msra.mxu0 %v3689
    %3715 = vmatprep.subr.bf16.mxu0 0
    %3716 = vmatpush1.bf16.msra.mxu0 %v3688
    %3717 = vmatprep.subr.bf16.mxu0 0
    %3718 = vmatpush1.bf16.msra.mxu0 %v3687
    %3719 = vmatprep.subr.bf16.mxu0 0
    %3720 = vmatpush2.bf16.msra.mxu0 0
    %3721 = vmatprep.subr.bf16.mxu0 0
    %3722 = vmatpush2.bf16.msra.mxu0 0
    %3723 = vmatprep.subr.bf16.mxu0 0
    %3724 = vmatpush2.bf16.msra.mxu0 0
    %3725 = vmatprep.subr.bf16.mxu0 0
    %3726 = vmatpush2.bf16.msra.mxu0 0
    %3727 = vmatprep.subr.bf16.mxu0 0
    %3728 = vmatpush2.bf16.msra.mxu0 0
    %3729 = vmatprep.subr.bf16.mxu0 0
    %3730 = vmatpush2.bf16.msra.mxu0 0
    %3731 = vmatprep.subr.bf16.mxu0 0
    %3732 = vmatpush2.bf16.msra.mxu0 0
    %3733 = vmatprep.subr.bf16.mxu0 0
    %3734 = vmatpush2.bf16.msra.mxu0 0
    %3735 = vmatprep.mubr.bf16.mxu0 0
    %3736 = vmatmul.mubr.bf16.gmra.mxu0 %v3631
    %v3737 = vpop.f32.mrf.mxu0
    %v3738 = vadd.f32 0.0, %v3737
    %v3739 = vpop.f32.mrf.mxu0
    %v3740 = vpop.f32.mrf.mxu0
    %v3741 = vadd.f32 0.0, %v3740
    %v3742 = vpop.f32.mrf.mxu0
    %3743 = vmatprep.mubr.bf16.mxu0 0
    %3744 = vmatmul.mubr.bf16.gmra.mxu0 %v3632
    %v3745 = vpop.f32.mrf.mxu0
    %v3746 = vadd.f32 0.0, %v3745
    %v3747 = vpop.f32.mrf.mxu0
    %v3748 = vpop.f32.mrf.mxu0
    %v3749 = vadd.f32 0.0, %v3748
    %v3750 = vpop.f32.mrf.mxu0
    %3751 = vmatprep.mubr.bf16.mxu0 0
    %3752 = vmatmul.mubr.bf16.gmra.mxu0 %v3633
    %v3753 = vpop.f32.mrf.mxu0
    %v3754 = vadd.f32 0.0, %v3753
    %v3755 = vpop.f32.mrf.mxu0
    %v3756 = vpop.f32.mrf.mxu0
    %v3757 = vadd.f32 0.0, %v3756
    %v3758 = vpop.f32.mrf.mxu0
    %3759 = vmatprep.mubr.bf16.mxu0 0
    %3760 = vmatmul.mubr.bf16.gmra.mxu0 %v3634
    %v3761 = vpop.f32.mrf.mxu0
    %v3762 = vadd.f32 0.0, %v3761
    %v3763 = vpop.f32.mrf.mxu0
    %v3764 = vpop.f32.mrf.mxu0
    %v3765 = vadd.f32 0.0, %v3764
    %v3766 = vpop.f32.mrf.mxu0
    %3767 = vmatprep.mubr.bf16.mxu0 0
    %3768 = vmatmul.mubr.bf16.gmra.mxu0 %v3635
    %v3769 = vpop.f32.mrf.mxu0
    %v3770 = vadd.f32 0.0, %v3769
    %v3771 = vpop.f32.mrf.mxu0
    %v3772 = vpop.f32.mrf.mxu0
    %v3773 = vadd.f32 0.0, %v3772
    %v3774 = vpop.f32.mrf.mxu0
    %3775 = vmatprep.mubr.bf16.mxu0 0
    %3776 = vmatmul.mubr.bf16.gmra.mxu0 %v3636
    %v3777 = vpop.f32.mrf.mxu0
    %v3778 = vadd.f32 0.0, %v3777
    %v3779 = vpop.f32.mrf.mxu0
    %v3780 = vpop.f32.mrf.mxu0
    %v3781 = vadd.f32 0.0, %v3780
    %v3782 = vpop.f32.mrf.mxu0
    %3783 = vmatprep.mubr.bf16.mxu0 0
    %3784 = vmatmul.mubr.bf16.gmra.mxu0 %v3637
    %v3785 = vpop.f32.mrf.mxu0
    %v3786 = vadd.f32 0.0, %v3785
    %v3787 = vpop.f32.mrf.mxu0
    %v3788 = vpop.f32.mrf.mxu0
    %v3789 = vadd.f32 0.0, %v3788
    %v3790 = vpop.f32.mrf.mxu0
    %3791 = vmatprep.mubr.bf16.mxu0 0
    %3792 = vmatmul.mubr.bf16.gmra.mxu0 %v3638
    %v3793 = vpop.f32.mrf.mxu0
    %v3794 = vadd.f32 0.0, %v3793
    %v3795 = vpop.f32.mrf.mxu0
    %v3796 = vpop.f32.mrf.mxu0
    %v3797 = vadd.f32 0.0, %v3796
    %v3798 = vpop.f32.mrf.mxu0
    %3799 = vdwg.mxu0
    %v3800 = vadd.f32 %v3615, %v3738
    %v3801 = vadd.f32 %v3616, %v3741
    %v3802 = vadd.f32 %v3617, %v3746
    %v3803 = vadd.f32 %v3618, %v3749
    %v3804 = vadd.f32 %v3619, %v3754
    %v3805 = vadd.f32 %v3620, %v3757
    %v3806 = vadd.f32 %v3621, %v3762
    %v3807 = vadd.f32 %v3622, %v3765
    %v3808 = vadd.f32 %v3623, %v3770
    %v3809 = vadd.f32 %v3624, %v3773
    %v3810 = vadd.f32 %v3625, %v3778
    %v3811 = vadd.f32 %v3626, %v3781
    %v3812 = vadd.f32 %v3627, %v3786
    %v3813 = vadd.f32 %v3628, %v3789
    %v3814 = vadd.f32 %v3629, %v3794
    %v3815 = vadd.f32 %v3630, %v3797
    %v3816 = vpack.c.bf16 %v3255, %v3252
    %v3817 = vpack.c.bf16 %v3263, %v3260
    %v3818 = vpack.c.bf16 %v3271, %v3268
    %v3819 = vpack.c.bf16 %v3279, %v3276
    %v3820 = vpack.c.bf16 %v3287, %v3284
    %v3821 = vpack.c.bf16 %v3295, %v3292
    %v3822 = vpack.c.bf16 %v3303, %v3300
    %v3823 = vpack.c.bf16 %v3311, %v3308
    %v3824 = vld [vmem:[#allocation2 + $0x580] sm:$0xf]
    %v3825 = vld [vmem:[#allocation2 + $0x584] sm:$0xf]
    %v3826 = vld [vmem:[#allocation2 + $0x588] sm:$0xf]
    %v3827 = vld [vmem:[#allocation2 + $0x58c] sm:$0xf]
    %v3828 = vld [vmem:[#allocation2 + $0x590] sm:$0xf]
    %v3829 = vld [vmem:[#allocation2 + $0x594] sm:$0xf]
    %v3830 = vld [vmem:[#allocation2 + $0x598] sm:$0xf]
    %v3831 = vld [vmem:[#allocation2 + $0x59c] sm:$0xf]
    %v3832 = vld [vmem:[#allocation2 + $0x5a0] sm:$0xf]
    %v3833 = vld [vmem:[#allocation2 + $0x5a4] sm:$0xf]
    %v3834 = vld [vmem:[#allocation2 + $0x5a8] sm:$0xf]
    %v3835 = vld [vmem:[#allocation2 + $0x5ac] sm:$0xf]
    %v3836 = vld [vmem:[#allocation2 + $0x5b0] sm:$0xf]
    %v3837 = vld [vmem:[#allocation2 + $0x5b4] sm:$0xf]
    %v3838 = vld [vmem:[#allocation2 + $0x5b8] sm:$0xf]
    %v3839 = vld [vmem:[#allocation2 + $0x5bc] sm:$0xf]
    %v3856 = vunpack.c.l.b16 %v3824
    %v3857 = vunpack.c.l.b16 %v3825
    %v3858 = vunpack.c.l.b16 %v3826
    %v3859 = vunpack.c.l.b16 %v3827
    %v3860 = vunpack.c.l.b16 %v3828
    %v3861 = vunpack.c.l.b16 %v3829
    %v3862 = vunpack.c.l.b16 %v3830
    %v3863 = vunpack.c.l.b16 %v3831
    %v3864 = vunpack.c.l.b16 %v3832
    %v3865 = vunpack.c.l.b16 %v3833
    %v3866 = vunpack.c.l.b16 %v3834
    %v3867 = vunpack.c.l.b16 %v3835
    %v3868 = vunpack.c.l.b16 %v3836
    %v3869 = vunpack.c.l.b16 %v3837
    %v3870 = vunpack.c.l.b16 %v3838
    %v3871 = vunpack.c.l.b16 %v3839
    %v3872 = vpack.c.b16 %v3857, %v3856
    %v3873 = vpack.c.b16 %v3859, %v3858
    %v3874 = vpack.c.b16 %v3861, %v3860
    %v3875 = vpack.c.b16 %v3863, %v3862
    %v3876 = vpack.c.b16 %v3865, %v3864
    %v3877 = vpack.c.b16 %v3867, %v3866
    %v3878 = vpack.c.b16 %v3869, %v3868
    %v3879 = vpack.c.b16 %v3871, %v3870
    %3888 = vmatprep.subr.bf16.mxu0 0
    %3889 = vmatpush1.bf16.msra.mxu0 %v3879
    %3890 = vmatprep.subr.bf16.mxu0 0
    %3891 = vmatpush1.bf16.msra.mxu0 %v3878
    %3892 = vmatprep.subr.bf16.mxu0 0
    %3893 = vmatpush1.bf16.msra.mxu0 %v3877
    %3894 = vmatprep.subr.bf16.mxu0 0
    %3895 = vmatpush1.bf16.msra.mxu0 %v3876
    %3896 = vmatprep.subr.bf16.mxu0 0
    %3897 = vmatpush1.bf16.msra.mxu0 %v3875
    %3898 = vmatprep.subr.bf16.mxu0 0
    %3899 = vmatpush1.bf16.msra.mxu0 %v3874
    %3900 = vmatprep.subr.bf16.mxu0 0
    %3901 = vmatpush1.bf16.msra.mxu0 %v3873
    %3902 = vmatprep.subr.bf16.mxu0 0
    %3903 = vmatpush1.bf16.msra.mxu0 %v3872
    %3904 = vmatprep.subr.bf16.mxu0 0
    %3905 = vmatpush2.bf16.msra.mxu0 0
    %3906 = vmatprep.subr.bf16.mxu0 0
    %3907 = vmatpush2.bf16.msra.mxu0 0
    %3908 = vmatprep.subr.bf16.mxu0 0
    %3909 = vmatpush2.bf16.msra.mxu0 0
    %3910 = vmatprep.subr.bf16.mxu0 0
    %3911 = vmatpush2.bf16.msra.mxu0 0
    %3912 = vmatprep.subr.bf16.mxu0 0
    %3913 = vmatpush2.bf16.msra.mxu0 0
    %3914 = vmatprep.subr.bf16.mxu0 0
    %3915 = vmatpush2.bf16.msra.mxu0 0
    %3916 = vmatprep.subr.bf16.mxu0 0
    %3917 = vmatpush2.bf16.msra.mxu0 0
    %3918 = vmatprep.subr.bf16.mxu0 0
    %3919 = vmatpush2.bf16.msra.mxu0 0
    %3920 = vmatprep.mubr.bf16.mxu0 0
    %3921 = vmatmul.mubr.bf16.gmra.mxu0 %v3816
    %v3922 = vpop.f32.mrf.mxu0
    %v3923 = vadd.f32 0.0, %v3922
    %v3924 = vpop.f32.mrf.mxu0
    %v3925 = vpop.f32.mrf.mxu0
    %v3926 = vadd.f32 0.0, %v3925
    %v3927 = vpop.f32.mrf.mxu0
    %3928 = vmatprep.mubr.bf16.mxu0 0
    %3929 = vmatmul.mubr.bf16.gmra.mxu0 %v3817
    %v3930 = vpop.f32.mrf.mxu0
    %v3931 = vadd.f32 0.0, %v3930
    %v3932 = vpop.f32.mrf.mxu0
    %v3933 = vpop.f32.mrf.mxu0
    %v3934 = vadd.f32 0.0, %v3933
    %v3935 = vpop.f32.mrf.mxu0
    %3936 = vmatprep.mubr.bf16.mxu0 0
    %3937 = vmatmul.mubr.bf16.gmra.mxu0 %v3818
    %v3938 = vpop.f32.mrf.mxu0
    %v3939 = vadd.f32 0.0, %v3938
    %v3940 = vpop.f32.mrf.mxu0
    %v3941 = vpop.f32.mrf.mxu0
    %v3942 = vadd.f32 0.0, %v3941
    %v3943 = vpop.f32.mrf.mxu0
    %3944 = vmatprep.mubr.bf16.mxu0 0
    %3945 = vmatmul.mubr.bf16.gmra.mxu0 %v3819
    %v3946 = vpop.f32.mrf.mxu0
    %v3947 = vadd.f32 0.0, %v3946
    %v3948 = vpop.f32.mrf.mxu0
    %v3949 = vpop.f32.mrf.mxu0
    %v3950 = vadd.f32 0.0, %v3949
    %v3951 = vpop.f32.mrf.mxu0
    %3952 = vmatprep.mubr.bf16.mxu0 0
    %3953 = vmatmul.mubr.bf16.gmra.mxu0 %v3820
    %v3954 = vpop.f32.mrf.mxu0
    %v3955 = vadd.f32 0.0, %v3954
    %v3956 = vpop.f32.mrf.mxu0
    %v3957 = vpop.f32.mrf.mxu0
    %v3958 = vadd.f32 0.0, %v3957
    %v3959 = vpop.f32.mrf.mxu0
    %3960 = vmatprep.mubr.bf16.mxu0 0
    %3961 = vmatmul.mubr.bf16.gmra.mxu0 %v3821
    %v3962 = vpop.f32.mrf.mxu0
    %v3963 = vadd.f32 0.0, %v3962
    %v3964 = vpop.f32.mrf.mxu0
    %v3965 = vpop.f32.mrf.mxu0
    %v3966 = vadd.f32 0.0, %v3965
    %v3967 = vpop.f32.mrf.mxu0
    %3968 = vmatprep.mubr.bf16.mxu0 0
    %3969 = vmatmul.mubr.bf16.gmra.mxu0 %v3822
    %v3970 = vpop.f32.mrf.mxu0
    %v3971 = vadd.f32 0.0, %v3970
    %v3972 = vpop.f32.mrf.mxu0
    %v3973 = vpop.f32.mrf.mxu0
    %v3974 = vadd.f32 0.0, %v3973
    %v3975 = vpop.f32.mrf.mxu0
    %3976 = vmatprep.mubr.bf16.mxu0 0
    %3977 = vmatmul.mubr.bf16.gmra.mxu0 %v3823
    %v3978 = vpop.f32.mrf.mxu0
    %v3979 = vadd.f32 0.0, %v3978
    %v3980 = vpop.f32.mrf.mxu0
    %v3981 = vpop.f32.mrf.mxu0
    %v3982 = vadd.f32 0.0, %v3981
    %v3983 = vpop.f32.mrf.mxu0
    %3984 = vdwg.mxu0
    %v3985 = vadd.f32 %v3800, %v3923
    %v3986 = vadd.f32 %v3801, %v3926
    %v3987 = vadd.f32 %v3802, %v3931
    %v3988 = vadd.f32 %v3803, %v3934
    %v3989 = vadd.f32 %v3804, %v3939
    %v3990 = vadd.f32 %v3805, %v3942
    %v3991 = vadd.f32 %v3806, %v3947
    %v3992 = vadd.f32 %v3807, %v3950
    %v3993 = vadd.f32 %v3808, %v3955
    %v3994 = vadd.f32 %v3809, %v3958
    %v3995 = vadd.f32 %v3810, %v3963
    %v3996 = vadd.f32 %v3811, %v3966
    %v3997 = vadd.f32 %v3812, %v3971
    %v3998 = vadd.f32 %v3813, %v3974
    %v3999 = vadd.f32 %v3814, %v3979
    %v4000 = vadd.f32 %v3815, %v3982
    %v4001 = vpack.c.bf16 %v3319, %v3316
    %v4002 = vpack.c.bf16 %v3327, %v3324
    %v4003 = vpack.c.bf16 %v3335, %v3332
    %v4004 = vpack.c.bf16 %v3343, %v3340
    %v4005 = vpack.c.bf16 %v3351, %v3348
    %v4006 = vpack.c.bf16 %v3359, %v3356
    %v4007 = vpack.c.bf16 %v3367, %v3364
    %v4008 = vpack.c.bf16 %v3375, %v3372
    %v4009 = vld [vmem:[#allocation2 + $0x5c0] sm:$0xf]
    %v4010 = vld [vmem:[#allocation2 + $0x5c4] sm:$0xf]
    %v4011 = vld [vmem:[#allocation2 + $0x5c8] sm:$0xf]
    %v4012 = vld [vmem:[#allocation2 + $0x5cc] sm:$0xf]
    %v4013 = vld [vmem:[#allocation2 + $0x5d0] sm:$0xf]
    %v4014 = vld [vmem:[#allocation2 + $0x5d4] sm:$0xf]
    %v4015 = vld [vmem:[#allocation2 + $0x5d8] sm:$0xf]
    %v4016 = vld [vmem:[#allocation2 + $0x5dc] sm:$0xf]
    %v4017 = vld [vmem:[#allocation2 + $0x5e0] sm:$0xf]
    %v4018 = vld [vmem:[#allocation2 + $0x5e4] sm:$0xf]
    %v4019 = vld [vmem:[#allocation2 + $0x5e8] sm:$0xf]
    %v4020 = vld [vmem:[#allocation2 + $0x5ec] sm:$0xf]
    %v4021 = vld [vmem:[#allocation2 + $0x5f0] sm:$0xf]
    %v4022 = vld [vmem:[#allocation2 + $0x5f4] sm:$0xf]
    %v4023 = vld [vmem:[#allocation2 + $0x5f8] sm:$0xf]
    %v4024 = vld [vmem:[#allocation2 + $0x5fc] sm:$0xf]
    %v4041 = vunpack.c.l.b16 %v4009
    %v4042 = vunpack.c.l.b16 %v4010
    %v4043 = vunpack.c.l.b16 %v4011
    %v4044 = vunpack.c.l.b16 %v4012
    %v4045 = vunpack.c.l.b16 %v4013
    %v4046 = vunpack.c.l.b16 %v4014
    %v4047 = vunpack.c.l.b16 %v4015
    %v4048 = vunpack.c.l.b16 %v4016
    %v4049 = vunpack.c.l.b16 %v4017
    %v4050 = vunpack.c.l.b16 %v4018
    %v4051 = vunpack.c.l.b16 %v4019
    %v4052 = vunpack.c.l.b16 %v4020
    %v4053 = vunpack.c.l.b16 %v4021
    %v4054 = vunpack.c.l.b16 %v4022
    %v4055 = vunpack.c.l.b16 %v4023
    %v4056 = vunpack.c.l.b16 %v4024
    %v4057 = vpack.c.b16 %v4042, %v4041
    %v4058 = vpack.c.b16 %v4044, %v4043
    %v4059 = vpack.c.b16 %v4046, %v4045
    %v4060 = vpack.c.b16 %v4048, %v4047
    %v4061 = vpack.c.b16 %v4050, %v4049
    %v4062 = vpack.c.b16 %v4052, %v4051
    %v4063 = vpack.c.b16 %v4054, %v4053
    %v4064 = vpack.c.b16 %v4056, %v4055
    %4073 = vmatprep.subr.bf16.mxu0 0
    %4074 = vmatpush1.bf16.msra.mxu0 %v4064
    %4075 = vmatprep.subr.bf16.mxu0 0
    %4076 = vmatpush1.bf16.msra.mxu0 %v4063
    %4077 = vmatprep.subr.bf16.mxu0 0
    %4078 = vmatpush1.bf16.msra.mxu0 %v4062
    %4079 = vmatprep.subr.bf16.mxu0 0
    %4080 = vmatpush1.bf16.msra.mxu0 %v4061
    %4081 = vmatprep.subr.bf16.mxu0 0
    %4082 = vmatpush1.bf16.msra.mxu0 %v4060
    %4083 = vmatprep.subr.bf16.mxu0 0
    %4084 = vmatpush1.bf16.msra.mxu0 %v4059
    %4085 = vmatprep.subr.bf16.mxu0 0
    %4086 = vmatpush1.bf16.msra.mxu0 %v4058
    %4087 = vmatprep.subr.bf16.mxu0 0
    %4088 = vmatpush1.bf16.msra.mxu0 %v4057
    %4089 = vmatprep.subr.bf16.mxu0 0
    %4090 = vmatpush2.bf16.msra.mxu0 0
    %4091 = vmatprep.subr.bf16.mxu0 0
    %4092 = vmatpush2.bf16.msra.mxu0 0
    %4093 = vmatprep.subr.bf16.mxu0 0
    %4094 = vmatpush2.bf16.msra.mxu0 0
    %4095 = vmatprep.subr.bf16.mxu0 0
    %4096 = vmatpush2.bf16.msra.mxu0 0
    %4097 = vmatprep.subr.bf16.mxu0 0
    %4098 = vmatpush2.bf16.msra.mxu0 0
    %4099 = vmatprep.subr.bf16.mxu0 0
    %4100 = vmatpush2.bf16.msra.mxu0 0
    %4101 = vmatprep.subr.bf16.mxu0 0
    %4102 = vmatpush2.bf16.msra.mxu0 0
    %4103 = vmatprep.subr.bf16.mxu0 0
    %4104 = vmatpush2.bf16.msra.mxu0 0
    %4105 = vmatprep.mubr.bf16.mxu0 0
    %4106 = vmatmul.mubr.bf16.gmra.mxu0 %v4001
    %v4107 = vpop.f32.mrf.mxu0
    %v4108 = vadd.f32 0.0, %v4107
    %v4109 = vpop.f32.mrf.mxu0
    %v4110 = vpop.f32.mrf.mxu0
    %v4111 = vadd.f32 0.0, %v4110
    %v4112 = vpop.f32.mrf.mxu0
    %4113 = vmatprep.mubr.bf16.mxu0 0
    %4114 = vmatmul.mubr.bf16.gmra.mxu0 %v4002
    %v4115 = vpop.f32.mrf.mxu0
    %v4116 = vadd.f32 0.0, %v4115
    %v4117 = vpop.f32.mrf.mxu0
    %v4118 = vpop.f32.mrf.mxu0
    %v4119 = vadd.f32 0.0, %v4118
    %v4120 = vpop.f32.mrf.mxu0
    %4121 = vmatprep.mubr.bf16.mxu0 0
    %4122 = vmatmul.mubr.bf16.gmra.mxu0 %v4003
    %v4123 = vpop.f32.mrf.mxu0
    %v4124 = vadd.f32 0.0, %v4123
    %v4125 = vpop.f32.mrf.mxu0
    %v4126 = vpop.f32.mrf.mxu0
    %v4127 = vadd.f32 0.0, %v4126
    %v4128 = vpop.f32.mrf.mxu0
    %4129 = vmatprep.mubr.bf16.mxu0 0
    %4130 = vmatmul.mubr.bf16.gmra.mxu0 %v4004
    %v4131 = vpop.f32.mrf.mxu0
    %v4132 = vadd.f32 0.0, %v4131
    %v4133 = vpop.f32.mrf.mxu0
    %v4134 = vpop.f32.mrf.mxu0
    %v4135 = vadd.f32 0.0, %v4134
    %v4136 = vpop.f32.mrf.mxu0
    %4137 = vmatprep.mubr.bf16.mxu0 0
    %4138 = vmatmul.mubr.bf16.gmra.mxu0 %v4005
    %v4139 = vpop.f32.mrf.mxu0
    %v4140 = vadd.f32 0.0, %v4139
    %v4141 = vpop.f32.mrf.mxu0
    %v4142 = vpop.f32.mrf.mxu0
    %v4143 = vadd.f32 0.0, %v4142
    %v4144 = vpop.f32.mrf.mxu0
    %4145 = vmatprep.mubr.bf16.mxu0 0
    %4146 = vmatmul.mubr.bf16.gmra.mxu0 %v4006
    %v4147 = vpop.f32.mrf.mxu0
    %v4148 = vadd.f32 0.0, %v4147
    %v4149 = vpop.f32.mrf.mxu0
    %v4150 = vpop.f32.mrf.mxu0
    %v4151 = vadd.f32 0.0, %v4150
    %v4152 = vpop.f32.mrf.mxu0
    %4153 = vmatprep.mubr.bf16.mxu0 0
    %4154 = vmatmul.mubr.bf16.gmra.mxu0 %v4007
    %v4155 = vpop.f32.mrf.mxu0
    %v4156 = vadd.f32 0.0, %v4155
    %v4157 = vpop.f32.mrf.mxu0
    %v4158 = vpop.f32.mrf.mxu0
    %v4159 = vadd.f32 0.0, %v4158
    %v4160 = vpop.f32.mrf.mxu0
    %4161 = vmatprep.mubr.bf16.mxu0 0
    %4162 = vmatmul.mubr.bf16.gmra.mxu0 %v4008
    %v4163 = vpop.f32.mrf.mxu0
    %v4164 = vadd.f32 0.0, %v4163
    %v4165 = vpop.f32.mrf.mxu0
    %v4166 = vpop.f32.mrf.mxu0
    %v4167 = vadd.f32 0.0, %v4166
    %v4168 = vpop.f32.mrf.mxu0
    %4169 = vdwg.mxu0
    %v4170 = vadd.f32 %v3985, %v4108
    %v4171 = vadd.f32 %v3986, %v4111
    %v4172 = vadd.f32 %v3987, %v4116
    %v4173 = vadd.f32 %v3988, %v4119
    %v4174 = vadd.f32 %v3989, %v4124
    %v4175 = vadd.f32 %v3990, %v4127
    %v4176 = vadd.f32 %v3991, %v4132
    %v4177 = vadd.f32 %v3992, %v4135
    %v4178 = vadd.f32 %v3993, %v4140
    %v4179 = vadd.f32 %v3994, %v4143
    %v4180 = vadd.f32 %v3995, %v4148
    %v4181 = vadd.f32 %v3996, %v4151
    %v4182 = vadd.f32 %v3997, %v4156
    %v4183 = vadd.f32 %v3998, %v4159
    %v4184 = vadd.f32 %v3999, %v4164
    %v4185 = vadd.f32 %v4000, %v4167
    %v4186 = vpack.c.bf16 %v3383, %v3380
    %v4187 = vpack.c.bf16 %v3391, %v3388
    %v4188 = vpack.c.bf16 %v3399, %v3396
    %v4189 = vpack.c.bf16 %v3407, %v3404
    %v4190 = vpack.c.bf16 %v3415, %v3412
    %v4191 = vpack.c.bf16 %v3423, %v3420
    %v4192 = vpack.c.bf16 %v3431, %v3428
    %v4193 = vpack.c.bf16 %v3439, %v3436
    %v4194 = vld [vmem:[#allocation2 + $0x600] sm:$0xf]
    %v4195 = vld [vmem:[#allocation2 + $0x604] sm:$0xf]
    %v4196 = vld [vmem:[#allocation2 + $0x608] sm:$0xf]
    %v4197 = vld [vmem:[#allocation2 + $0x60c] sm:$0xf]
    %v4198 = vld [vmem:[#allocation2 + $0x610] sm:$0xf]
    %v4199 = vld [vmem:[#allocation2 + $0x614] sm:$0xf]
    %v4200 = vld [vmem:[#allocation2 + $0x618] sm:$0xf]
    %v4201 = vld [vmem:[#allocation2 + $0x61c] sm:$0xf]
    %v4202 = vld [vmem:[#allocation2 + $0x620] sm:$0xf]
    %v4203 = vld [vmem:[#allocation2 + $0x624] sm:$0xf]
    %v4204 = vld [vmem:[#allocation2 + $0x628] sm:$0xf]
    %v4205 = vld [vmem:[#allocation2 + $0x62c] sm:$0xf]
    %v4206 = vld [vmem:[#allocation2 + $0x630] sm:$0xf]
    %v4207 = vld [vmem:[#allocation2 + $0x634] sm:$0xf]
    %v4208 = vld [vmem:[#allocation2 + $0x638] sm:$0xf]
    %v4209 = vld [vmem:[#allocation2 + $0x63c] sm:$0xf]
    %v4226 = vunpack.c.l.b16 %v4194
    %v4227 = vunpack.c.l.b16 %v4195
    %v4228 = vunpack.c.l.b16 %v4196
    %v4229 = vunpack.c.l.b16 %v4197
    %v4230 = vunpack.c.l.b16 %v4198
    %v4231 = vunpack.c.l.b16 %v4199
    %v4232 = vunpack.c.l.b16 %v4200
    %v4233 = vunpack.c.l.b16 %v4201
    %v4234 = vunpack.c.l.b16 %v4202
    %v4235 = vunpack.c.l.b16 %v4203
    %v4236 = vunpack.c.l.b16 %v4204
    %v4237 = vunpack.c.l.b16 %v4205
    %v4238 = vunpack.c.l.b16 %v4206
    %v4239 = vunpack.c.l.b16 %v4207
    %v4240 = vunpack.c.l.b16 %v4208
    %v4241 = vunpack.c.l.b16 %v4209
    %v4242 = vpack.c.b16 %v4227, %v4226
    %v4243 = vpack.c.b16 %v4229, %v4228
    %v4244 = vpack.c.b16 %v4231, %v4230
    %v4245 = vpack.c.b16 %v4233, %v4232
    %v4246 = vpack.c.b16 %v4235, %v4234
    %v4247 = vpack.c.b16 %v4237, %v4236
    %v4248 = vpack.c.b16 %v4239, %v4238
    %v4249 = vpack.c.b16 %v4241, %v4240
    %4258 = vmatprep.subr.bf16.mxu0 0
    %4259 = vmatpush1.bf16.msra.mxu0 %v4249
    %4260 = vmatprep.subr.bf16.mxu0 0
    %4261 = vmatpush1.bf16.msra.mxu0 %v4248
    %4262 = vmatprep.subr.bf16.mxu0 0
    %4263 = vmatpush1.bf16.msra.mxu0 %v4247
    %4264 = vmatprep.subr.bf16.mxu0 0
    %4265 = vmatpush1.bf16.msra.mxu0 %v4246
    %4266 = vmatprep.subr.bf16.mxu0 0
    %4267 = vmatpush1.bf16.msra.mxu0 %v4245
    %4268 = vmatprep.subr.bf16.mxu0 0
    %4269 = vmatpush1.bf16.msra.mxu0 %v4244
    %4270 = vmatprep.subr.bf16.mxu0 0
    %4271 = vmatpush1.bf16.msra.mxu0 %v4243
    %4272 = vmatprep.subr.bf16.mxu0 0
    %4273 = vmatpush1.bf16.msra.mxu0 %v4242
    %4274 = vmatprep.subr.bf16.mxu0 0
    %4275 = vmatpush2.bf16.msra.mxu0 0
    %4276 = vmatprep.subr.bf16.mxu0 0
    %4277 = vmatpush2.bf16.msra.mxu0 0
    %4278 = vmatprep.subr.bf16.mxu0 0
    %4279 = vmatpush2.bf16.msra.mxu0 0
    %4280 = vmatprep.subr.bf16.mxu0 0
    %4281 = vmatpush2.bf16.msra.mxu0 0
    %4282 = vmatprep.subr.bf16.mxu0 0
    %4283 = vmatpush2.bf16.msra.mxu0 0
    %4284 = vmatprep.subr.bf16.mxu0 0
    %4285 = vmatpush2.bf16.msra.mxu0 0
    %4286 = vmatprep.subr.bf16.mxu0 0
    %4287 = vmatpush2.bf16.msra.mxu0 0
    %4288 = vmatprep.subr.bf16.mxu0 0
    %4289 = vmatpush2.bf16.msra.mxu0 0
    %4290 = vmatprep.mubr.bf16.mxu0 0
    %4291 = vmatmul.mubr.bf16.gmra.mxu0 %v4186
    %v4292 = vpop.f32.mrf.mxu0
    %v4293 = vadd.f32 0.0, %v4292
    %v4294 = vpop.f32.mrf.mxu0
    %v4295 = vpop.f32.mrf.mxu0
    %v4296 = vadd.f32 0.0, %v4295
    %v4297 = vpop.f32.mrf.mxu0
    %4298 = vmatprep.mubr.bf16.mxu0 0
    %4299 = vmatmul.mubr.bf16.gmra.mxu0 %v4187
    %v4300 = vpop.f32.mrf.mxu0
    %v4301 = vadd.f32 0.0, %v4300
    %v4302 = vpop.f32.mrf.mxu0
    %v4303 = vpop.f32.mrf.mxu0
    %v4304 = vadd.f32 0.0, %v4303
    %v4305 = vpop.f32.mrf.mxu0
    %4306 = vmatprep.mubr.bf16.mxu0 0
    %4307 = vmatmul.mubr.bf16.gmra.mxu0 %v4188
    %v4308 = vpop.f32.mrf.mxu0
    %v4309 = vadd.f32 0.0, %v4308
    %v4310 = vpop.f32.mrf.mxu0
    %v4311 = vpop.f32.mrf.mxu0
    %v4312 = vadd.f32 0.0, %v4311
    %v4313 = vpop.f32.mrf.mxu0
    %4314 = vmatprep.mubr.bf16.mxu0 0
    %4315 = vmatmul.mubr.bf16.gmra.mxu0 %v4189
    %v4316 = vpop.f32.mrf.mxu0
    %v4317 = vadd.f32 0.0, %v4316
    %v4318 = vpop.f32.mrf.mxu0
    %v4319 = vpop.f32.mrf.mxu0
    %v4320 = vadd.f32 0.0, %v4319
    %v4321 = vpop.f32.mrf.mxu0
    %4322 = vmatprep.mubr.bf16.mxu0 0
    %4323 = vmatmul.mubr.bf16.gmra.mxu0 %v4190
    %v4324 = vpop.f32.mrf.mxu0
    %v4325 = vadd.f32 0.0, %v4324
    %v4326 = vpop.f32.mrf.mxu0
    %v4327 = vpop.f32.mrf.mxu0
    %v4328 = vadd.f32 0.0, %v4327
    %v4329 = vpop.f32.mrf.mxu0
    %4330 = vmatprep.mubr.bf16.mxu0 0
    %4331 = vmatmul.mubr.bf16.gmra.mxu0 %v4191
    %v4332 = vpop.f32.mrf.mxu0
    %v4333 = vadd.f32 0.0, %v4332
    %v4334 = vpop.f32.mrf.mxu0
    %v4335 = vpop.f32.mrf.mxu0
    %v4336 = vadd.f32 0.0, %v4335
    %v4337 = vpop.f32.mrf.mxu0
    %4338 = vmatprep.mubr.bf16.mxu0 0
    %4339 = vmatmul.mubr.bf16.gmra.mxu0 %v4192
    %v4340 = vpop.f32.mrf.mxu0
    %v4341 = vadd.f32 0.0, %v4340
    %v4342 = vpop.f32.mrf.mxu0
    %v4343 = vpop.f32.mrf.mxu0
    %v4344 = vadd.f32 0.0, %v4343
    %v4345 = vpop.f32.mrf.mxu0
    %4346 = vmatprep.mubr.bf16.mxu0 0
    %4347 = vmatmul.mubr.bf16.gmra.mxu0 %v4193
    %v4348 = vpop.f32.mrf.mxu0
    %v4349 = vadd.f32 0.0, %v4348
    %v4350 = vpop.f32.mrf.mxu0
    %v4351 = vpop.f32.mrf.mxu0
    %v4352 = vadd.f32 0.0, %v4351
    %v4353 = vpop.f32.mrf.mxu0
    %4354 = vdwg.mxu0
    %v4355 = vadd.f32 %v4170, %v4293
    %v4356 = vadd.f32 %v4171, %v4296
    %v4357 = vadd.f32 %v4172, %v4301
    %v4358 = vadd.f32 %v4173, %v4304
    %v4359 = vadd.f32 %v4174, %v4309
    %v4360 = vadd.f32 %v4175, %v4312
    %v4361 = vadd.f32 %v4176, %v4317
    %v4362 = vadd.f32 %v4177, %v4320
    %v4363 = vadd.f32 %v4178, %v4325
    %v4364 = vadd.f32 %v4179, %v4328
    %v4365 = vadd.f32 %v4180, %v4333
    %v4366 = vadd.f32 %v4181, %v4336
    %v4367 = vadd.f32 %v4182, %v4341
    %v4368 = vadd.f32 %v4183, %v4344
    %v4369 = vadd.f32 %v4184, %v4349
    %v4370 = vadd.f32 %v4185, %v4352
    %v4371 = vmax.f32 %v4355, 0.0
    %v4372 = vmax.f32 %v4356, 0.0
    %v4373 = vmax.f32 %v4357, 0.0
    %v4374 = vmax.f32 %v4358, 0.0
    %v4375 = vmax.f32 %v4359, 0.0
    %v4376 = vmax.f32 %v4360, 0.0
    %v4377 = vmax.f32 %v4361, 0.0
    %v4378 = vmax.f32 %v4362, 0.0
    %v4379 = vmax.f32 %v4363, 0.0
    %v4380 = vmax.f32 %v4364, 0.0
    %v4381 = vmax.f32 %v4365, 0.0
    %v4382 = vmax.f32 %v4366, 0.0
    %v4383 = vmax.f32 %v4367, 0.0
    %v4384 = vmax.f32 %v4368, 0.0
    %v4385 = vmax.f32 %v4369, 0.0
    %v4386 = vmax.f32 %v4370, 0.0
    %vm4403 = vcmask 1040384
    %v4404 = vrot.slane %v4371, 7
    %v4405 = vrot.slane %v4372, 7
    %v4406 = vsel %vm4403, %v4404, %v4405
    %v4407 = vrot.slane %v4373, 7
    %v4408 = vsel %vm4403, %v4405, %v4407
    %v4409 = vrot.slane %v4374, 7
    %v4410 = vsel %vm4403, %v4407, %v4409
    %v4411 = vrot.slane %v4375, 7
    %v4412 = vsel %vm4403, %v4409, %v4411
    %v4413 = vrot.slane %v4376, 7
    %v4414 = vsel %vm4403, %v4411, %v4413
    %v4415 = vrot.slane %v4377, 7
    %v4416 = vsel %vm4403, %v4413, %v4415
    %v4417 = vrot.slane %v4378, 7
    %v4418 = vsel %vm4403, %v4415, %v4417
    %v4419 = vrot.slane %v4379, 7
    %v4420 = vsel %vm4403, %v4417, %v4419
    %v4421 = vrot.slane %v4380, 7
    %v4422 = vsel %vm4403, %v4419, %v4421
    %v4423 = vrot.slane %v4381, 7
    %v4424 = vsel %vm4403, %v4421, %v4423
    %v4425 = vrot.slane %v4382, 7
    %v4426 = vsel %vm4403, %v4423, %v4425
    %v4427 = vrot.slane %v4383, 7
    %v4428 = vsel %vm4403, %v4425, %v4427
    %v4429 = vrot.slane %v4384, 7
    %v4430 = vsel %vm4403, %v4427, %v4429
    %v4431 = vrot.slane %v4385, 7
    %v4432 = vsel %vm4403, %v4429, %v4431
    %v4433 = vrot.slane %v4386, 7
    %v4434 = vsel %vm4403, %v4431, %v4433
    %v4452 = vsel %vm4403, %v4433, %v4404
    %v4453 = vpack.c.bf16 %v4408, %v4406
    %v4454 = vpack.c.bf16 %v4412, %v4410
    %v4455 = vpack.c.bf16 %v4416, %v4414
    %v4456 = vpack.c.bf16 %v4420, %v4418
    %v4457 = vpack.c.bf16 %v4424, %v4422
    %v4458 = vpack.c.bf16 %v4428, %v4426
    %v4459 = vpack.c.bf16 %v4432, %v4430
    %v4460 = vpack.c.bf16 %v4452, %v4434
    %v4461 = vld [vmem:[#allocation2 + $0x640] sm:$0xf]
    %v4462 = vld [vmem:[#allocation2 + $0x644] sm:$0xf]
    %v4463 = vld [vmem:[#allocation2 + $0x648] sm:$0xf]
    %v4464 = vld [vmem:[#allocation2 + $0x64c] sm:$0xf]
    %v4465 = vld [vmem:[#allocation2 + $0x650] sm:$0xf]
    %v4466 = vld [vmem:[#allocation2 + $0x654] sm:$0xf]
    %v4467 = vld [vmem:[#allocation2 + $0x658] sm:$0xf]
    %v4468 = vld [vmem:[#allocation2 + $0x65c] sm:$0xf]
    %v4469 = vld [vmem:[#allocation2 + $0x660] sm:$0xf]
    %v4470 = vld [vmem:[#allocation2 + $0x664] sm:$0xf]
    %v4471 = vld [vmem:[#allocation2 + $0x668] sm:$0xf]
    %v4472 = vld [vmem:[#allocation2 + $0x66c] sm:$0xf]
    %v4473 = vld [vmem:[#allocation2 + $0x670] sm:$0xf]
    %v4474 = vld [vmem:[#allocation2 + $0x674] sm:$0xf]
    %v4475 = vld [vmem:[#allocation2 + $0x678] sm:$0xf]
    %v4476 = vld [vmem:[#allocation2 + $0x67c] sm:$0xf]
    %v4493 = vunpack.c.l.b16 %v4461
    %v4494 = vunpack.c.l.b16 %v4462
    %v4495 = vunpack.c.l.b16 %v4463
    %v4496 = vunpack.c.l.b16 %v4464
    %v4497 = vunpack.c.l.b16 %v4465
    %v4498 = vunpack.c.l.b16 %v4466
    %v4499 = vunpack.c.l.b16 %v4467
    %v4500 = vunpack.c.l.b16 %v4468
    %v4501 = vunpack.c.l.b16 %v4469
    %v4502 = vunpack.c.l.b16 %v4470
    %v4503 = vunpack.c.l.b16 %v4471
    %v4504 = vunpack.c.l.b16 %v4472
    %v4505 = vunpack.c.l.b16 %v4473
    %v4506 = vunpack.c.l.b16 %v4474
    %v4507 = vunpack.c.l.b16 %v4475
    %v4508 = vunpack.c.l.b16 %v4476
    %v4509 = vpack.c.b16 %v4494, %v4493
    %v4510 = vpack.c.b16 %v4496, %v4495
    %v4511 = vpack.c.b16 %v4498, %v4497
    %v4512 = vpack.c.b16 %v4500, %v4499
    %v4513 = vpack.c.b16 %v4502, %v4501
    %v4514 = vpack.c.b16 %v4504, %v4503
    %v4515 = vpack.c.b16 %v4506, %v4505
    %v4516 = vpack.c.b16 %v4508, %v4507
    %4525 = vmatprep.subr.bf16.mxu0 0
    %4526 = vmatpush1.bf16.msra.mxu0 %v4516
    %4527 = vmatprep.subr.bf16.mxu0 0
    %4528 = vmatpush1.bf16.msra.mxu0 %v4515
    %4529 = vmatprep.subr.bf16.mxu0 0
    %4530 = vmatpush1.bf16.msra.mxu0 %v4514
    %4531 = vmatprep.subr.bf16.mxu0 0
    %4532 = vmatpush1.bf16.msra.mxu0 %v4513
    %4533 = vmatprep.subr.bf16.mxu0 0
    %4534 = vmatpush1.bf16.msra.mxu0 %v4512
    %4535 = vmatprep.subr.bf16.mxu0 0
    %4536 = vmatpush1.bf16.msra.mxu0 %v4511
    %4537 = vmatprep.subr.bf16.mxu0 0
    %4538 = vmatpush1.bf16.msra.mxu0 %v4510
    %4539 = vmatprep.subr.bf16.mxu0 0
    %4540 = vmatpush1.bf16.msra.mxu0 %v4509
    %4541 = vmatprep.subr.bf16.mxu0 0
    %4542 = vmatpush2.bf16.msra.mxu0 0
    %4543 = vmatprep.subr.bf16.mxu0 0
    %4544 = vmatpush2.bf16.msra.mxu0 0
    %4545 = vmatprep.subr.bf16.mxu0 0
    %4546 = vmatpush2.bf16.msra.mxu0 0
    %4547 = vmatprep.subr.bf16.mxu0 0
    %4548 = vmatpush2.bf16.msra.mxu0 0
    %4549 = vmatprep.subr.bf16.mxu0 0
    %4550 = vmatpush2.bf16.msra.mxu0 0
    %4551 = vmatprep.subr.bf16.mxu0 0
    %4552 = vmatpush2.bf16.msra.mxu0 0
    %4553 = vmatprep.subr.bf16.mxu0 0
    %4554 = vmatpush2.bf16.msra.mxu0 0
    %4555 = vmatprep.subr.bf16.mxu0 0
    %4556 = vmatpush2.bf16.msra.mxu0 0
    %4557 = vmatprep.mubr.bf16.mxu0 0
    %4558 = vmatmul.mubr.bf16.gmra.mxu0 %v4453
    %v4559 = vpop.f32.mrf.mxu0
    %v4560 = vadd.f32 0.0, %v4559
    %v4561 = vpop.f32.mrf.mxu0
    %v4562 = vpop.f32.mrf.mxu0
    %v4563 = vadd.f32 0.0, %v4562
    %v4564 = vpop.f32.mrf.mxu0
    %4565 = vmatprep.mubr.bf16.mxu0 0
    %4566 = vmatmul.mubr.bf16.gmra.mxu0 %v4454
    %v4567 = vpop.f32.mrf.mxu0
    %v4568 = vadd.f32 0.0, %v4567
    %v4569 = vpop.f32.mrf.mxu0
    %v4570 = vpop.f32.mrf.mxu0
    %v4571 = vadd.f32 0.0, %v4570
    %v4572 = vpop.f32.mrf.mxu0
    %4573 = vmatprep.mubr.bf16.mxu0 0
    %4574 = vmatmul.mubr.bf16.gmra.mxu0 %v4455
    %v4575 = vpop.f32.mrf.mxu0
    %v4576 = vadd.f32 0.0, %v4575
    %v4577 = vpop.f32.mrf.mxu0
    %v4578 = vpop.f32.mrf.mxu0
    %v4579 = vadd.f32 0.0, %v4578
    %v4580 = vpop.f32.mrf.mxu0
    %4581 = vmatprep.mubr.bf16.mxu0 0
    %4582 = vmatmul.mubr.bf16.gmra.mxu0 %v4456
    %v4583 = vpop.f32.mrf.mxu0
    %v4584 = vadd.f32 0.0, %v4583
    %v4585 = vpop.f32.mrf.mxu0
    %v4586 = vpop.f32.mrf.mxu0
    %v4587 = vadd.f32 0.0, %v4586
    %v4588 = vpop.f32.mrf.mxu0
    %4589 = vmatprep.mubr.bf16.mxu0 0
    %4590 = vmatmul.mubr.bf16.gmra.mxu0 %v4457
    %v4591 = vpop.f32.mrf.mxu0
    %v4592 = vadd.f32 0.0, %v4591
    %v4593 = vpop.f32.mrf.mxu0
    %v4594 = vpop.f32.mrf.mxu0
    %v4595 = vadd.f32 0.0, %v4594
    %v4596 = vpop.f32.mrf.mxu0
    %4597 = vmatprep.mubr.bf16.mxu0 0
    %4598 = vmatmul.mubr.bf16.gmra.mxu0 %v4458
    %v4599 = vpop.f32.mrf.mxu0
    %v4600 = vadd.f32 0.0, %v4599
    %v4601 = vpop.f32.mrf.mxu0
    %v4602 = vpop.f32.mrf.mxu0
    %v4603 = vadd.f32 0.0, %v4602
    %v4604 = vpop.f32.mrf.mxu0
    %4605 = vmatprep.mubr.bf16.mxu0 0
    %4606 = vmatmul.mubr.bf16.gmra.mxu0 %v4459
    %v4607 = vpop.f32.mrf.mxu0
    %v4608 = vadd.f32 0.0, %v4607
    %v4609 = vpop.f32.mrf.mxu0
    %v4610 = vpop.f32.mrf.mxu0
    %v4611 = vadd.f32 0.0, %v4610
    %v4612 = vpop.f32.mrf.mxu0
    %4613 = vmatprep.mubr.bf16.mxu0 0
    %4614 = vmatmul.mubr.bf16.gmra.mxu0 %v4460
    %v4615 = vpop.f32.mrf.mxu0
    %v4616 = vadd.f32 0.0, %v4615
    %v4617 = vpop.f32.mrf.mxu0
    %v4618 = vpop.f32.mrf.mxu0
    %v4619 = vadd.f32 0.0, %v4618
    %v4620 = vpop.f32.mrf.mxu0
    %4621 = vdwg.mxu0
    %v4622 = vlaneseq
    %v4623 = vshrl.u32 %v4622, 7
    %v4624 = vsub.s32 4, %v4623
    %v4625 = vrot.slane %v61, %v4624
    %v4626 = vadd.f32 %v4625, %v4560
    %v4627 = vadd.f32 %v4625, %v4563
    %v4628 = vadd.f32 %v4625, %v4568
    %v4629 = vadd.f32 %v4625, %v4571
    %v4630 = vadd.f32 %v4625, %v4576
    %v4631 = vadd.f32 %v4625, %v4579
    %v4632 = vadd.f32 %v4625, %v4584
    %v4633 = vadd.f32 %v4625, %v4587
    %v4634 = vadd.f32 %v4625, %v4592
    %v4635 = vadd.f32 %v4625, %v4595
    %v4636 = vadd.f32 %v4625, %v4600
    %v4637 = vadd.f32 %v4625, %v4603
    %v4638 = vadd.f32 %v4625, %v4608
    %v4639 = vadd.f32 %v4625, %v4611
    %v4640 = vadd.f32 %v4625, %v4616
    %v4641 = vadd.f32 %v4625, %v4619
    %v4642 = vtanh.pop %v4626
    %v4643 = vtanh.pop %v4627
    %v4644 = vtanh.pop %v4628
    %v4645 = vtanh.pop %v4629
    %v4646 = vtanh.pop %v4630
    %v4647 = vtanh.pop %v4631
    %v4648 = vtanh.pop %v4632
    %v4649 = vtanh.pop %v4633
    %v4650 = vtanh.pop %v4634
    %v4651 = vtanh.pop %v4635
    %v4652 = vtanh.pop %v4636
    %v4653 = vtanh.pop %v4637
    %v4654 = vtanh.pop %v4638
    %v4655 = vtanh.pop %v4639
    %v4656 = vtanh.pop %v4640
    %v4657 = vtanh.pop %v4641
    %4658 = vst [vmem:[%s3] sm:$0xff] %v4642
    %4659 = vst [vmem:[%s3 + $0x8] sm:$0xff] %v4643
    %4660 = vst [vmem:[%s3 + $0x10] sm:$0xff] %v4644
    %4661 = vst [vmem:[%s3 + $0x18] sm:$0xff] %v4645
    %4662 = vst [vmem:[%s3 + $0x20] sm:$0xff] %v4646
    %4663 = vst [vmem:[%s3 + $0x28] sm:$0xff] %v4647
    %4664 = vst [vmem:[%s3 + $0x30] sm:$0xff] %v4648
    %4665 = vst [vmem:[%s3 + $0x38] sm:$0xff] %v4649
    %4666 = vst [vmem:[%s3 + $0x40] sm:$0xff] %v4650
    %4667 = vst [vmem:[%s3 + $0x48] sm:$0xff] %v4651
    %4668 = vst [vmem:[%s3 + $0x50] sm:$0xff] %v4652
    %4669 = vst [vmem:[%s3 + $0x58] sm:$0xff] %v4653
    %4670 = vst [vmem:[%s3 + $0x60] sm:$0xff] %v4654
    %4671 = vst [vmem:[%s3 + $0x68] sm:$0xff] %v4655
    %4672 = vst [vmem:[%s3 + $0x70] sm:$0xff] %v4656
    %4673 = vst [vmem:[%s3 + $0x78] sm:$0xff] %v4657
    // Predicated region
    $region18: #{forward.1} parent=1 // pred_check
      _
    $region19: #{forward.1} parent=1 // pred_check_branch
      %4675 = sbr.rel (0) target = $region21
    $region20: #{forward.1} parent=1 // pred_region
      _
    $region21: #{forward.1} parent=1 // pred_fallthru
      _
    // Predicated region
    $region22: #{forward.1} parent=1 // pred_check
      _
    $region23: #{forward.1} parent=1 // pred_check_branch
      %4677 = sbr.rel (0) target = $region25
    $region24: #{forward.1} parent=1 // pred_region
      _
    $region25: #{forward.1} parent=1 // pred_fallthru
      _
    %4678 = vsyncpa [#allocation3], 1

</llo_original>
